<compile_context>
chip_gen: v5e
topology: v5e:2x2
jax: 0.10.0
libtpu: 0.0.40
codegen_flags: <defaults>
</compile_context>

<pallas_src>
import jax
import jax.numpy as jnp
from jax.experimental import pallas as pl
from jax.experimental.pallas import tpu as pltpu

IN_DIM = 28 * 28           # 784
HID_DIM = 28 * 28 * 2      # 1568
OUT_DIM = 10
BN_EPS = 1e-5

IN_PAD = 896               # 7 * 128
HID_PAD = 1792             # 14 * 128
OUT_PAD = 128


def _num_hidden_chunks():
    # 2 hidden-dim chunks only on v7x (2 TensorCores/chip); the "parallel"
    # grid axis is a plain sequential loop on single-TC v5e/v6e, so NC=1 there.
    try:
        kind = jax.devices()[0].device_kind.lower()
    except Exception:
        return 1
    return 2 if "v7" in kind else 1


NC = _num_hidden_chunks()
HCHUNK = HID_PAD // NC


def _mlp_kernel(x_ref, w1_ref, g_ref, bt_ref, w2_ref, b2_ref, out_ref):
    # x: (B, IN_PAD) bf16, w1 chunk: (IN_PAD, HCHUNK) bf16
    x = x_ref[...]
    inv_b = 1.0 / x.shape[0]

    # ---- Linear1 (this HID chunk), bf16 MXU inputs, f32 accumulation.
    #      b1 omitted: it cancels exactly with the BN mean subtraction. ----
    h = jnp.dot(x, w1_ref[...], preferred_element_type=jnp.float32)  # (B, HCHUNK)

    # ---- BatchNorm1d, training mode, one-pass stats, fused scale/shift ----
    s = jnp.sum(h, axis=0, keepdims=True)                            # (1, HCHUNK)
    ss = jnp.sum(h * h, axis=0, keepdims=True)
    mean = s * inv_b
    var = jnp.maximum(ss * inv_b - mean * mean, 0.0)                 # biased var, clamped
    scale = g_ref[...] * jax.lax.rsqrt(var + BN_EPS)                 # (1, HCHUNK)
    shift = bt_ref[...] - mean * scale

    # ---- BN apply + ReLU ----
    h = jnp.maximum(h * scale + shift, 0.0)

    # ---- Linear2 partial for this chunk (b2 added once, on chunk 0) ----
    out = jnp.dot(h.astype(jnp.bfloat16), w2_ref[...],
                  preferred_element_type=jnp.float32)                # (B, OUT_PAD)

    @pl.when(pl.program_id(0) == 0)
    def _():
        out_ref[0] = out + b2_ref[...]

    @pl.when(pl.program_id(0) > 0)
    def _():
        out_ref[0] = out


def prepare_params(params):
    """One-time prep: pad feature dims to lane multiples, cast weights to bf16.

    Call once; do NOT put this in the per-forward path (weight DMA dominates)."""
    w1, b1, gamma, beta, w2, b2 = params
    del b1  # bias before training-mode BatchNorm cancels exactly
    dh = HID_PAD - HID_DIM
    w1_p = jnp.pad(w1, ((0, IN_PAD - IN_DIM), (0, dh))).astype(jnp.bfloat16)
    g_p = jnp.pad(gamma, ((0, 0), (0, dh)), constant_values=1.0)
    bt_p = jnp.pad(beta, ((0, 0), (0, dh)))
    w2_p = jnp.pad(w2, ((0, dh), (0, OUT_PAD - OUT_DIM))).astype(jnp.bfloat16)
    b2_p = jnp.pad(b2, ((0, 0), (0, OUT_PAD - OUT_DIM)))
    return (w1_p, g_p, bt_p, w2_p, b2_p)


@jax.jit
def mlp_forward(x_nchw, prepared):
    """x_nchw: (B, 1, 28, 28) float32. prepared = prepare_params(params).

    Returns (B, 10) float32."""
    w1_p, g_p, bt_p, w2_p, b2_p = prepared
    B = x_nchw.shape[0]
    x = x_nchw.reshape(B, -1)
    x_p = jnp.pad(x, ((0, 0), (0, IN_PAD - IN_DIM))).astype(jnp.bfloat16)

    partials = pl.pallas_call(
        _mlp_kernel,
        out_shape=jax.ShapeDtypeStruct((NC, B, OUT_PAD), jnp.float32),
        grid_spec=pltpu.PrefetchScalarGridSpec(
            num_scalar_prefetch=0,
            grid=(NC,),
            in_specs=[
                pl.BlockSpec((B, IN_PAD), lambda c: (0, 0)),        # x (bf16)
                pl.BlockSpec((IN_PAD, HCHUNK), lambda c: (0, c)),   # W1 chunk
                pl.BlockSpec((1, HCHUNK), lambda c: (0, c)),        # gamma
                pl.BlockSpec((1, HCHUNK), lambda c: (0, c)),        # beta
                pl.BlockSpec((HCHUNK, OUT_PAD), lambda c: (c, 0)),  # W2 chunk
                pl.BlockSpec((1, OUT_PAD), lambda c: (0, 0)),       # b2
            ],
            out_specs=pl.BlockSpec((1, B, OUT_PAD), lambda c: (c, 0, 0)),
        ),
        compiler_params=pltpu.CompilerParams(
            dimension_semantics=("parallel",),
            vmem_limit_bytes=16 << 20,
        ),
        cost_estimate=pl.CostEstimate(
            flops=2 * B * IN_PAD * HID_PAD + 2 * B * HID_PAD * OUT_PAD,
            transcendentals=HID_PAD,
            bytes_accessed=(NC * B * IN_PAD * 2 + IN_PAD * HID_PAD * 2
                            + HID_PAD * OUT_PAD * 2 + 2 * HID_PAD * 4
                            + OUT_PAD * 4 + NC * B * OUT_PAD * 4),
        ),
    )(x_p, w1_p, g_p, bt_p, w2_p, b2_p)

    out = partials[0] if NC == 1 else jnp.sum(partials, axis=0)     # (B, 128)
    return out[:, :OUT_DIM]
    # TODO(synk): for large B (>~3-4K on v7x), full-batch-in-VMEM BN exceeds
    # the scoped VMEM limit; a two-pass BN (stats pass + normalize pass) is
    # needed to make the batch a grid axis.


def make_params(key):
    """Deterministic synthetic parameters matching the nn.Module shapes."""
    k1, k2, k3, k4 = jax.random.split(key, 4)
    lim1 = 1.0 / jnp.sqrt(jnp.float32(IN_DIM))
    lim2 = 1.0 / jnp.sqrt(jnp.float32(HID_DIM))
    # Torch weight is (out, in); store (in, out) here for x @ W.
    w1 = jax.random.uniform(k1, (IN_DIM, HID_DIM), jnp.float32, -lim1, lim1)
    b1 = jax.random.uniform(k2, (1, HID_DIM), jnp.float32, -lim1, lim1)
    w2 = jax.random.uniform(k3, (HID_DIM, OUT_DIM), jnp.float32, -lim2, lim2)
    b2 = jax.random.uniform(k4, (1, OUT_DIM), jnp.float32, -lim2, lim2)
    gamma = jnp.ones((1, HID_DIM), jnp.float32)   # BatchNorm1d affine defaults
    beta = jnp.zeros((1, HID_DIM), jnp.float32)
    return (w1, b1, gamma, beta, w2, b2)


def reference_forward(x_nchw, params):
    """Pure-JAX f32 reference of the PyTorch forward (training-mode BN)."""
    w1, b1, gamma, beta, w2, b2 = params
    x = x_nchw.reshape(x_nchw.shape[0], -1).astype(jnp.float32)
    h = x @ w1 + b1
    mean = jnp.mean(h, axis=0, keepdims=True)
    var = jnp.mean((h - mean) ** 2, axis=0, keepdims=True)
    h = (h - mean) / jnp.sqrt(var + BN_EPS) * gamma + beta
    h = jnp.maximum(h, 0.0)
    return h @ w2 + b2


if __name__ == "__main__":
    key = jax.random.PRNGKey(0)
    kx, kp = jax.random.split(key)

    B = 8
    x = jax.random.normal(kx, (B, 1, 28, 28), jnp.float32)
    params = make_params(kp)

    prepared = prepare_params(params)           # one-time weight pad + bf16 cast
    prepared = jax.block_until_ready(prepared)

    out = mlp_forward(x, prepared)
    out = jax.block_until_ready(out)

    ref = reference_forward(x, params)
    assert out.shape == (B, OUT_DIM)
    # bf16 matmul inputs (f32 accumulation) -> bf16-level tolerance vs f32 ref.
    assert jnp.allclose(out, ref, atol=2e-2, rtol=2e-2), "mismatch vs reference"

    print("KERNEL_OK")
</pallas_src>

<mosaic_0001>
module attributes {stable_mosaic.version = 11 : i64} {
  func.func @_mlp_kernel(%arg0: i32, %arg1: memref<8x896xbf16, #tpu.memory_space<vmem>>, %arg2: memref<896x1792xbf16, #tpu.memory_space<vmem>>, %arg3: memref<1x1792xf32, #tpu.memory_space<vmem>>, %arg4: memref<1x1792xf32, #tpu.memory_space<vmem>>, %arg5: memref<1792x128xbf16, #tpu.memory_space<vmem>>, %arg6: memref<1x128xf32, #tpu.memory_space<vmem>>, %arg7: memref<1x8x128xf32, #tpu.memory_space<vmem>>) attributes {dimension_semantics = [#tpu.dimension_semantics<parallel>], iteration_bounds = array<i64: 1>, scalar_prefetch = 0 : i64, scratch_operands = 0 : i64, tpu.core_type = #tpu.core_type<tc>, window_params = [{pipeline_mode = #tpu.pipeline_mode<synchronous>, transform_indices = @transform_0, window_bounds = array<i64: 8, 896>}, {transform_indices = @transform_1, window_bounds = array<i64: 896, 1792>}, {transform_indices = @transform_2, window_bounds = array<i64: 1, 1792>}, {transform_indices = @transform_3, window_bounds = array<i64: 1, 1792>}, {transform_indices = @transform_4, window_bounds = array<i64: 1792, 128>}, {pipeline_mode = #tpu.pipeline_mode<synchronous>, transform_indices = @transform_5, window_bounds = array<i64: 1, 128>}, {transform_indices = @transform_6, window_bounds = array<i64: 1, 8, 128>}]} {
    %c0 = arith.constant 0 : index
    %c0_0 = arith.constant 0 : index
    %0 = vector.load %arg1[%c0, %c0_0] : memref<8x896xbf16, #tpu.memory_space<vmem>>, vector<8x896xbf16>
    %c0_1 = arith.constant 0 : index
    %c0_2 = arith.constant 0 : index
    %1 = vector.load %arg2[%c0_1, %c0_2] : memref<896x1792xbf16, #tpu.memory_space<vmem>>, vector<896x1792xbf16>
    %cst = arith.constant dense<0.000000e+00> : vector<8x1792xf32>
    %2 = tpu.matmul %0, %1, %cst {dimension_numbers = #tpu.dot_dimension_numbers<[1], [0], [0], [1], [0, 0, 1, 1], [], []>} : vector<8x896xbf16>, vector<896x1792xbf16>, vector<8x1792xf32> -> vector<8x1792xf32>
    %cst_3 = arith.constant dense<0.000000e+00> : vector<1792xf32>
    %3 = vector.multi_reduction <add>, %2, %cst_3 [0] : vector<8x1792xf32> to vector<1792xf32>
    %4 = vector.shape_cast %3 : vector<1792xf32> to vector<1x1792xf32>
    %5 = arith.mulf %2, %2 : vector<8x1792xf32>
    %cst_4 = arith.constant dense<0.000000e+00> : vector<1792xf32>
    %6 = vector.multi_reduction <add>, %5, %cst_4 [0] : vector<8x1792xf32> to vector<1792xf32>
    %7 = vector.shape_cast %6 : vector<1792xf32> to vector<1x1792xf32>
    %cst_5 = arith.constant 1.250000e-01 : f32
    %8 = vector.broadcast %cst_5 : f32 to vector<1x1792xf32>
    %9 = arith.mulf %4, %8 : vector<1x1792xf32>
    %cst_6 = arith.constant 1.250000e-01 : f32
    %10 = vector.broadcast %cst_6 : f32 to vector<1x1792xf32>
    %11 = arith.mulf %7, %10 : vector<1x1792xf32>
    %12 = arith.mulf %9, %9 : vector<1x1792xf32>
    %13 = arith.subf %11, %12 : vector<1x1792xf32>
    %cst_7 = arith.constant 0.000000e+00 : f32
    %14 = vector.broadcast %cst_7 : f32 to vector<1x1792xf32>
    %15 = arith.maximumf %13, %14 : vector<1x1792xf32>
    %c0_8 = arith.constant 0 : index
    %c0_9 = arith.constant 0 : index
    %16 = vector.load %arg3[%c0_8, %c0_9] : memref<1x1792xf32, #tpu.memory_space<vmem>>, vector<1x1792xf32>
    %cst_10 = arith.constant 9.99999974E-6 : f32
    %17 = vector.broadcast %cst_10 : f32 to vector<1x1792xf32>
    %18 = arith.addf %15, %17 : vector<1x1792xf32>
    %19 = math.rsqrt %18 : vector<1x1792xf32>
    %20 = arith.mulf %16, %19 : vector<1x1792xf32>
    %c0_11 = arith.constant 0 : index
    %c0_12 = arith.constant 0 : index
    %21 = vector.load %arg4[%c0_11, %c0_12] : memref<1x1792xf32, #tpu.memory_space<vmem>>, vector<1x1792xf32>
    %22 = arith.mulf %9, %20 : vector<1x1792xf32>
    %23 = arith.subf %21, %22 : vector<1x1792xf32>
    %24 = vector.broadcast %20 : vector<1x1792xf32> to vector<8x1792xf32>
    %25 = arith.mulf %2, %24 : vector<8x1792xf32>
    %26 = vector.broadcast %23 : vector<1x1792xf32> to vector<8x1792xf32>
    %27 = arith.addf %25, %26 : vector<8x1792xf32>
    %cst_13 = arith.constant 0.000000e+00 : f32
    %28 = vector.broadcast %cst_13 : f32 to vector<8x1792xf32>
    %29 = arith.maximumf %27, %28 : vector<8x1792xf32>
    %30 = arith.truncf %29 : vector<8x1792xf32> to vector<8x1792xbf16>
    %c0_14 = arith.constant 0 : index
    %c0_15 = arith.constant 0 : index
    %31 = vector.load %arg5[%c0_14, %c0_15] : memref<1792x128xbf16, #tpu.memory_space<vmem>>, vector<1792x128xbf16>
    %cst_16 = arith.constant dense<0.000000e+00> : vector<8x128xf32>
    %32 = tpu.matmul %30, %31, %cst_16 {dimension_numbers = #tpu.dot_dimension_numbers<[1], [0], [0], [1], [0, 0, 1, 1], [], []>} : vector<8x1792xbf16>, vector<1792x128xbf16>, vector<8x128xf32> -> vector<8x128xf32>
    %c0_i32 = arith.constant 0 : i32
    %33 = arith.cmpi eq, %arg0, %c0_i32 : i32
    %34 = arith.extui %33 : i1 to i32
    %c0_i32_17 = arith.constant 0 : i32
    %35 = arith.cmpi ne, %34, %c0_i32_17 : i32
    scf.if %35 {
      %c0_20 = arith.constant 0 : index
      %c0_21 = arith.constant 0 : index
      %39 = vector.load %arg6[%c0_20, %c0_21] : memref<1x128xf32, #tpu.memory_space<vmem>>, vector<1x128xf32>
      %40 = vector.broadcast %39 : vector<1x128xf32> to vector<8x128xf32>
      %41 = arith.addf %32, %40 : vector<8x128xf32>
      %c0_22 = arith.constant 0 : index
      %c0_23 = arith.constant 0 : index
      %c0_24 = arith.constant 0 : index
      %42 = vector.load %arg7[%c0_22, %c0_23, %c0_24] : memref<1x8x128xf32, #tpu.memory_space<vmem>>, vector<1x8x128xf32>
      %43 = vector.shape_cast %42 : vector<1x8x128xf32> to vector<8x128xf32>
      %44 = vector.shape_cast %41 : vector<8x128xf32> to vector<1x8x128xf32>
      tpu.vector_store %arg7[%c0_22, %c0_23, %c0_24], %44 {strides = array<i32>} : memref<1x8x128xf32, #tpu.memory_space<vmem>>, vector<1x8x128xf32>,
    } else {
    }
    %c0_i32_18 = arith.constant 0 : i32
    %36 = arith.cmpi sgt, %arg0, %c0_i32_18 : i32
    %37 = arith.extui %36 : i1 to i32
    %c0_i32_19 = arith.constant 0 : i32
    %38 = arith.cmpi ne, %37, %c0_i32_19 : i32
    scf.if %38 {
      %c0_20 = arith.constant 0 : index
      %c0_21 = arith.constant 0 : index
      %c0_22 = arith.constant 0 : index
      %39 = vector.load %arg7[%c0_20, %c0_21, %c0_22] : memref<1x8x128xf32, #tpu.memory_space<vmem>>, vector<1x8x128xf32>
      %40 = vector.shape_cast %39 : vector<1x8x128xf32> to vector<8x128xf32>
      %41 = vector.shape_cast %32 : vector<8x128xf32> to vector<1x8x128xf32>
      tpu.vector_store %arg7[%c0_20, %c0_21, %c0_22], %41 {strides = array<i32>} : memref<1x8x128xf32, #tpu.memory_space<vmem>>, vector<1x8x128xf32>,
    } else {
    }
    return
  }
  func.func @transform_0(%arg0: i32) -> (i32, i32) {
    %c0_i32 = arith.constant 0 : i32
    %c0_i32_0 = arith.constant 0 : i32
    %c0_i32_1 = arith.constant 0 : i32
    return %c0_i32, %c0_i32_0 : i32, i32
  }
  func.func @transform_1(%arg0: i32) -> (i32, i32) {
    %c0_i32 = arith.constant 0 : i32
    %c0_i32_0 = arith.constant 0 : i32
    return %c0_i32, %arg0 : i32, i32
  }
  func.func @transform_2(%arg0: i32) -> (i32, i32) {
    %c0_i32 = arith.constant 0 : i32
    %c0_i32_0 = arith.constant 0 : i32
    return %c0_i32, %arg0 : i32, i32
  }
  func.func @transform_3(%arg0: i32) -> (i32, i32) {
    %c0_i32 = arith.constant 0 : i32
    %c0_i32_0 = arith.constant 0 : i32
    return %c0_i32, %arg0 : i32, i32
  }
  func.func @transform_4(%arg0: i32) -> (i32, i32) {
    %c0_i32 = arith.constant 0 : i32
    %c0_i32_0 = arith.constant 0 : i32
    return %arg0, %c0_i32 : i32, i32
  }
  func.func @transform_5(%arg0: i32) -> (i32, i32) {
    %c0_i32 = arith.constant 0 : i32
    %c0_i32_0 = arith.constant 0 : i32
    %c0_i32_1 = arith.constant 0 : i32
    return %c0_i32, %c0_i32_0 : i32, i32
  }
  func.func @transform_6(%arg0: i32) -> (i32, i32, i32) {
    %c0_i32 = arith.constant 0 : i32
    %c0_i32_0 = arith.constant 0 : i32
    %c0_i32_1 = arith.constant 0 : i32
    return %arg0, %c0_i32, %c0_i32_0 : i32, i32, i32
  }
}

</mosaic_0001>

<llo_original>
// kernel: mlp_forward.1
$region0: #{mlp_forward.1}
  #allocation0 [shape = 'u32[]', space=smem, size = 0x4, offset = 0x4, fixed_abs, tag = 'smem constant byte address 0x4 - core index']
  #allocation1 [shape = 'u32[72,128]{1,0:T(1,128)}', space=vmem, size = 0x9000, scoped, tag = 'internal scratch']
  %s0 = inlined_call_operand.vmem [shape: bf16[8,896], index: 0, kind: input, shape index: {}]
  %s1 = inlined_call_operand.hbm [shape: bf16[896,1792], index: 1, kind: input, shape index: {}]
  %s2 = inlined_call_operand.hbm [shape: f32[1,1792], index: 2, kind: input, shape index: {}]
  %s3 = inlined_call_operand.hbm [shape: f32[1,1792], index: 3, kind: input, shape index: {}]
  %s4 = inlined_call_operand.hbm [shape: bf16[1792,128], index: 4, kind: input, shape index: {}]
  %s5 = inlined_call_operand.hbm [shape: f32[1,128], index: 5, kind: input, shape index: {}]
  %s6 = inlined_call_operand.hbm [shape: f32[1,8,128], index: 6, kind: output, shape index: {}]
  %s7 = sld [smem:[#allocation0]]
  $region62: #{mlp_forward.1} parent=0
    _
  %s9 = ssub.s32 1, %s7
  %s10 = scalar_select 0, %s9, %s7
  $region1: #{mlp_forward.1} parent=0
    #allocation2 [shape = 'u8[3211264]{0}', space=vmem, size = 0x310000, scoped, tag = 'input window, operand 1, single buffered']
    #allocation3 [shape = 's32[1]{0}', space=sflag, size = 0x4, scoped, tag = 'scoped memory for mlp_forward.1']
    #allocation4 [shape = 's32[1]{0}', space=sflag, size = 0x4, scoped, tag = 'scoped memory for mlp_forward.1']
    #allocation5 [shape = 'u8[7168]{0}', space=vmem, size = 0x1c00, scoped, tag = 'input window, operand 2, single buffered']
    #allocation6 [shape = 's32[1]{0}', space=sflag, size = 0x4, scoped, tag = 'scoped memory for mlp_forward.1']
    #allocation7 [shape = 'u8[7168]{0}', space=vmem, size = 0x1c00, scoped, tag = 'input window, operand 3, single buffered']
    #allocation8 [shape = 'u8[458752]{0}', space=vmem, size = 0x70000, scoped, tag = 'input window, operand 4, single buffered']
    #allocation9 [shape = 's32[1]{0}', space=sflag, size = 0x4, scoped, tag = 'scoped memory for mlp_forward.1']
    #allocation10 [shape = 'u8[512]{0}', space=vmem, size = 0x400, scoped, tag = 'input window, operand 5, single buffered']
    #allocation11 [shape = 'u8[4096]{0}', space=vmem, size = 0x1000, scoped, tag = 'output window, operand 0, single buffered']
    %11 = vsyncpa [#allocation3], 0
    %12 = vsyncpa [#allocation6], 0
    %13 = vsyncpa [#allocation9], 0
    %14 = vsyncpa [#allocation4], 0
    // Predicated region
    $region2: #{mlp_forward.1} parent=1 // pred_check
      _
    $region3: #{mlp_forward.1} parent=1 // pred_check_branch
      %16 = sbr.rel (0) target = $region5
    $region4: #{mlp_forward.1} parent=1 // pred_region
      _
    $region5: #{mlp_forward.1} parent=1 // pred_fallthru
      _
    // Predicated region
    $region6: #{mlp_forward.1} parent=1 // pred_check
      _
    $region7: #{mlp_forward.1} parent=1 // pred_check_branch
      %18 = sbr.rel (0) target = $region9
    $region8: #{mlp_forward.1} parent=1 // pred_region
      %20 = vsyncadd [#allocation3], 0
      %s21 = sshll.u32 %s1, 4
      %s22 = int_to_ptr.hbm [resolvable:$true] %s21
      %s23 = sshll.u32 [#allocation2], 4
      %s24 = int_to_ptr.vmem [resolvable:$true] %s23
      %29 = dma.hbm_to_vmem [thread:$0]  %s22, 100352, %s24, [#allocation3], 896, 896, 56
    $region9: #{mlp_forward.1} parent=1 // pred_fallthru
      _
    // Predicated region
    $region10: #{mlp_forward.1} parent=1 // pred_check
      _
    $region11: #{mlp_forward.1} parent=1 // pred_check_branch
      %31 = sbr.rel (0) target = $region13
    $region12: #{mlp_forward.1} parent=1 // pred_region
      %33 = vsyncadd [#allocation6], 0
      %s35 = sshll.u32 %s2, 4
      %s36 = int_to_ptr.hbm [resolvable:$true] %s35
      %s37 = sshll.u32 [#allocation5], 4
      %s38 = int_to_ptr.vmem [resolvable:$true] %s37
      %40 = dma.hbm_to_vmem [thread:$0]  %s36, 224, %s38, [#allocation6]
    $region13: #{mlp_forward.1} parent=1 // pred_fallthru
      _
    // Predicated region
    $region14: #{mlp_forward.1} parent=1 // pred_check
      _
    $region15: #{mlp_forward.1} parent=1 // pred_check_branch
      %42 = sbr.rel (0) target = $region17
    $region16: #{mlp_forward.1} parent=1 // pred_region
      %44 = vsyncadd [#allocation6], 0
      %s46 = sshll.u32 %s3, 4
      %s47 = int_to_ptr.hbm [resolvable:$true] %s46
      %s48 = sshll.u32 [#allocation7], 4
      %s49 = int_to_ptr.vmem [resolvable:$true] %s48
      %51 = dma.hbm_to_vmem [thread:$0]  %s47, 224, %s49, [#allocation6]
    $region17: #{mlp_forward.1} parent=1 // pred_fallthru
      _
    // Predicated region
    $region18: #{mlp_forward.1} parent=1 // pred_check
      _
    $region19: #{mlp_forward.1} parent=1 // pred_check_branch
      %53 = sbr.rel (0) target = $region21
    $region20: #{mlp_forward.1} parent=1 // pred_region
      %55 = vsyncadd [#allocation9], 0
      %s56 = sshll.u32 %s4, 4
      %s57 = int_to_ptr.hbm [resolvable:$true] %s56
      %s58 = sshll.u32 [#allocation8], 4
      %s59 = int_to_ptr.vmem [resolvable:$true] %s58
      %64 = dma.hbm_to_vmem [thread:$0]  %s57, 14336, %s59, [#allocation9], 64, 64, 4
    $region21: #{mlp_forward.1} parent=1 // pred_fallthru
      _
    // Predicated region
    $region22: #{mlp_forward.1} parent=1 // pred_check
      _
    $region23: #{mlp_forward.1} parent=1 // pred_check_branch
      %66 = sbr.rel (0) target = $region25
    $region24: #{mlp_forward.1} parent=1 // pred_region
      %68 = vsyncadd [#allocation9], 0
      %s70 = sshll.u32 %s5, 4
      %s71 = int_to_ptr.hbm [resolvable:$true] %s70
      %s72 = sshll.u32 [#allocation10], 4
      %s73 = int_to_ptr.vmem [resolvable:$true] %s72
      %75 = dma.hbm_to_vmem [thread:$0]  %s71, 16, %s73, [#allocation9]
    $region25: #{mlp_forward.1} parent=1 // pred_fallthru
      _
    // Predicated region
    $region26: #{mlp_forward.1} parent=1 // pred_check
      _
    $region27: #{mlp_forward.1} parent=1 // pred_check_branch
      %77 = sbr.rel (0) target = $region29
    $region28: #{mlp_forward.1} parent=1 // pred_region
      %79 = dma.done [#allocation3], 100352
    $region29: #{mlp_forward.1} parent=1 // pred_fallthru
      _
    // Predicated region
    $region30: #{mlp_forward.1} parent=1 // pred_check
      _
    $region31: #{mlp_forward.1} parent=1 // pred_check_branch
      %81 = sbr.rel (0) target = $region33
    $region32: #{mlp_forward.1} parent=1 // pred_region
      %83 = dma.done [#allocation6], 224
    $region33: #{mlp_forward.1} parent=1 // pred_fallthru
      _
    // Predicated region
    $region34: #{mlp_forward.1} parent=1 // pred_check
      _
    $region35: #{mlp_forward.1} parent=1 // pred_check_branch
      %85 = sbr.rel (0) target = $region37
    $region36: #{mlp_forward.1} parent=1 // pred_region
      %87 = dma.done [#allocation6], 224
    $region37: #{mlp_forward.1} parent=1 // pred_fallthru
      _
    // Predicated region
    $region38: #{mlp_forward.1} parent=1 // pred_check
      _
    $region39: #{mlp_forward.1} parent=1 // pred_check_branch
      %89 = sbr.rel (0) target = $region41
    $region40: #{mlp_forward.1} parent=1 // pred_region
      %91 = dma.done [#allocation9], 14336
    $region41: #{mlp_forward.1} parent=1 // pred_fallthru
      _
    // Predicated region
    $region42: #{mlp_forward.1} parent=1 // pred_check
      _
    $region43: #{mlp_forward.1} parent=1 // pred_check_branch
      %93 = sbr.rel (0) target = $region45
    $region44: #{mlp_forward.1} parent=1 // pred_region
      %95 = dma.done [#allocation9], 16
    $region45: #{mlp_forward.1} parent=1 // pred_fallthru
      _
    %v96 = vld [vmem:[%s0] sm:$0xff]
    %v97 = vld [vmem:[%s0 + $0x8] sm:$0xff]
    %v98 = vld [vmem:[%s0 + $0x10] sm:$0xff]
    %v99 = vld [vmem:[%s0 + $0x18] sm:$0xf]
    %v100 = vld [vmem:[#allocation2] sm:$0xff]
    %v101 = vld [vmem:[#allocation2 + $0x8] sm:$0xff]
    %v102 = vld [vmem:[#allocation2 + $0x10] sm:$0xff]
    %v103 = vld [vmem:[#allocation2 + $0x18] sm:$0xff]
    %v104 = vld [vmem:[#allocation2 + $0x20] sm:$0xff]
    %v105 = vld [vmem:[#allocation2 + $0x28] sm:$0xff]
    %v106 = vld [vmem:[#allocation2 + $0x30] sm:$0xff]
    %v107 = vld [vmem:[#allocation2 + $0x38] sm:$0xff]
    %v108 = vld [vmem:[#allocation2 + $0x40] sm:$0xff]
    %v109 = vld [vmem:[#allocation2 + $0x48] sm:$0xff]
    %v110 = vld [vmem:[#allocation2 + $0x50] sm:$0xff]
    %v111 = vld [vmem:[#allocation2 + $0x58] sm:$0xff]
    %v112 = vld [vmem:[#allocation2 + $0x60] sm:$0xff]
    %v113 = vld [vmem:[#allocation2 + $0x68] sm:$0xff]
    %v114 = vld [vmem:[#allocation2 + $0x70] sm:$0xff]
    %v115 = vld [vmem:[#allocation2 + $0x78] sm:$0xff]
    %v116 = vld [vmem:[#allocation2 + $0x80] sm:$0xff]
    %v117 = vld [vmem:[#allocation2 + $0x88] sm:$0xff]
    %v118 = vld [vmem:[#allocation2 + $0x90] sm:$0xff]
    %v119 = vld [vmem:[#allocation2 + $0x98] sm:$0xff]
    %v120 = vld [vmem:[#allocation2 + $0xa0] sm:$0xff]
    %v121 = vld [vmem:[#allocation2 + $0xa8] sm:$0xff]
    %v122 = vld [vmem:[#allocation2 + $0xb0] sm:$0xff]
    %v123 = vld [vmem:[#allocation2 + $0xb8] sm:$0xff]
    %v124 = vld [vmem:[#allocation2 + $0xc0] sm:$0xff]
    %v125 = vld [vmem:[#allocation2 + $0xc8] sm:$0xff]
    %v126 = vld [vmem:[#allocation2 + $0xd0] sm:$0xff]
    %v127 = vld [vmem:[#allocation2 + $0xd8] sm:$0xff]
    %v128 = vld [vmem:[#allocation2 + $0xe0] sm:$0xff]
    %v129 = vld [vmem:[#allocation2 + $0xe8] sm:$0xff]
    %v130 = vld [vmem:[#allocation2 + $0xf0] sm:$0xff]
    %v131 = vld [vmem:[#allocation2 + $0xf8] sm:$0xff]
    %v132 = vld [vmem:[#allocation2 + $0x100] sm:$0xff]
    %v133 = vld [vmem:[#allocation2 + $0x108] sm:$0xff]
    %v134 = vld [vmem:[#allocation2 + $0x110] sm:$0xff]
    %v135 = vld [vmem:[#allocation2 + $0x118] sm:$0xff]
    %v136 = vld [vmem:[#allocation2 + $0x120] sm:$0xff]
    %v137 = vld [vmem:[#allocation2 + $0x128] sm:$0xff]
    %v138 = vld [vmem:[#allocation2 + $0x130] sm:$0xff]
    %v139 = vld [vmem:[#allocation2 + $0x138] sm:$0xff]
    %v140 = vld [vmem:[#allocation2 + $0x140] sm:$0xff]
    %v141 = vld [vmem:[#allocation2 + $0x148] sm:$0xff]
    %v142 = vld [vmem:[#allocation2 + $0x150] sm:$0xff]
    %v143 = vld [vmem:[#allocation2 + $0x158] sm:$0xff]
    %v144 = vld [vmem:[#allocation2 + $0x160] sm:$0xff]
    %v145 = vld [vmem:[#allocation2 + $0x168] sm:$0xff]
    %v146 = vld [vmem:[#allocation2 + $0x170] sm:$0xff]
    %v147 = vld [vmem:[#allocation2 + $0x178] sm:$0xff]
    %v148 = vld [vmem:[#allocation2 + $0x180] sm:$0xff]
    %v149 = vld [vmem:[#allocation2 + $0x188] sm:$0xff]
    %v150 = vld [vmem:[#allocation2 + $0x190] sm:$0xff]
    %v151 = vld [vmem:[#allocation2 + $0x198] sm:$0xff]
    %v152 = vld [vmem:[#allocation2 + $0x1a0] sm:$0xff]
    %v153 = vld [vmem:[#allocation2 + $0x1a8] sm:$0xff]
    %v154 = vld [vmem:[#allocation2 + $0x1b0] sm:$0xff]
    %v155 = vld [vmem:[#allocation2 + $0x1b8] sm:$0xff]
    %v156 = vld [vmem:[#allocation2 + $0x1c0] sm:$0xff]
    %v157 = vld [vmem:[#allocation2 + $0x1c8] sm:$0xff]
    %v158 = vld [vmem:[#allocation2 + $0x1d0] sm:$0xff]
    %v159 = vld [vmem:[#allocation2 + $0x1d8] sm:$0xff]
    %v160 = vld [vmem:[#allocation2 + $0x1e0] sm:$0xff]
    %v161 = vld [vmem:[#allocation2 + $0x1e8] sm:$0xff]
    %v162 = vld [vmem:[#allocation2 + $0x1f0] sm:$0xff]
    %v163 = vld [vmem:[#allocation2 + $0x1f8] sm:$0xff]
    %v164 = vld [vmem:[#allocation2 + $0x200] sm:$0xff]
    %v165 = vld [vmem:[#allocation2 + $0x208] sm:$0xff]
    %v166 = vld [vmem:[#allocation2 + $0x210] sm:$0xff]
    %v167 = vld [vmem:[#allocation2 + $0x218] sm:$0xff]
    %v168 = vld [vmem:[#allocation2 + $0x220] sm:$0xff]
    %v169 = vld [vmem:[#allocation2 + $0x228] sm:$0xff]
    %v170 = vld [vmem:[#allocation2 + $0x230] sm:$0xff]
    %v171 = vld [vmem:[#allocation2 + $0x238] sm:$0xff]
    %v172 = vld [vmem:[#allocation2 + $0x240] sm:$0xff]
    %v173 = vld [vmem:[#allocation2 + $0x248] sm:$0xff]
    %v174 = vld [vmem:[#allocation2 + $0x250] sm:$0xff]
    %v175 = vld [vmem:[#allocation2 + $0x258] sm:$0xff]
    %v176 = vld [vmem:[#allocation2 + $0x260] sm:$0xff]
    %v177 = vld [vmem:[#allocation2 + $0x268] sm:$0xff]
    %v178 = vld [vmem:[#allocation2 + $0x270] sm:$0xff]
    %v179 = vld [vmem:[#allocation2 + $0x278] sm:$0xff]
    %v180 = vld [vmem:[#allocation2 + $0x280] sm:$0xff]
    %v181 = vld [vmem:[#allocation2 + $0x288] sm:$0xff]
    %v182 = vld [vmem:[#allocation2 + $0x290] sm:$0xff]
    %v183 = vld [vmem:[#allocation2 + $0x298] sm:$0xff]
    %v184 = vld [vmem:[#allocation2 + $0x2a0] sm:$0xff]
    %v185 = vld [vmem:[#allocation2 + $0x2a8] sm:$0xff]
    %v186 = vld [vmem:[#allocation2 + $0x2b0] sm:$0xff]
    %v187 = vld [vmem:[#allocation2 + $0x2b8] sm:$0xff]
    %v188 = vld [vmem:[#allocation2 + $0x2c0] sm:$0xff]
    %v189 = vld [vmem:[#allocation2 + $0x2c8] sm:$0xff]
    %v190 = vld [vmem:[#allocation2 + $0x2d0] sm:$0xff]
    %v191 = vld [vmem:[#allocation2 + $0x2d8] sm:$0xff]
    %v192 = vld [vmem:[#allocation2 + $0x2e0] sm:$0xff]
    %v193 = vld [vmem:[#allocation2 + $0x2e8] sm:$0xff]
    %v194 = vld [vmem:[#allocation2 + $0x2f0] sm:$0xff]
    %v195 = vld [vmem:[#allocation2 + $0x2f8] sm:$0xff]
    %v196 = vld [vmem:[#allocation2 + $0x300] sm:$0xff]
    %v197 = vld [vmem:[#allocation2 + $0x308] sm:$0xff]
    %v198 = vld [vmem:[#allocation2 + $0x310] sm:$0xff]
    %v199 = vld [vmem:[#allocation2 + $0x318] sm:$0xff]
    %v200 = vld [vmem:[#allocation2 + $0x320] sm:$0xff]
    %v201 = vld [vmem:[#allocation2 + $0x328] sm:$0xff]
    %v202 = vld [vmem:[#allocation2 + $0x330] sm:$0xff]
    %v203 = vld [vmem:[#allocation2 + $0x338] sm:$0xff]
    %v204 = vld [vmem:[#allocation2 + $0x340] sm:$0xff]
    %v205 = vld [vmem:[#allocation2 + $0x348] sm:$0xff]
    %v206 = vld [vmem:[#allocation2 + $0x350] sm:$0xff]
    %v207 = vld [vmem:[#allocation2 + $0x358] sm:$0xff]
    %v208 = vld [vmem:[#allocation2 + $0x360] sm:$0xff]
    %v209 = vld [vmem:[#allocation2 + $0x368] sm:$0xff]
    %v210 = vld [vmem:[#allocation2 + $0x370] sm:$0xff]
    %v211 = vld [vmem:[#allocation2 + $0x378] sm:$0xff]
    %v212 = vld [vmem:[#allocation2 + $0x380] sm:$0xff]
    %v213 = vld [vmem:[#allocation2 + $0x388] sm:$0xff]
    %v214 = vld [vmem:[#allocation2 + $0x390] sm:$0xff]
    %v215 = vld [vmem:[#allocation2 + $0x398] sm:$0xff]
    %v216 = vld [vmem:[#allocation2 + $0x3a0] sm:$0xff]
    %v217 = vld [vmem:[#allocation2 + $0x3a8] sm:$0xff]
    %v218 = vld [vmem:[#allocation2 + $0x3b0] sm:$0xff]
    %v219 = vld [vmem:[#allocation2 + $0x3b8] sm:$0xff]
    %v220 = vld [vmem:[#allocation2 + $0x3c0] sm:$0xff]
    %v221 = vld [vmem:[#allocation2 + $0x3c8] sm:$0xff]
    %v222 = vld [vmem:[#allocation2 + $0x3d0] sm:$0xff]
    %v223 = vld [vmem:[#allocation2 + $0x3d8] sm:$0xff]
    %v224 = vld [vmem:[#allocation2 + $0x3e0] sm:$0xff]
    %v225 = vld [vmem:[#allocation2 + $0x3e8] sm:$0xff]
    %v226 = vld [vmem:[#allocation2 + $0x3f0] sm:$0xff]
    %v227 = vld [vmem:[#allocation2 + $0x3f8] sm:$0xff]
    %v228 = vld [vmem:[#allocation2 + $0x400] sm:$0xff]
    %v229 = vld [vmem:[#allocation2 + $0x408] sm:$0xff]
    %v230 = vld [vmem:[#allocation2 + $0x410] sm:$0xff]
    %v231 = vld [vmem:[#allocation2 + $0x418] sm:$0xff]
    %v232 = vld [vmem:[#allocation2 + $0x420] sm:$0xff]
    %v233 = vld [vmem:[#allocation2 + $0x428] sm:$0xff]
    %v234 = vld [vmem:[#allocation2 + $0x430] sm:$0xff]
    %v235 = vld [vmem:[#allocation2 + $0x438] sm:$0xff]
    %v236 = vld [vmem:[#allocation2 + $0x440] sm:$0xff]
    %v237 = vld [vmem:[#allocation2 + $0x448] sm:$0xff]
    %v238 = vld [vmem:[#allocation2 + $0x450] sm:$0xff]
    %v239 = vld [vmem:[#allocation2 + $0x458] sm:$0xff]
    %v240 = vld [vmem:[#allocation2 + $0x460] sm:$0xff]
    %v241 = vld [vmem:[#allocation2 + $0x468] sm:$0xff]
    %v242 = vld [vmem:[#allocation2 + $0x470] sm:$0xff]
    %v243 = vld [vmem:[#allocation2 + $0x478] sm:$0xff]
    %v244 = vld [vmem:[#allocation2 + $0x480] sm:$0xff]
    %v245 = vld [vmem:[#allocation2 + $0x488] sm:$0xff]
    %v246 = vld [vmem:[#allocation2 + $0x490] sm:$0xff]
    %v247 = vld [vmem:[#allocation2 + $0x498] sm:$0xff]
    %v248 = vld [vmem:[#allocation2 + $0x4a0] sm:$0xff]
    %v249 = vld [vmem:[#allocation2 + $0x4a8] sm:$0xff]
    %v250 = vld [vmem:[#allocation2 + $0x4b0] sm:$0xff]
    %v251 = vld [vmem:[#allocation2 + $0x4b8] sm:$0xff]
    %v252 = vld [vmem:[#allocation2 + $0x4c0] sm:$0xff]
    %v253 = vld [vmem:[#allocation2 + $0x4c8] sm:$0xff]
    %v254 = vld [vmem:[#allocation2 + $0x4d0] sm:$0xff]
    %v255 = vld [vmem:[#allocation2 + $0x4d8] sm:$0xff]
    %v256 = vld [vmem:[#allocation2 + $0x4e0] sm:$0xff]
    %v257 = vld [vmem:[#allocation2 + $0x4e8] sm:$0xff]
    %v258 = vld [vmem:[#allocation2 + $0x4f0] sm:$0xff]
    %v259 = vld [vmem:[#allocation2 + $0x4f8] sm:$0xff]
    %v260 = vld [vmem:[#allocation2 + $0x500] sm:$0xff]
    %v261 = vld [vmem:[#allocation2 + $0x508] sm:$0xff]
    %v262 = vld [vmem:[#allocation2 + $0x510] sm:$0xff]
    %v263 = vld [vmem:[#allocation2 + $0x518] sm:$0xff]
    %v264 = vld [vmem:[#allocation2 + $0x520] sm:$0xff]
    %v265 = vld [vmem:[#allocation2 + $0x528] sm:$0xff]
    %v266 = vld [vmem:[#allocation2 + $0x530] sm:$0xff]
    %v267 = vld [vmem:[#allocation2 + $0x538] sm:$0xff]
    %v268 = vld [vmem:[#allocation2 + $0x540] sm:$0xff]
    %v269 = vld [vmem:[#allocation2 + $0x548] sm:$0xff]
    %v270 = vld [vmem:[#allocation2 + $0x550] sm:$0xff]
    %v271 = vld [vmem:[#allocation2 + $0x558] sm:$0xff]
    %v272 = vld [vmem:[#allocation2 + $0x560] sm:$0xff]
    %v273 = vld [vmem:[#allocation2 + $0x568] sm:$0xff]
    %v274 = vld [vmem:[#allocation2 + $0x570] sm:$0xff]
    %v275 = vld [vmem:[#allocation2 + $0x578] sm:$0xff]
    %v276 = vld [vmem:[#allocation2 + $0x580] sm:$0xff]
    %v277 = vld [vmem:[#allocation2 + $0x588] sm:$0xff]
    %v278 = vld [vmem:[#allocation2 + $0x590] sm:$0xff]
    %v279 = vld [vmem:[#allocation2 + $0x598] sm:$0xff]
    %v280 = vld [vmem:[#allocation2 + $0x5a0] sm:$0xff]
    %v281 = vld [vmem:[#allocation2 + $0x5a8] sm:$0xff]
    %v282 = vld [vmem:[#allocation2 + $0x5b0] sm:$0xff]
    %v283 = vld [vmem:[#allocation2 + $0x5b8] sm:$0xff]
    %v284 = vld [vmem:[#allocation2 + $0x5c0] sm:$0xff]
    %v285 = vld [vmem:[#allocation2 + $0x5c8] sm:$0xff]
    %v286 = vld [vmem:[#allocation2 + $0x5d0] sm:$0xff]
    %v287 = vld [vmem:[#allocation2 + $0x5d8] sm:$0xff]
    %v288 = vld [vmem:[#allocation2 + $0x5e0] sm:$0xff]
    %v289 = vld [vmem:[#allocation2 + $0x5e8] sm:$0xff]
    %v290 = vld [vmem:[#allocation2 + $0x5f0] sm:$0xff]
    %v291 = vld [vmem:[#allocation2 + $0x5f8] sm:$0xff]
    %v292 = vld [vmem:[#allocation2 + $0x600] sm:$0xff]
    %v293 = vld [vmem:[#allocation2 + $0x608] sm:$0xff]
    %v294 = vld [vmem:[#allocation2 + $0x610] sm:$0xff]
    %v295 = vld [vmem:[#allocation2 + $0x618] sm:$0xff]
    %v296 = vld [vmem:[#allocation2 + $0x620] sm:$0xff]
    %v297 = vld [vmem:[#allocation2 + $0x628] sm:$0xff]
    %v298 = vld [vmem:[#allocation2 + $0x630] sm:$0xff]
    %v299 = vld [vmem:[#allocation2 + $0x638] sm:$0xff]
    %v300 = vld [vmem:[#allocation2 + $0x640] sm:$0xff]
    %v301 = vld [vmem:[#allocation2 + $0x648] sm:$0xff]
    %v302 = vld [vmem:[#allocation2 + $0x650] sm:$0xff]
    %v303 = vld [vmem:[#allocation2 + $0x658] sm:$0xff]
    %v304 = vld [vmem:[#allocation2 + $0x660] sm:$0xff]
    %v305 = vld [vmem:[#allocation2 + $0x668] sm:$0xff]
    %v306 = vld [vmem:[#allocation2 + $0x670] sm:$0xff]
    %v307 = vld [vmem:[#allocation2 + $0x678] sm:$0xff]
    %v308 = vld [vmem:[#allocation2 + $0x680] sm:$0xff]
    %v309 = vld [vmem:[#allocation2 + $0x688] sm:$0xff]
    %v310 = vld [vmem:[#allocation2 + $0x690] sm:$0xff]
    %v311 = vld [vmem:[#allocation2 + $0x698] sm:$0xff]
    %v312 = vld [vmem:[#allocation2 + $0x6a0] sm:$0xff]
    %v313 = vld [vmem:[#allocation2 + $0x6a8] sm:$0xff]
    %v314 = vld [vmem:[#allocation2 + $0x6b0] sm:$0xff]
    %v315 = vld [vmem:[#allocation2 + $0x6b8] sm:$0xff]
    %v316 = vld [vmem:[#allocation2 + $0x6c0] sm:$0xff]
    %v317 = vld [vmem:[#allocation2 + $0x6c8] sm:$0xff]
    %v318 = vld [vmem:[#allocation2 + $0x6d0] sm:$0xff]
    %v319 = vld [vmem:[#allocation2 + $0x6d8] sm:$0xff]
    %v320 = vld [vmem:[#allocation2 + $0x6e0] sm:$0xff]
    %v321 = vld [vmem:[#allocation2 + $0x6e8] sm:$0xff]
    %v322 = vld [vmem:[#allocation2 + $0x6f0] sm:$0xff]
    %v323 = vld [vmem:[#allocation2 + $0x6f8] sm:$0xff]
    %v324 = vld [vmem:[#allocation2 + $0x700] sm:$0xff]
    %v325 = vld [vmem:[#allocation2 + $0x708] sm:$0xff]
    %v326 = vld [vmem:[#allocation2 + $0x710] sm:$0xff]
    %v327 = vld [vmem:[#allocation2 + $0x718] sm:$0xff]
    %v328 = vld [vmem:[#allocation2 + $0x720] sm:$0xff]
    %v329 = vld [vmem:[#allocation2 + $0x728] sm:$0xff]
    %v330 = vld [vmem:[#allocation2 + $0x730] sm:$0xff]
    %v331 = vld [vmem:[#allocation2 + $0x738] sm:$0xff]
    %v332 = vld [vmem:[#allocation2 + $0x740] sm:$0xff]
    %v333 = vld [vmem:[#allocation2 + $0x748] sm:$0xff]
    %v334 = vld [vmem:[#allocation2 + $0x750] sm:$0xff]
    %v335 = vld [vmem:[#allocation2 + $0x758] sm:$0xff]
    %v336 = vld [vmem:[#allocation2 + $0x760] sm:$0xff]
    %v337 = vld [vmem:[#allocation2 + $0x768] sm:$0xff]
    %v338 = vld [vmem:[#allocation2 + $0x770] sm:$0xff]
    %v339 = vld [vmem:[#allocation2 + $0x778] sm:$0xff]
    %v340 = vld [vmem:[#allocation2 + $0x780] sm:$0xff]
    %v341 = vld [vmem:[#allocation2 + $0x788] sm:$0xff]
    %v342 = vld [vmem:[#allocation2 + $0x790] sm:$0xff]
    %v343 = vld [vmem:[#allocation2 + $0x798] sm:$0xff]
    %v344 = vld [vmem:[#allocation2 + $0x7a0] sm:$0xff]
    %v345 = vld [vmem:[#allocation2 + $0x7a8] sm:$0xff]
    %v346 = vld [vmem:[#allocation2 + $0x7b0] sm:$0xff]
    %v347 = vld [vmem:[#allocation2 + $0x7b8] sm:$0xff]
    %v348 = vld [vmem:[#allocation2 + $0x7c0] sm:$0xff]
    %v349 = vld [vmem:[#allocation2 + $0x7c8] sm:$0xff]
    %v350 = vld [vmem:[#allocation2 + $0x7d0] sm:$0xff]
    %v351 = vld [vmem:[#allocation2 + $0x7d8] sm:$0xff]
    %v352 = vld [vmem:[#allocation2 + $0x7e0] sm:$0xff]
    %v353 = vld [vmem:[#allocation2 + $0x7e8] sm:$0xff]
    %v354 = vld [vmem:[#allocation2 + $0x7f0] sm:$0xff]
    %v355 = vld [vmem:[#allocation2 + $0x7f8] sm:$0xff]
    %v356 = vld [vmem:[#allocation2 + $0x800] sm:$0xff]
    %v357 = vld [vmem:[#allocation2 + $0x808] sm:$0xff]
    %v358 = vld [vmem:[#allocation2 + $0x810] sm:$0xff]
    %v359 = vld [vmem:[#allocation2 + $0x818] sm:$0xff]
    %v360 = vld [vmem:[#allocation2 + $0x820] sm:$0xff]
    %v361 = vld [vmem:[#allocation2 + $0x828] sm:$0xff]
    %v362 = vld [vmem:[#allocation2 + $0x830] sm:$0xff]
    %v363 = vld [vmem:[#allocation2 + $0x838] sm:$0xff]
    %v364 = vld [vmem:[#allocation2 + $0x840] sm:$0xff]
    %v365 = vld [vmem:[#allocation2 + $0x848] sm:$0xff]
    %v366 = vld [vmem:[#allocation2 + $0x850] sm:$0xff]
    %v367 = vld [vmem:[#allocation2 + $0x858] sm:$0xff]
    %v368 = vld [vmem:[#allocation2 + $0x860] sm:$0xff]
    %v369 = vld [vmem:[#allocation2 + $0x868] sm:$0xff]
    %v370 = vld [vmem:[#allocation2 + $0x870] sm:$0xff]
    %v371 = vld [vmem:[#allocation2 + $0x878] sm:$0xff]
    %v372 = vld [vmem:[#allocation2 + $0x880] sm:$0xff]
    %v373 = vld [vmem:[#allocation2 + $0x888] sm:$0xff]
    %v374 = vld [vmem:[#allocation2 + $0x890] sm:$0xff]
    %v375 = vld [vmem:[#allocation2 + $0x898] sm:$0xff]
    %v376 = vld [vmem:[#allocation2 + $0x8a0] sm:$0xff]
    %v377 = vld [vmem:[#allocation2 + $0x8a8] sm:$0xff]
    %v378 = vld [vmem:[#allocation2 + $0x8b0] sm:$0xff]
    %v379 = vld [vmem:[#allocation2 + $0x8b8] sm:$0xff]
    %v380 = vld [vmem:[#allocation2 + $0x8c0] sm:$0xff]
    %v381 = vld [vmem:[#allocation2 + $0x8c8] sm:$0xff]
    %v382 = vld [vmem:[#allocation2 + $0x8d0] sm:$0xff]
    %v383 = vld [vmem:[#allocation2 + $0x8d8] sm:$0xff]
    %v384 = vld [vmem:[#allocation2 + $0x8e0] sm:$0xff]
    %v385 = vld [vmem:[#allocation2 + $0x8e8] sm:$0xff]
    %v386 = vld [vmem:[#allocation2 + $0x8f0] sm:$0xff]
    %v387 = vld [vmem:[#allocation2 + $0x8f8] sm:$0xff]
    %v388 = vld [vmem:[#allocation2 + $0x900] sm:$0xff]
    %v389 = vld [vmem:[#allocation2 + $0x908] sm:$0xff]
    %v390 = vld [vmem:[#allocation2 + $0x910] sm:$0xff]
    %v391 = vld [vmem:[#allocation2 + $0x918] sm:$0xff]
    %v392 = vld [vmem:[#allocation2 + $0x920] sm:$0xff]
    %v393 = vld [vmem:[#allocation2 + $0x928] sm:$0xff]
    %v394 = vld [vmem:[#allocation2 + $0x930] sm:$0xff]
    %v395 = vld [vmem:[#allocation2 + $0x938] sm:$0xff]
    %v396 = vld [vmem:[#allocation2 + $0x940] sm:$0xff]
    %v397 = vld [vmem:[#allocation2 + $0x948] sm:$0xff]
    %v398 = vld [vmem:[#allocation2 + $0x950] sm:$0xff]
    %v399 = vld [vmem:[#allocation2 + $0x958] sm:$0xff]
    %v400 = vld [vmem:[#allocation2 + $0x960] sm:$0xff]
    %v401 = vld [vmem:[#allocation2 + $0x968] sm:$0xff]
    %v402 = vld [vmem:[#allocation2 + $0x970] sm:$0xff]
    %v403 = vld [vmem:[#allocation2 + $0x978] sm:$0xff]
    %v404 = vld [vmem:[#allocation2 + $0x980] sm:$0xff]
    %v405 = vld [vmem:[#allocation2 + $0x988] sm:$0xff]
    %v406 = vld [vmem:[#allocation2 + $0x990] sm:$0xff]
    %v407 = vld [vmem:[#allocation2 + $0x998] sm:$0xff]
    %v408 = vld [vmem:[#allocation2 + $0x9a0] sm:$0xff]
    %v409 = vld [vmem:[#allocation2 + $0x9a8] sm:$0xff]
    %v410 = vld [vmem:[#allocation2 + $0x9b0] sm:$0xff]
    %v411 = vld [vmem:[#allocation2 + $0x9b8] sm:$0xff]
    %v412 = vld [vmem:[#allocation2 + $0x9c0] sm:$0xff]
    %v413 = vld [vmem:[#allocation2 + $0x9c8] sm:$0xff]
    %v414 = vld [vmem:[#allocation2 + $0x9d0] sm:$0xff]
    %v415 = vld [vmem:[#allocation2 + $0x9d8] sm:$0xff]
    %v416 = vld [vmem:[#allocation2 + $0x9e0] sm:$0xff]
    %v417 = vld [vmem:[#allocation2 + $0x9e8] sm:$0xff]
    %v418 = vld [vmem:[#allocation2 + $0x9f0] sm:$0xff]
    %v419 = vld [vmem:[#allocation2 + $0x9f8] sm:$0xff]
    %v420 = vld [vmem:[#allocation2 + $0xa00] sm:$0xff]
    %v421 = vld [vmem:[#allocation2 + $0xa08] sm:$0xff]
    %v422 = vld [vmem:[#allocation2 + $0xa10] sm:$0xff]
    %v423 = vld [vmem:[#allocation2 + $0xa18] sm:$0xff]
    %v424 = vld [vmem:[#allocation2 + $0xa20] sm:$0xff]
    %v425 = vld [vmem:[#allocation2 + $0xa28] sm:$0xff]
    %v426 = vld [vmem:[#allocation2 + $0xa30] sm:$0xff]
    %v427 = vld [vmem:[#allocation2 + $0xa38] sm:$0xff]
    %v428 = vld [vmem:[#allocation2 + $0xa40] sm:$0xff]
    %v429 = vld [vmem:[#allocation2 + $0xa48] sm:$0xff]
    %v430 = vld [vmem:[#allocation2 + $0xa50] sm:$0xff]
    %v431 = vld [vmem:[#allocation2 + $0xa58] sm:$0xff]
    %v432 = vld [vmem:[#allocation2 + $0xa60] sm:$0xff]
    %v433 = vld [vmem:[#allocation2 + $0xa68] sm:$0xff]
    %v434 = vld [vmem:[#allocation2 + $0xa70] sm:$0xff]
    %v435 = vld [vmem:[#allocation2 + $0xa78] sm:$0xff]
    %v436 = vld [vmem:[#allocation2 + $0xa80] sm:$0xff]
    %v437 = vld [vmem:[#allocation2 + $0xa88] sm:$0xff]
    %v438 = vld [vmem:[#allocation2 + $0xa90] sm:$0xff]
    %v439 = vld [vmem:[#allocation2 + $0xa98] sm:$0xff]
    %v440 = vld [vmem:[#allocation2 + $0xaa0] sm:$0xff]
    %v441 = vld [vmem:[#allocation2 + $0xaa8] sm:$0xff]
    %v442 = vld [vmem:[#allocation2 + $0xab0] sm:$0xff]
    %v443 = vld [vmem:[#allocation2 + $0xab8] sm:$0xff]
    %v444 = vld [vmem:[#allocation2 + $0xac0] sm:$0xff]
    %v445 = vld [vmem:[#allocation2 + $0xac8] sm:$0xff]
    %v446 = vld [vmem:[#allocation2 + $0xad0] sm:$0xff]
    %v447 = vld [vmem:[#allocation2 + $0xad8] sm:$0xff]
    %v448 = vld [vmem:[#allocation2 + $0xae0] sm:$0xff]
    %v449 = vld [vmem:[#allocation2 + $0xae8] sm:$0xff]
    %v450 = vld [vmem:[#allocation2 + $0xaf0] sm:$0xff]
    %v451 = vld [vmem:[#allocation2 + $0xaf8] sm:$0xff]
    %v452 = vld [vmem:[#allocation2 + $0xb00] sm:$0xff]
    %v453 = vld [vmem:[#allocation2 + $0xb08] sm:$0xff]
    %v454 = vld [vmem:[#allocation2 + $0xb10] sm:$0xff]
    %v455 = vld [vmem:[#allocation2 + $0xb18] sm:$0xff]
    %v456 = vld [vmem:[#allocation2 + $0xb20] sm:$0xff]
    %v457 = vld [vmem:[#allocation2 + $0xb28] sm:$0xff]
    %v458 = vld [vmem:[#allocation2 + $0xb30] sm:$0xff]
    %v459 = vld [vmem:[#allocation2 + $0xb38] sm:$0xff]
    %v460 = vld [vmem:[#allocation2 + $0xb40] sm:$0xff]
    %v461 = vld [vmem:[#allocation2 + $0xb48] sm:$0xff]
    %v462 = vld [vmem:[#allocation2 + $0xb50] sm:$0xff]
    %v463 = vld [vmem:[#allocation2 + $0xb58] sm:$0xff]
    %v464 = vld [vmem:[#allocation2 + $0xb60] sm:$0xff]
    %v465 = vld [vmem:[#allocation2 + $0xb68] sm:$0xff]
    %v466 = vld [vmem:[#allocation2 + $0xb70] sm:$0xff]
    %v467 = vld [vmem:[#allocation2 + $0xb78] sm:$0xff]
    %v468 = vld [vmem:[#allocation2 + $0xb80] sm:$0xff]
    %v469 = vld [vmem:[#allocation2 + $0xb88] sm:$0xff]
    %v470 = vld [vmem:[#allocation2 + $0xb90] sm:$0xff]
    %v471 = vld [vmem:[#allocation2 + $0xb98] sm:$0xff]
    %v472 = vld [vmem:[#allocation2 + $0xba0] sm:$0xff]
    %v473 = vld [vmem:[#allocation2 + $0xba8] sm:$0xff]
    %v474 = vld [vmem:[#allocation2 + $0xbb0] sm:$0xff]
    %v475 = vld [vmem:[#allocation2 + $0xbb8] sm:$0xff]
    %v476 = vld [vmem:[#allocation2 + $0xbc0] sm:$0xff]
    %v477 = vld [vmem:[#allocation2 + $0xbc8] sm:$0xff]
    %v478 = vld [vmem:[#allocation2 + $0xbd0] sm:$0xff]
    %v479 = vld [vmem:[#allocation2 + $0xbd8] sm:$0xff]
    %v480 = vld [vmem:[#allocation2 + $0xbe0] sm:$0xff]
    %v481 = vld [vmem:[#allocation2 + $0xbe8] sm:$0xff]
    %v482 = vld [vmem:[#allocation2 + $0xbf0] sm:$0xff]
    %v483 = vld [vmem:[#allocation2 + $0xbf8] sm:$0xff]
    %v484 = vld [vmem:[#allocation2 + $0xc00] sm:$0xff]
    %v485 = vld [vmem:[#allocation2 + $0xc08] sm:$0xff]
    %v486 = vld [vmem:[#allocation2 + $0xc10] sm:$0xff]
    %v487 = vld [vmem:[#allocation2 + $0xc18] sm:$0xff]
    %v488 = vld [vmem:[#allocation2 + $0xc20] sm:$0xff]
    %v489 = vld [vmem:[#allocation2 + $0xc28] sm:$0xff]
    %v490 = vld [vmem:[#allocation2 + $0xc30] sm:$0xff]
    %v491 = vld [vmem:[#allocation2 + $0xc38] sm:$0xff]
    %v492 = vld [vmem:[#allocation2 + $0xc40] sm:$0xff]
    %v493 = vld [vmem:[#allocation2 + $0xc48] sm:$0xff]
    %v494 = vld [vmem:[#allocation2 + $0xc50] sm:$0xff]
    %v495 = vld [vmem:[#allocation2 + $0xc58] sm:$0xff]
    %v496 = vld [vmem:[#allocation2 + $0xc60] sm:$0xff]
    %v497 = vld [vmem:[#allocation2 + $0xc68] sm:$0xff]
    %v498 = vld [vmem:[#allocation2 + $0xc70] sm:$0xff]
    %v499 = vld [vmem:[#allocation2 + $0xc78] sm:$0xff]
    %v500 = vld [vmem:[#allocation2 + $0xc80] sm:$0xff]
    %v501 = vld [vmem:[#allocation2 + $0xc88] sm:$0xff]
    %v502 = vld [vmem:[#allocation2 + $0xc90] sm:$0xff]
    %v503 = vld [vmem:[#allocation2 + $0xc98] sm:$0xff]
    %v504 = vld [vmem:[#allocation2 + $0xca0] sm:$0xff]
    %v505 = vld [vmem:[#allocation2 + $0xca8] sm:$0xff]
    %v506 = vld [vmem:[#allocation2 + $0xcb0] sm:$0xff]
    %v507 = vld [vmem:[#allocation2 + $0xcb8] sm:$0xff]
    %v508 = vld [vmem:[#allocation2 + $0xcc0] sm:$0xff]
    %v509 = vld [vmem:[#allocation2 + $0xcc8] sm:$0xff]
    %v510 = vld [vmem:[#allocation2 + $0xcd0] sm:$0xff]
    %v511 = vld [vmem:[#allocation2 + $0xcd8] sm:$0xff]
    %v512 = vld [vmem:[#allocation2 + $0xce0] sm:$0xff]
    %v513 = vld [vmem:[#allocation2 + $0xce8] sm:$0xff]
    %v514 = vld [vmem:[#allocation2 + $0xcf0] sm:$0xff]
    %v515 = vld [vmem:[#allocation2 + $0xcf8] sm:$0xff]
    %v516 = vld [vmem:[#allocation2 + $0xd00] sm:$0xff]
    %v517 = vld [vmem:[#allocation2 + $0xd08] sm:$0xff]
    %v518 = vld [vmem:[#allocation2 + $0xd10] sm:$0xff]
    %v519 = vld [vmem:[#allocation2 + $0xd18] sm:$0xff]
    %v520 = vld [vmem:[#allocation2 + $0xd20] sm:$0xff]
    %v521 = vld [vmem:[#allocation2 + $0xd28] sm:$0xff]
    %v522 = vld [vmem:[#allocation2 + $0xd30] sm:$0xff]
    %v523 = vld [vmem:[#allocation2 + $0xd38] sm:$0xff]
    %v524 = vld [vmem:[#allocation2 + $0xd40] sm:$0xff]
    %v525 = vld [vmem:[#allocation2 + $0xd48] sm:$0xff]
    %v526 = vld [vmem:[#allocation2 + $0xd50] sm:$0xff]
    %v527 = vld [vmem:[#allocation2 + $0xd58] sm:$0xff]
    %v528 = vld [vmem:[#allocation2 + $0xd60] sm:$0xff]
    %v529 = vld [vmem:[#allocation2 + $0xd68] sm:$0xff]
    %v530 = vld [vmem:[#allocation2 + $0xd70] sm:$0xff]
    %v531 = vld [vmem:[#allocation2 + $0xd78] sm:$0xff]
    %v532 = vld [vmem:[#allocation2 + $0xd80] sm:$0xff]
    %v533 = vld [vmem:[#allocation2 + $0xd88] sm:$0xff]
    %v534 = vld [vmem:[#allocation2 + $0xd90] sm:$0xff]
    %v535 = vld [vmem:[#allocation2 + $0xd98] sm:$0xff]
    %v536 = vld [vmem:[#allocation2 + $0xda0] sm:$0xff]
    %v537 = vld [vmem:[#allocation2 + $0xda8] sm:$0xff]
    %v538 = vld [vmem:[#allocation2 + $0xdb0] sm:$0xff]
    %v539 = vld [vmem:[#allocation2 + $0xdb8] sm:$0xff]
    %v540 = vld [vmem:[#allocation2 + $0xdc0] sm:$0xff]
    %v541 = vld [vmem:[#allocation2 + $0xdc8] sm:$0xff]
    %v542 = vld [vmem:[#allocation2 + $0xdd0] sm:$0xff]
    %v543 = vld [vmem:[#allocation2 + $0xdd8] sm:$0xff]
    %v544 = vld [vmem:[#allocation2 + $0xde0] sm:$0xff]
    %v545 = vld [vmem:[#allocation2 + $0xde8] sm:$0xff]
    %v546 = vld [vmem:[#allocation2 + $0xdf0] sm:$0xff]
    %v547 = vld [vmem:[#allocation2 + $0xdf8] sm:$0xff]
    %v548 = vld [vmem:[#allocation2 + $0xe00] sm:$0xff]
    %v549 = vld [vmem:[#allocation2 + $0xe08] sm:$0xff]
    %v550 = vld [vmem:[#allocation2 + $0xe10] sm:$0xff]
    %v551 = vld [vmem:[#allocation2 + $0xe18] sm:$0xff]
    %v552 = vld [vmem:[#allocation2 + $0xe20] sm:$0xff]
    %v553 = vld [vmem:[#allocation2 + $0xe28] sm:$0xff]
    %v554 = vld [vmem:[#allocation2 + $0xe30] sm:$0xff]
    %v555 = vld [vmem:[#allocation2 + $0xe38] sm:$0xff]
    %v556 = vld [vmem:[#allocation2 + $0xe40] sm:$0xff]
    %v557 = vld [vmem:[#allocation2 + $0xe48] sm:$0xff]
    %v558 = vld [vmem:[#allocation2 + $0xe50] sm:$0xff]
    %v559 = vld [vmem:[#allocation2 + $0xe58] sm:$0xff]
    %v560 = vld [vmem:[#allocation2 + $0xe60] sm:$0xff]
    %v561 = vld [vmem:[#allocation2 + $0xe68] sm:$0xff]
    %v562 = vld [vmem:[#allocation2 + $0xe70] sm:$0xff]
    %v563 = vld [vmem:[#allocation2 + $0xe78] sm:$0xff]
    %v564 = vld [vmem:[#allocation2 + $0xe80] sm:$0xff]
    %v565 = vld [vmem:[#allocation2 + $0xe88] sm:$0xff]
    %v566 = vld [vmem:[#allocation2 + $0xe90] sm:$0xff]
    %v567 = vld [vmem:[#allocation2 + $0xe98] sm:$0xff]
    %v568 = vld [vmem:[#allocation2 + $0xea0] sm:$0xff]
    %v569 = vld [vmem:[#allocation2 + $0xea8] sm:$0xff]
    %v570 = vld [vmem:[#allocation2 + $0xeb0] sm:$0xff]
    %v571 = vld [vmem:[#allocation2 + $0xeb8] sm:$0xff]
    %v572 = vld [vmem:[#allocation2 + $0xec0] sm:$0xff]
    %v573 = vld [vmem:[#allocation2 + $0xec8] sm:$0xff]
    %v574 = vld [vmem:[#allocation2 + $0xed0] sm:$0xff]
    %v575 = vld [vmem:[#allocation2 + $0xed8] sm:$0xff]
    %v576 = vld [vmem:[#allocation2 + $0xee0] sm:$0xff]
    %v577 = vld [vmem:[#allocation2 + $0xee8] sm:$0xff]
    %v578 = vld [vmem:[#allocation2 + $0xef0] sm:$0xff]
    %v579 = vld [vmem:[#allocation2 + $0xef8] sm:$0xff]
    %v580 = vld [vmem:[#allocation2 + $0xf00] sm:$0xff]
    %v581 = vld [vmem:[#allocation2 + $0xf08] sm:$0xff]
    %v582 = vld [vmem:[#allocation2 + $0xf10] sm:$0xff]
    %v583 = vld [vmem:[#allocation2 + $0xf18] sm:$0xff]
    %v584 = vld [vmem:[#allocation2 + $0xf20] sm:$0xff]
    %v585 = vld [vmem:[#allocation2 + $0xf28] sm:$0xff]
    %v586 = vld [vmem:[#allocation2 + $0xf30] sm:$0xff]
    %v587 = vld [vmem:[#allocation2 + $0xf38] sm:$0xff]
    %v588 = vld [vmem:[#allocation2 + $0xf40] sm:$0xff]
    %v589 = vld [vmem:[#allocation2 + $0xf48] sm:$0xff]
    %v590 = vld [vmem:[#allocation2 + $0xf50] sm:$0xff]
    %v591 = vld [vmem:[#allocation2 + $0xf58] sm:$0xff]
    %v592 = vld [vmem:[#allocation2 + $0xf60] sm:$0xff]
    %v593 = vld [vmem:[#allocation2 + $0xf68] sm:$0xff]
    %v594 = vld [vmem:[#allocation2 + $0xf70] sm:$0xff]
    %v595 = vld [vmem:[#allocation2 + $0xf78] sm:$0xff]
    %v596 = vld [vmem:[#allocation2 + $0xf80] sm:$0xff]
    %v597 = vld [vmem:[#allocation2 + $0xf88] sm:$0xff]
    %v598 = vld [vmem:[#allocation2 + $0xf90] sm:$0xff]
    %v599 = vld [vmem:[#allocation2 + $0xf98] sm:$0xff]
    %v600 = vld [vmem:[#allocation2 + $0xfa0] sm:$0xff]
    %v601 = vld [vmem:[#allocation2 + $0xfa8] sm:$0xff]
    %v602 = vld [vmem:[#allocation2 + $0xfb0] sm:$0xff]
    %v603 = vld [vmem:[#allocation2 + $0xfb8] sm:$0xff]
    %v604 = vld [vmem:[#allocation2 + $0xfc0] sm:$0xff]
    %v605 = vld [vmem:[#allocation2 + $0xfc8] sm:$0xff]
    %v606 = vld [vmem:[#allocation2 + $0xfd0] sm:$0xff]
    %v607 = vld [vmem:[#allocation2 + $0xfd8] sm:$0xff]
    %v608 = vld [vmem:[#allocation2 + $0xfe0] sm:$0xff]
    %v609 = vld [vmem:[#allocation2 + $0xfe8] sm:$0xff]
    %v610 = vld [vmem:[#allocation2 + $0xff0] sm:$0xff]
    %v611 = vld [vmem:[#allocation2 + $0xff8] sm:$0xff]
    %v612 = vld [vmem:[#allocation2 + $0x1000] sm:$0xff]
    %v613 = vld [vmem:[#allocation2 + $0x1008] sm:$0xff]
    %v614 = vld [vmem:[#allocation2 + $0x1010] sm:$0xff]
    %v615 = vld [vmem:[#allocation2 + $0x1018] sm:$0xff]
    %v616 = vld [vmem:[#allocation2 + $0x1020] sm:$0xff]
    %v617 = vld [vmem:[#allocation2 + $0x1028] sm:$0xff]
    %v618 = vld [vmem:[#allocation2 + $0x1030] sm:$0xff]
    %v619 = vld [vmem:[#allocation2 + $0x1038] sm:$0xff]
    %v620 = vld [vmem:[#allocation2 + $0x1040] sm:$0xff]
    %v621 = vld [vmem:[#allocation2 + $0x1048] sm:$0xff]
    %v622 = vld [vmem:[#allocation2 + $0x1050] sm:$0xff]
    %v623 = vld [vmem:[#allocation2 + $0x1058] sm:$0xff]
    %v624 = vld [vmem:[#allocation2 + $0x1060] sm:$0xff]
    %v625 = vld [vmem:[#allocation2 + $0x1068] sm:$0xff]
    %v626 = vld [vmem:[#allocation2 + $0x1070] sm:$0xff]
    %v627 = vld [vmem:[#allocation2 + $0x1078] sm:$0xff]
    %v628 = vld [vmem:[#allocation2 + $0x1080] sm:$0xff]
    %v629 = vld [vmem:[#allocation2 + $0x1088] sm:$0xff]
    %v630 = vld [vmem:[#allocation2 + $0x1090] sm:$0xff]
    %v631 = vld [vmem:[#allocation2 + $0x1098] sm:$0xff]
    %v632 = vld [vmem:[#allocation2 + $0x10a0] sm:$0xff]
    %v633 = vld [vmem:[#allocation2 + $0x10a8] sm:$0xff]
    %v634 = vld [vmem:[#allocation2 + $0x10b0] sm:$0xff]
    %v635 = vld [vmem:[#allocation2 + $0x10b8] sm:$0xff]
    %v636 = vld [vmem:[#allocation2 + $0x10c0] sm:$0xff]
    %v637 = vld [vmem:[#allocation2 + $0x10c8] sm:$0xff]
    %v638 = vld [vmem:[#allocation2 + $0x10d0] sm:$0xff]
    %v639 = vld [vmem:[#allocation2 + $0x10d8] sm:$0xff]
    %v640 = vld [vmem:[#allocation2 + $0x10e0] sm:$0xff]
    %v641 = vld [vmem:[#allocation2 + $0x10e8] sm:$0xff]
    %v642 = vld [vmem:[#allocation2 + $0x10f0] sm:$0xff]
    %v643 = vld [vmem:[#allocation2 + $0x10f8] sm:$0xff]
    %v644 = vld [vmem:[#allocation2 + $0x1100] sm:$0xff]
    %v645 = vld [vmem:[#allocation2 + $0x1108] sm:$0xff]
    %v646 = vld [vmem:[#allocation2 + $0x1110] sm:$0xff]
    %v647 = vld [vmem:[#allocation2 + $0x1118] sm:$0xff]
    %v648 = vld [vmem:[#allocation2 + $0x1120] sm:$0xff]
    %v649 = vld [vmem:[#allocation2 + $0x1128] sm:$0xff]
    %v650 = vld [vmem:[#allocation2 + $0x1130] sm:$0xff]
    %v651 = vld [vmem:[#allocation2 + $0x1138] sm:$0xff]
    %v652 = vld [vmem:[#allocation2 + $0x1140] sm:$0xff]
    %v653 = vld [vmem:[#allocation2 + $0x1148] sm:$0xff]
    %v654 = vld [vmem:[#allocation2 + $0x1150] sm:$0xff]
    %v655 = vld [vmem:[#allocation2 + $0x1158] sm:$0xff]
    %v656 = vld [vmem:[#allocation2 + $0x1160] sm:$0xff]
    %v657 = vld [vmem:[#allocation2 + $0x1168] sm:$0xff]
    %v658 = vld [vmem:[#allocation2 + $0x1170] sm:$0xff]
    %v659 = vld [vmem:[#allocation2 + $0x1178] sm:$0xff]
    %v660 = vld [vmem:[#allocation2 + $0x1180] sm:$0xff]
    %v661 = vld [vmem:[#allocation2 + $0x1188] sm:$0xff]
    %v662 = vld [vmem:[#allocation2 + $0x1190] sm:$0xff]
    %v663 = vld [vmem:[#allocation2 + $0x1198] sm:$0xff]
    %v664 = vld [vmem:[#allocation2 + $0x11a0] sm:$0xff]
    %v665 = vld [vmem:[#allocation2 + $0x11a8] sm:$0xff]
    %v666 = vld [vmem:[#allocation2 + $0x11b0] sm:$0xff]
    %v667 = vld [vmem:[#allocation2 + $0x11b8] sm:$0xff]
    %v668 = vld [vmem:[#allocation2 + $0x11c0] sm:$0xff]
    %v669 = vld [vmem:[#allocation2 + $0x11c8] sm:$0xff]
    %v670 = vld [vmem:[#allocation2 + $0x11d0] sm:$0xff]
    %v671 = vld [vmem:[#allocation2 + $0x11d8] sm:$0xff]
    %v672 = vld [vmem:[#allocation2 + $0x11e0] sm:$0xff]
    %v673 = vld [vmem:[#allocation2 + $0x11e8] sm:$0xff]
    %v674 = vld [vmem:[#allocation2 + $0x11f0] sm:$0xff]
    %v675 = vld [vmem:[#allocation2 + $0x11f8] sm:$0xff]
    %v676 = vld [vmem:[#allocation2 + $0x1200] sm:$0xff]
    %v677 = vld [vmem:[#allocation2 + $0x1208] sm:$0xff]
    %v678 = vld [vmem:[#allocation2 + $0x1210] sm:$0xff]
    %v679 = vld [vmem:[#allocation2 + $0x1218] sm:$0xff]
    %v680 = vld [vmem:[#allocation2 + $0x1220] sm:$0xff]
    %v681 = vld [vmem:[#allocation2 + $0x1228] sm:$0xff]
    %v682 = vld [vmem:[#allocation2 + $0x1230] sm:$0xff]
    %v683 = vld [vmem:[#allocation2 + $0x1238] sm:$0xff]
    %v684 = vld [vmem:[#allocation2 + $0x1240] sm:$0xff]
    %v685 = vld [vmem:[#allocation2 + $0x1248] sm:$0xff]
    %v686 = vld [vmem:[#allocation2 + $0x1250] sm:$0xff]
    %v687 = vld [vmem:[#allocation2 + $0x1258] sm:$0xff]
    %v688 = vld [vmem:[#allocation2 + $0x1260] sm:$0xff]
    %v689 = vld [vmem:[#allocation2 + $0x1268] sm:$0xff]
    %v690 = vld [vmem:[#allocation2 + $0x1270] sm:$0xff]
    %v691 = vld [vmem:[#allocation2 + $0x1278] sm:$0xff]
    %v692 = vld [vmem:[#allocation2 + $0x1280] sm:$0xff]
    %v693 = vld [vmem:[#allocation2 + $0x1288] sm:$0xff]
    %v694 = vld [vmem:[#allocation2 + $0x1290] sm:$0xff]
    %v695 = vld [vmem:[#allocation2 + $0x1298] sm:$0xff]
    %v696 = vld [vmem:[#allocation2 + $0x12a0] sm:$0xff]
    %v697 = vld [vmem:[#allocation2 + $0x12a8] sm:$0xff]
    %v698 = vld [vmem:[#allocation2 + $0x12b0] sm:$0xff]
    %v699 = vld [vmem:[#allocation2 + $0x12b8] sm:$0xff]
    %v700 = vld [vmem:[#allocation2 + $0x12c0] sm:$0xff]
    %v701 = vld [vmem:[#allocation2 + $0x12c8] sm:$0xff]
    %v702 = vld [vmem:[#allocation2 + $0x12d0] sm:$0xff]
    %v703 = vld [vmem:[#allocation2 + $0x12d8] sm:$0xff]
    %v704 = vld [vmem:[#allocation2 + $0x12e0] sm:$0xff]
    %v705 = vld [vmem:[#allocation2 + $0x12e8] sm:$0xff]
    %v706 = vld [vmem:[#allocation2 + $0x12f0] sm:$0xff]
    %v707 = vld [vmem:[#allocation2 + $0x12f8] sm:$0xff]
    %v708 = vld [vmem:[#allocation2 + $0x1300] sm:$0xff]
    %v709 = vld [vmem:[#allocation2 + $0x1308] sm:$0xff]
    %v710 = vld [vmem:[#allocation2 + $0x1310] sm:$0xff]
    %v711 = vld [vmem:[#allocation2 + $0x1318] sm:$0xff]
    %v712 = vld [vmem:[#allocation2 + $0x1320] sm:$0xff]
    %v713 = vld [vmem:[#allocation2 + $0x1328] sm:$0xff]
    %v714 = vld [vmem:[#allocation2 + $0x1330] sm:$0xff]
    %v715 = vld [vmem:[#allocation2 + $0x1338] sm:$0xff]
    %v716 = vld [vmem:[#allocation2 + $0x1340] sm:$0xff]
    %v717 = vld [vmem:[#allocation2 + $0x1348] sm:$0xff]
    %v718 = vld [vmem:[#allocation2 + $0x1350] sm:$0xff]
    %v719 = vld [vmem:[#allocation2 + $0x1358] sm:$0xff]
    %v720 = vld [vmem:[#allocation2 + $0x1360] sm:$0xff]
    %v721 = vld [vmem:[#allocation2 + $0x1368] sm:$0xff]
    %v722 = vld [vmem:[#allocation2 + $0x1370] sm:$0xff]
    %v723 = vld [vmem:[#allocation2 + $0x1378] sm:$0xff]
    %v724 = vld [vmem:[#allocation2 + $0x1380] sm:$0xff]
    %v725 = vld [vmem:[#allocation2 + $0x1388] sm:$0xff]
    %v726 = vld [vmem:[#allocation2 + $0x1390] sm:$0xff]
    %v727 = vld [vmem:[#allocation2 + $0x1398] sm:$0xff]
    %v728 = vld [vmem:[#allocation2 + $0x13a0] sm:$0xff]
    %v729 = vld [vmem:[#allocation2 + $0x13a8] sm:$0xff]
    %v730 = vld [vmem:[#allocation2 + $0x13b0] sm:$0xff]
    %v731 = vld [vmem:[#allocation2 + $0x13b8] sm:$0xff]
    %v732 = vld [vmem:[#allocation2 + $0x13c0] sm:$0xff]
    %v733 = vld [vmem:[#allocation2 + $0x13c8] sm:$0xff]
    %v734 = vld [vmem:[#allocation2 + $0x13d0] sm:$0xff]
    %v735 = vld [vmem:[#allocation2 + $0x13d8] sm:$0xff]
    %v736 = vld [vmem:[#allocation2 + $0x13e0] sm:$0xff]
    %v737 = vld [vmem:[#allocation2 + $0x13e8] sm:$0xff]
    %v738 = vld [vmem:[#allocation2 + $0x13f0] sm:$0xff]
    %v739 = vld [vmem:[#allocation2 + $0x13f8] sm:$0xff]
    %v740 = vld [vmem:[#allocation2 + $0x1400] sm:$0xff]
    %v741 = vld [vmem:[#allocation2 + $0x1408] sm:$0xff]
    %v742 = vld [vmem:[#allocation2 + $0x1410] sm:$0xff]
    %v743 = vld [vmem:[#allocation2 + $0x1418] sm:$0xff]
    %v744 = vld [vmem:[#allocation2 + $0x1420] sm:$0xff]
    %v745 = vld [vmem:[#allocation2 + $0x1428] sm:$0xff]
    %v746 = vld [vmem:[#allocation2 + $0x1430] sm:$0xff]
    %v747 = vld [vmem:[#allocation2 + $0x1438] sm:$0xff]
    %v748 = vld [vmem:[#allocation2 + $0x1440] sm:$0xff]
    %v749 = vld [vmem:[#allocation2 + $0x1448] sm:$0xff]
    %v750 = vld [vmem:[#allocation2 + $0x1450] sm:$0xff]
    %v751 = vld [vmem:[#allocation2 + $0x1458] sm:$0xff]
    %v752 = vld [vmem:[#allocation2 + $0x1460] sm:$0xff]
    %v753 = vld [vmem:[#allocation2 + $0x1468] sm:$0xff]
    %v754 = vld [vmem:[#allocation2 + $0x1470] sm:$0xff]
    %v755 = vld [vmem:[#allocation2 + $0x1478] sm:$0xff]
    %v756 = vld [vmem:[#allocation2 + $0x1480] sm:$0xff]
    %v757 = vld [vmem:[#allocation2 + $0x1488] sm:$0xff]
    %v758 = vld [vmem:[#allocation2 + $0x1490] sm:$0xff]
    %v759 = vld [vmem:[#allocation2 + $0x1498] sm:$0xff]
    %v760 = vld [vmem:[#allocation2 + $0x14a0] sm:$0xff]
    %v761 = vld [vmem:[#allocation2 + $0x14a8] sm:$0xff]
    %v762 = vld [vmem:[#allocation2 + $0x14b0] sm:$0xff]
    %v763 = vld [vmem:[#allocation2 + $0x14b8] sm:$0xff]
    %v764 = vld [vmem:[#allocation2 + $0x14c0] sm:$0xff]
    %v765 = vld [vmem:[#allocation2 + $0x14c8] sm:$0xff]
    %v766 = vld [vmem:[#allocation2 + $0x14d0] sm:$0xff]
    %v767 = vld [vmem:[#allocation2 + $0x14d8] sm:$0xff]
    %v768 = vld [vmem:[#allocation2 + $0x14e0] sm:$0xff]
    %v769 = vld [vmem:[#allocation2 + $0x14e8] sm:$0xff]
    %v770 = vld [vmem:[#allocation2 + $0x14f0] sm:$0xff]
    %v771 = vld [vmem:[#allocation2 + $0x14f8] sm:$0xff]
    %v772 = vld [vmem:[#allocation2 + $0x1500] sm:$0xff]
    %v773 = vld [vmem:[#allocation2 + $0x1508] sm:$0xff]
    %v774 = vld [vmem:[#allocation2 + $0x1510] sm:$0xff]
    %v775 = vld [vmem:[#allocation2 + $0x1518] sm:$0xff]
    %v776 = vld [vmem:[#allocation2 + $0x1520] sm:$0xff]
    %v777 = vld [vmem:[#allocation2 + $0x1528] sm:$0xff]
    %v778 = vld [vmem:[#allocation2 + $0x1530] sm:$0xff]
    %v779 = vld [vmem:[#allocation2 + $0x1538] sm:$0xff]
    %v780 = vld [vmem:[#allocation2 + $0x1540] sm:$0xff]
    %v781 = vld [vmem:[#allocation2 + $0x1548] sm:$0xff]
    %v782 = vld [vmem:[#allocation2 + $0x1550] sm:$0xff]
    %v783 = vld [vmem:[#allocation2 + $0x1558] sm:$0xff]
    %v784 = vld [vmem:[#allocation2 + $0x1560] sm:$0xff]
    %v785 = vld [vmem:[#allocation2 + $0x1568] sm:$0xff]
    %v786 = vld [vmem:[#allocation2 + $0x1570] sm:$0xff]
    %v787 = vld [vmem:[#allocation2 + $0x1578] sm:$0xff]
    %v788 = vld [vmem:[#allocation2 + $0x1580] sm:$0xff]
    %v789 = vld [vmem:[#allocation2 + $0x1588] sm:$0xff]
    %v790 = vld [vmem:[#allocation2 + $0x1590] sm:$0xff]
    %v791 = vld [vmem:[#allocation2 + $0x1598] sm:$0xff]
    %v792 = vld [vmem:[#allocation2 + $0x15a0] sm:$0xff]
    %v793 = vld [vmem:[#allocation2 + $0x15a8] sm:$0xff]
    %v794 = vld [vmem:[#allocation2 + $0x15b0] sm:$0xff]
    %v795 = vld [vmem:[#allocation2 + $0x15b8] sm:$0xff]
    %v796 = vld [vmem:[#allocation2 + $0x15c0] sm:$0xff]
    %v797 = vld [vmem:[#allocation2 + $0x15c8] sm:$0xff]
    %v798 = vld [vmem:[#allocation2 + $0x15d0] sm:$0xff]
    %v799 = vld [vmem:[#allocation2 + $0x15d8] sm:$0xff]
    %v800 = vld [vmem:[#allocation2 + $0x15e0] sm:$0xff]
    %v801 = vld [vmem:[#allocation2 + $0x15e8] sm:$0xff]
    %v802 = vld [vmem:[#allocation2 + $0x15f0] sm:$0xff]
    %v803 = vld [vmem:[#allocation2 + $0x15f8] sm:$0xff]
    %v804 = vld [vmem:[#allocation2 + $0x1600] sm:$0xff]
    %v805 = vld [vmem:[#allocation2 + $0x1608] sm:$0xff]
    %v806 = vld [vmem:[#allocation2 + $0x1610] sm:$0xff]
    %v807 = vld [vmem:[#allocation2 + $0x1618] sm:$0xff]
    %v808 = vld [vmem:[#allocation2 + $0x1620] sm:$0xff]
    %v809 = vld [vmem:[#allocation2 + $0x1628] sm:$0xff]
    %v810 = vld [vmem:[#allocation2 + $0x1630] sm:$0xff]
    %v811 = vld [vmem:[#allocation2 + $0x1638] sm:$0xff]
    %v812 = vld [vmem:[#allocation2 + $0x1640] sm:$0xff]
    %v813 = vld [vmem:[#allocation2 + $0x1648] sm:$0xff]
    %v814 = vld [vmem:[#allocation2 + $0x1650] sm:$0xff]
    %v815 = vld [vmem:[#allocation2 + $0x1658] sm:$0xff]
    %v816 = vld [vmem:[#allocation2 + $0x1660] sm:$0xff]
    %v817 = vld [vmem:[#allocation2 + $0x1668] sm:$0xff]
    %v818 = vld [vmem:[#allocation2 + $0x1670] sm:$0xff]
    %v819 = vld [vmem:[#allocation2 + $0x1678] sm:$0xff]
    %v820 = vld [vmem:[#allocation2 + $0x1680] sm:$0xff]
    %v821 = vld [vmem:[#allocation2 + $0x1688] sm:$0xff]
    %v822 = vld [vmem:[#allocation2 + $0x1690] sm:$0xff]
    %v823 = vld [vmem:[#allocation2 + $0x1698] sm:$0xff]
    %v824 = vld [vmem:[#allocation2 + $0x16a0] sm:$0xff]
    %v825 = vld [vmem:[#allocation2 + $0x16a8] sm:$0xff]
    %v826 = vld [vmem:[#allocation2 + $0x16b0] sm:$0xff]
    %v827 = vld [vmem:[#allocation2 + $0x16b8] sm:$0xff]
    %v828 = vld [vmem:[#allocation2 + $0x16c0] sm:$0xff]
    %v829 = vld [vmem:[#allocation2 + $0x16c8] sm:$0xff]
    %v830 = vld [vmem:[#allocation2 + $0x16d0] sm:$0xff]
    %v831 = vld [vmem:[#allocation2 + $0x16d8] sm:$0xff]
    %v832 = vld [vmem:[#allocation2 + $0x16e0] sm:$0xff]
    %v833 = vld [vmem:[#allocation2 + $0x16e8] sm:$0xff]
    %v834 = vld [vmem:[#allocation2 + $0x16f0] sm:$0xff]
    %v835 = vld [vmem:[#allocation2 + $0x16f8] sm:$0xff]
    %v836 = vld [vmem:[#allocation2 + $0x1700] sm:$0xff]
    %v837 = vld [vmem:[#allocation2 + $0x1708] sm:$0xff]
    %v838 = vld [vmem:[#allocation2 + $0x1710] sm:$0xff]
    %v839 = vld [vmem:[#allocation2 + $0x1718] sm:$0xff]
    %v840 = vld [vmem:[#allocation2 + $0x1720] sm:$0xff]
    %v841 = vld [vmem:[#allocation2 + $0x1728] sm:$0xff]
    %v842 = vld [vmem:[#allocation2 + $0x1730] sm:$0xff]
    %v843 = vld [vmem:[#allocation2 + $0x1738] sm:$0xff]
    %v844 = vld [vmem:[#allocation2 + $0x1740] sm:$0xff]
    %v845 = vld [vmem:[#allocation2 + $0x1748] sm:$0xff]
    %v846 = vld [vmem:[#allocation2 + $0x1750] sm:$0xff]
    %v847 = vld [vmem:[#allocation2 + $0x1758] sm:$0xff]
    %v848 = vld [vmem:[#allocation2 + $0x1760] sm:$0xff]
    %v849 = vld [vmem:[#allocation2 + $0x1768] sm:$0xff]
    %v850 = vld [vmem:[#allocation2 + $0x1770] sm:$0xff]
    %v851 = vld [vmem:[#allocation2 + $0x1778] sm:$0xff]
    %v852 = vld [vmem:[#allocation2 + $0x1780] sm:$0xff]
    %v853 = vld [vmem:[#allocation2 + $0x1788] sm:$0xff]
    %v854 = vld [vmem:[#allocation2 + $0x1790] sm:$0xff]
    %v855 = vld [vmem:[#allocation2 + $0x1798] sm:$0xff]
    %v856 = vld [vmem:[#allocation2 + $0x17a0] sm:$0xff]
    %v857 = vld [vmem:[#allocation2 + $0x17a8] sm:$0xff]
    %v858 = vld [vmem:[#allocation2 + $0x17b0] sm:$0xff]
    %v859 = vld [vmem:[#allocation2 + $0x17b8] sm:$0xff]
    %v860 = vld [vmem:[#allocation2 + $0x17c0] sm:$0xff]
    %v861 = vld [vmem:[#allocation2 + $0x17c8] sm:$0xff]
    %v862 = vld [vmem:[#allocation2 + $0x17d0] sm:$0xff]
    %v863 = vld [vmem:[#allocation2 + $0x17d8] sm:$0xff]
    %v864 = vld [vmem:[#allocation2 + $0x17e0] sm:$0xff]
    %v865 = vld [vmem:[#allocation2 + $0x17e8] sm:$0xff]
    %v866 = vld [vmem:[#allocation2 + $0x17f0] sm:$0xff]
    %v867 = vld [vmem:[#allocation2 + $0x17f8] sm:$0xff]
    %v868 = vld [vmem:[#allocation2 + $0x1800] sm:$0xff]
    %v869 = vld [vmem:[#allocation2 + $0x1808] sm:$0xff]
    %v870 = vld [vmem:[#allocation2 + $0x1810] sm:$0xff]
    %v871 = vld [vmem:[#allocation2 + $0x1818] sm:$0xff]
    %v872 = vld [vmem:[#allocation2 + $0x1820] sm:$0xff]
    %v873 = vld [vmem:[#allocation2 + $0x1828] sm:$0xff]
    %v874 = vld [vmem:[#allocation2 + $0x1830] sm:$0xff]
    %v875 = vld [vmem:[#allocation2 + $0x1838] sm:$0xff]
    %v876 = vld [vmem:[#allocation2 + $0x1840] sm:$0xff]
    %v877 = vld [vmem:[#allocation2 + $0x1848] sm:$0xff]
    %v878 = vld [vmem:[#allocation2 + $0x1850] sm:$0xff]
    %v879 = vld [vmem:[#allocation2 + $0x1858] sm:$0xff]
    %v880 = vld [vmem:[#allocation2 + $0x1860] sm:$0xff]
    %v881 = vld [vmem:[#allocation2 + $0x1868] sm:$0xff]
    %v882 = vld [vmem:[#allocation2 + $0x1870] sm:$0xff]
    %v883 = vld [vmem:[#allocation2 + $0x1878] sm:$0xff]
    %v888 = vunpack.c.l.b16 %v96
    %v889 = vunpack.c.h.b16 %v96
    %v890 = vunpack.c.l.b16 %v97
    %v891 = vunpack.c.h.b16 %v97
    %v892 = vunpack.c.l.b16 %v98
    %v893 = vunpack.c.h.b16 %v98
    %v894 = vunpack.c.l.b16 %v99
    %v895 = vpack.c.b16 %v888, %v888
    %v896 = vpack.c.b16 %v889, %v889
    %v897 = vpack.c.b16 %v890, %v890
    %v898 = vpack.c.b16 %v891, %v891
    %v899 = vpack.c.b16 %v892, %v892
    %v900 = vpack.c.b16 %v893, %v893
    %v901 = vpack.c.b16 %v894, %v894
    %v1693 = vunpack.c.l.b16 %v100
    %v1694 = vunpack.c.h.b16 %v100
    %v1695 = vunpack.c.l.b16 %v101
    %v1696 = vunpack.c.h.b16 %v101
    %v1697 = vunpack.c.l.b16 %v102
    %v1698 = vunpack.c.h.b16 %v102
    %v1699 = vunpack.c.l.b16 %v103
    %v1700 = vunpack.c.h.b16 %v103
    %v1701 = vunpack.c.l.b16 %v104
    %v1702 = vunpack.c.h.b16 %v104
    %v1703 = vunpack.c.l.b16 %v105
    %v1704 = vunpack.c.h.b16 %v105
    %v1705 = vunpack.c.l.b16 %v106
    %v1706 = vunpack.c.h.b16 %v106
    %v1707 = vunpack.c.l.b16 %v107
    %v1708 = vunpack.c.h.b16 %v107
    %v1709 = vunpack.c.l.b16 %v108
    %v1710 = vunpack.c.h.b16 %v108
    %v1711 = vunpack.c.l.b16 %v109
    %v1712 = vunpack.c.h.b16 %v109
    %v1713 = vunpack.c.l.b16 %v110
    %v1714 = vunpack.c.h.b16 %v110
    %v1715 = vunpack.c.l.b16 %v111
    %v1716 = vunpack.c.h.b16 %v111
    %v1717 = vunpack.c.l.b16 %v112
    %v1718 = vunpack.c.h.b16 %v112
    %v1719 = vunpack.c.l.b16 %v113
    %v1720 = vunpack.c.h.b16 %v113
    %v1721 = vunpack.c.l.b16 %v114
    %v1722 = vunpack.c.h.b16 %v114
    %v1723 = vunpack.c.l.b16 %v115
    %v1724 = vunpack.c.h.b16 %v115
    %v1725 = vunpack.c.l.b16 %v116
    %v1726 = vunpack.c.h.b16 %v116
    %v1727 = vunpack.c.l.b16 %v117
    %v1728 = vunpack.c.h.b16 %v117
    %v1729 = vunpack.c.l.b16 %v118
    %v1730 = vunpack.c.h.b16 %v118
    %v1731 = vunpack.c.l.b16 %v119
    %v1732 = vunpack.c.h.b16 %v119
    %v1733 = vunpack.c.l.b16 %v120
    %v1734 = vunpack.c.h.b16 %v120
    %v1735 = vunpack.c.l.b16 %v121
    %v1736 = vunpack.c.h.b16 %v121
    %v1737 = vunpack.c.l.b16 %v122
    %v1738 = vunpack.c.h.b16 %v122
    %v1739 = vunpack.c.l.b16 %v123
    %v1740 = vunpack.c.h.b16 %v123
    %v1741 = vunpack.c.l.b16 %v124
    %v1742 = vunpack.c.h.b16 %v124
    %v1743 = vunpack.c.l.b16 %v125
    %v1744 = vunpack.c.h.b16 %v125
    %v1745 = vunpack.c.l.b16 %v126
    %v1746 = vunpack.c.h.b16 %v126
    %v1747 = vunpack.c.l.b16 %v127
    %v1748 = vunpack.c.h.b16 %v127
    %v1749 = vunpack.c.l.b16 %v128
    %v1750 = vunpack.c.h.b16 %v128
    %v1751 = vunpack.c.l.b16 %v129
    %v1752 = vunpack.c.h.b16 %v129
    %v1753 = vunpack.c.l.b16 %v130
    %v1754 = vunpack.c.h.b16 %v130
    %v1755 = vunpack.c.l.b16 %v131
    %v1756 = vunpack.c.h.b16 %v131
    %v1757 = vunpack.c.l.b16 %v132
    %v1758 = vunpack.c.h.b16 %v132
    %v1759 = vunpack.c.l.b16 %v133
    %v1760 = vunpack.c.h.b16 %v133
    %v1761 = vunpack.c.l.b16 %v134
    %v1762 = vunpack.c.h.b16 %v134
    %v1763 = vunpack.c.l.b16 %v135
    %v1764 = vunpack.c.h.b16 %v135
    %v1765 = vunpack.c.l.b16 %v136
    %v1766 = vunpack.c.h.b16 %v136
    %v1767 = vunpack.c.l.b16 %v137
    %v1768 = vunpack.c.h.b16 %v137
    %v1769 = vunpack.c.l.b16 %v138
    %v1770 = vunpack.c.h.b16 %v138
    %v1771 = vunpack.c.l.b16 %v139
    %v1772 = vunpack.c.h.b16 %v139
    %v1773 = vunpack.c.l.b16 %v140
    %v1774 = vunpack.c.h.b16 %v140
    %v1775 = vunpack.c.l.b16 %v141
    %v1776 = vunpack.c.h.b16 %v141
    %v1777 = vunpack.c.l.b16 %v142
    %v1778 = vunpack.c.h.b16 %v142
    %v1779 = vunpack.c.l.b16 %v143
    %v1780 = vunpack.c.h.b16 %v143
    %v1781 = vunpack.c.l.b16 %v144
    %v1782 = vunpack.c.h.b16 %v144
    %v1783 = vunpack.c.l.b16 %v145
    %v1784 = vunpack.c.h.b16 %v145
    %v1785 = vunpack.c.l.b16 %v146
    %v1786 = vunpack.c.h.b16 %v146
    %v1787 = vunpack.c.l.b16 %v147
    %v1788 = vunpack.c.h.b16 %v147
    %v1789 = vunpack.c.l.b16 %v148
    %v1790 = vunpack.c.h.b16 %v148
    %v1791 = vunpack.c.l.b16 %v149
    %v1792 = vunpack.c.h.b16 %v149
    %v1793 = vunpack.c.l.b16 %v150
    %v1794 = vunpack.c.h.b16 %v150
    %v1795 = vunpack.c.l.b16 %v151
    %v1796 = vunpack.c.h.b16 %v151
    %v1797 = vunpack.c.l.b16 %v152
    %v1798 = vunpack.c.h.b16 %v152
    %v1799 = vunpack.c.l.b16 %v153
    %v1800 = vunpack.c.h.b16 %v153
    %v1801 = vunpack.c.l.b16 %v154
    %v1802 = vunpack.c.h.b16 %v154
    %v1803 = vunpack.c.l.b16 %v155
    %v1804 = vunpack.c.h.b16 %v155
    %v1805 = vunpack.c.l.b16 %v156
    %v1806 = vunpack.c.h.b16 %v156
    %v1807 = vunpack.c.l.b16 %v157
    %v1808 = vunpack.c.h.b16 %v157
    %v1809 = vunpack.c.l.b16 %v158
    %v1810 = vunpack.c.h.b16 %v158
    %v1811 = vunpack.c.l.b16 %v159
    %v1812 = vunpack.c.h.b16 %v159
    %v1813 = vunpack.c.l.b16 %v160
    %v1814 = vunpack.c.h.b16 %v160
    %v1815 = vunpack.c.l.b16 %v161
    %v1816 = vunpack.c.h.b16 %v161
    %v1817 = vunpack.c.l.b16 %v162
    %v1818 = vunpack.c.h.b16 %v162
    %v1819 = vunpack.c.l.b16 %v163
    %v1820 = vunpack.c.h.b16 %v163
    %v1821 = vunpack.c.l.b16 %v164
    %v1822 = vunpack.c.h.b16 %v164
    %v1823 = vunpack.c.l.b16 %v165
    %v1824 = vunpack.c.h.b16 %v165
    %v1825 = vunpack.c.l.b16 %v166
    %v1826 = vunpack.c.h.b16 %v166
    %v1827 = vunpack.c.l.b16 %v167
    %v1828 = vunpack.c.h.b16 %v167
    %v1829 = vunpack.c.l.b16 %v168
    %v1830 = vunpack.c.h.b16 %v168
    %v1831 = vunpack.c.l.b16 %v169
    %v1832 = vunpack.c.h.b16 %v169
    %v1833 = vunpack.c.l.b16 %v170
    %v1834 = vunpack.c.h.b16 %v170
    %v1835 = vunpack.c.l.b16 %v171
    %v1836 = vunpack.c.h.b16 %v171
    %v1837 = vunpack.c.l.b16 %v172
    %v1838 = vunpack.c.h.b16 %v172
    %v1839 = vunpack.c.l.b16 %v173
    %v1840 = vunpack.c.h.b16 %v173
    %v1841 = vunpack.c.l.b16 %v174
    %v1842 = vunpack.c.h.b16 %v174
    %v1843 = vunpack.c.l.b16 %v175
    %v1844 = vunpack.c.h.b16 %v175
    %v1845 = vunpack.c.l.b16 %v176
    %v1846 = vunpack.c.h.b16 %v176
    %v1847 = vunpack.c.l.b16 %v177
    %v1848 = vunpack.c.h.b16 %v177
    %v1849 = vunpack.c.l.b16 %v178
    %v1850 = vunpack.c.h.b16 %v178
    %v1851 = vunpack.c.l.b16 %v179
    %v1852 = vunpack.c.h.b16 %v179
    %v1853 = vunpack.c.l.b16 %v180
    %v1854 = vunpack.c.h.b16 %v180
    %v1855 = vunpack.c.l.b16 %v181
    %v1856 = vunpack.c.h.b16 %v181
    %v1857 = vunpack.c.l.b16 %v182
    %v1858 = vunpack.c.h.b16 %v182
    %v1859 = vunpack.c.l.b16 %v183
    %v1860 = vunpack.c.h.b16 %v183
    %v1861 = vunpack.c.l.b16 %v184
    %v1862 = vunpack.c.h.b16 %v184
    %v1863 = vunpack.c.l.b16 %v185
    %v1864 = vunpack.c.h.b16 %v185
    %v1865 = vunpack.c.l.b16 %v186
    %v1866 = vunpack.c.h.b16 %v186
    %v1867 = vunpack.c.l.b16 %v187
    %v1868 = vunpack.c.h.b16 %v187
    %v1869 = vunpack.c.l.b16 %v188
    %v1870 = vunpack.c.h.b16 %v188
    %v1871 = vunpack.c.l.b16 %v189
    %v1872 = vunpack.c.h.b16 %v189
    %v1873 = vunpack.c.l.b16 %v190
    %v1874 = vunpack.c.h.b16 %v190
    %v1875 = vunpack.c.l.b16 %v191
    %v1876 = vunpack.c.h.b16 %v191
    %v1877 = vunpack.c.l.b16 %v192
    %v1878 = vunpack.c.h.b16 %v192
    %v1879 = vunpack.c.l.b16 %v193
    %v1880 = vunpack.c.h.b16 %v193
    %v1881 = vunpack.c.l.b16 %v194
    %v1882 = vunpack.c.h.b16 %v194
    %v1883 = vunpack.c.l.b16 %v195
    %v1884 = vunpack.c.h.b16 %v195
    %v1885 = vunpack.c.l.b16 %v196
    %v1886 = vunpack.c.h.b16 %v196
    %v1887 = vunpack.c.l.b16 %v197
    %v1888 = vunpack.c.h.b16 %v197
    %v1889 = vunpack.c.l.b16 %v198
    %v1890 = vunpack.c.h.b16 %v198
    %v1891 = vunpack.c.l.b16 %v199
    %v1892 = vunpack.c.h.b16 %v199
    %v1893 = vunpack.c.l.b16 %v200
    %v1894 = vunpack.c.h.b16 %v200
    %v1895 = vunpack.c.l.b16 %v201
    %v1896 = vunpack.c.h.b16 %v201
    %v1897 = vunpack.c.l.b16 %v202
    %v1898 = vunpack.c.h.b16 %v202
    %v1899 = vunpack.c.l.b16 %v203
    %v1900 = vunpack.c.h.b16 %v203
    %v1901 = vunpack.c.l.b16 %v204
    %v1902 = vunpack.c.h.b16 %v204
    %v1903 = vunpack.c.l.b16 %v205
    %v1904 = vunpack.c.h.b16 %v205
    %v1905 = vunpack.c.l.b16 %v206
    %v1906 = vunpack.c.h.b16 %v206
    %v1907 = vunpack.c.l.b16 %v207
    %v1908 = vunpack.c.h.b16 %v207
    %v1909 = vunpack.c.l.b16 %v208
    %v1910 = vunpack.c.h.b16 %v208
    %v1911 = vunpack.c.l.b16 %v209
    %v1912 = vunpack.c.h.b16 %v209
    %v1913 = vunpack.c.l.b16 %v210
    %v1914 = vunpack.c.h.b16 %v210
    %v1915 = vunpack.c.l.b16 %v211
    %v1916 = vunpack.c.h.b16 %v211
    %v1917 = vunpack.c.l.b16 %v212
    %v1918 = vunpack.c.h.b16 %v212
    %v1919 = vunpack.c.l.b16 %v213
    %v1920 = vunpack.c.h.b16 %v213
    %v1921 = vunpack.c.l.b16 %v214
    %v1922 = vunpack.c.h.b16 %v214
    %v1923 = vunpack.c.l.b16 %v215
    %v1924 = vunpack.c.h.b16 %v215
    %v1925 = vunpack.c.l.b16 %v216
    %v1926 = vunpack.c.h.b16 %v216
    %v1927 = vunpack.c.l.b16 %v217
    %v1928 = vunpack.c.h.b16 %v217
    %v1929 = vunpack.c.l.b16 %v218
    %v1930 = vunpack.c.h.b16 %v218
    %v1931 = vunpack.c.l.b16 %v219
    %v1932 = vunpack.c.h.b16 %v219
    %v1933 = vunpack.c.l.b16 %v220
    %v1934 = vunpack.c.h.b16 %v220
    %v1935 = vunpack.c.l.b16 %v221
    %v1936 = vunpack.c.h.b16 %v221
    %v1937 = vunpack.c.l.b16 %v222
    %v1938 = vunpack.c.h.b16 %v222
    %v1939 = vunpack.c.l.b16 %v223
    %v1940 = vunpack.c.h.b16 %v223
    %v1941 = vunpack.c.l.b16 %v224
    %v1942 = vunpack.c.h.b16 %v224
    %v1943 = vunpack.c.l.b16 %v225
    %v1944 = vunpack.c.h.b16 %v225
    %v1945 = vunpack.c.l.b16 %v226
    %v1946 = vunpack.c.h.b16 %v226
    %v1947 = vunpack.c.l.b16 %v227
    %v1948 = vunpack.c.h.b16 %v227
    %v1949 = vunpack.c.l.b16 %v228
    %v1950 = vunpack.c.h.b16 %v228
    %v1951 = vunpack.c.l.b16 %v229
    %v1952 = vunpack.c.h.b16 %v229
    %v1953 = vunpack.c.l.b16 %v230
    %v1954 = vunpack.c.h.b16 %v230
    %v1955 = vunpack.c.l.b16 %v231
    %v1956 = vunpack.c.h.b16 %v231
    %v1957 = vunpack.c.l.b16 %v232
    %v1958 = vunpack.c.h.b16 %v232
    %v1959 = vunpack.c.l.b16 %v233
    %v1960 = vunpack.c.h.b16 %v233
    %v1961 = vunpack.c.l.b16 %v234
    %v1962 = vunpack.c.h.b16 %v234
    %v1963 = vunpack.c.l.b16 %v235
    %v1964 = vunpack.c.h.b16 %v235
    %v1965 = vunpack.c.l.b16 %v236
    %v1966 = vunpack.c.h.b16 %v236
    %v1967 = vunpack.c.l.b16 %v237
    %v1968 = vunpack.c.h.b16 %v237
    %v1969 = vunpack.c.l.b16 %v238
    %v1970 = vunpack.c.h.b16 %v238
    %v1971 = vunpack.c.l.b16 %v239
    %v1972 = vunpack.c.h.b16 %v239
    %v1973 = vunpack.c.l.b16 %v240
    %v1974 = vunpack.c.h.b16 %v240
    %v1975 = vunpack.c.l.b16 %v241
    %v1976 = vunpack.c.h.b16 %v241
    %v1977 = vunpack.c.l.b16 %v242
    %v1978 = vunpack.c.h.b16 %v242
    %v1979 = vunpack.c.l.b16 %v243
    %v1980 = vunpack.c.h.b16 %v243
    %v1981 = vunpack.c.l.b16 %v244
    %v1982 = vunpack.c.h.b16 %v244
    %v1983 = vunpack.c.l.b16 %v245
    %v1984 = vunpack.c.h.b16 %v245
    %v1985 = vunpack.c.l.b16 %v246
    %v1986 = vunpack.c.h.b16 %v246
    %v1987 = vunpack.c.l.b16 %v247
    %v1988 = vunpack.c.h.b16 %v247
    %v1989 = vunpack.c.l.b16 %v248
    %v1990 = vunpack.c.h.b16 %v248
    %v1991 = vunpack.c.l.b16 %v249
    %v1992 = vunpack.c.h.b16 %v249
    %v1993 = vunpack.c.l.b16 %v250
    %v1994 = vunpack.c.h.b16 %v250
    %v1995 = vunpack.c.l.b16 %v251
    %v1996 = vunpack.c.h.b16 %v251
    %v1997 = vunpack.c.l.b16 %v252
    %v1998 = vunpack.c.h.b16 %v252
    %v1999 = vunpack.c.l.b16 %v253
    %v2000 = vunpack.c.h.b16 %v253
    %v2001 = vunpack.c.l.b16 %v254
    %v2002 = vunpack.c.h.b16 %v254
    %v2003 = vunpack.c.l.b16 %v255
    %v2004 = vunpack.c.h.b16 %v255
    %v2005 = vunpack.c.l.b16 %v256
    %v2006 = vunpack.c.h.b16 %v256
    %v2007 = vunpack.c.l.b16 %v257
    %v2008 = vunpack.c.h.b16 %v257
    %v2009 = vunpack.c.l.b16 %v258
    %v2010 = vunpack.c.h.b16 %v258
    %v2011 = vunpack.c.l.b16 %v259
    %v2012 = vunpack.c.h.b16 %v259
    %v2013 = vunpack.c.l.b16 %v260
    %v2014 = vunpack.c.h.b16 %v260
    %v2015 = vunpack.c.l.b16 %v261
    %v2016 = vunpack.c.h.b16 %v261
    %v2017 = vunpack.c.l.b16 %v262
    %v2018 = vunpack.c.h.b16 %v262
    %v2019 = vunpack.c.l.b16 %v263
    %v2020 = vunpack.c.h.b16 %v263
    %v2021 = vunpack.c.l.b16 %v264
    %v2022 = vunpack.c.h.b16 %v264
    %v2023 = vunpack.c.l.b16 %v265
    %v2024 = vunpack.c.h.b16 %v265
    %v2025 = vunpack.c.l.b16 %v266
    %v2026 = vunpack.c.h.b16 %v266
    %v2027 = vunpack.c.l.b16 %v267
    %v2028 = vunpack.c.h.b16 %v267
    %v2029 = vunpack.c.l.b16 %v268
    %v2030 = vunpack.c.h.b16 %v268
    %v2031 = vunpack.c.l.b16 %v269
    %v2032 = vunpack.c.h.b16 %v269
    %v2033 = vunpack.c.l.b16 %v270
    %v2034 = vunpack.c.h.b16 %v270
    %v2035 = vunpack.c.l.b16 %v271
    %v2036 = vunpack.c.h.b16 %v271
    %v2037 = vunpack.c.l.b16 %v272
    %v2038 = vunpack.c.h.b16 %v272
    %v2039 = vunpack.c.l.b16 %v273
    %v2040 = vunpack.c.h.b16 %v273
    %v2041 = vunpack.c.l.b16 %v274
    %v2042 = vunpack.c.h.b16 %v274
    %v2043 = vunpack.c.l.b16 %v275
    %v2044 = vunpack.c.h.b16 %v275
    %v2045 = vunpack.c.l.b16 %v276
    %v2046 = vunpack.c.h.b16 %v276
    %v2047 = vunpack.c.l.b16 %v277
    %v2048 = vunpack.c.h.b16 %v277
    %v2049 = vunpack.c.l.b16 %v278
    %v2050 = vunpack.c.h.b16 %v278
    %v2051 = vunpack.c.l.b16 %v279
    %v2052 = vunpack.c.h.b16 %v279
    %v2053 = vunpack.c.l.b16 %v280
    %v2054 = vunpack.c.h.b16 %v280
    %v2055 = vunpack.c.l.b16 %v281
    %v2056 = vunpack.c.h.b16 %v281
    %v2057 = vunpack.c.l.b16 %v282
    %v2058 = vunpack.c.h.b16 %v282
    %v2059 = vunpack.c.l.b16 %v283
    %v2060 = vunpack.c.h.b16 %v283
    %v2061 = vunpack.c.l.b16 %v284
    %v2062 = vunpack.c.h.b16 %v284
    %v2063 = vunpack.c.l.b16 %v285
    %v2064 = vunpack.c.h.b16 %v285
    %v2065 = vunpack.c.l.b16 %v286
    %v2066 = vunpack.c.h.b16 %v286
    %v2067 = vunpack.c.l.b16 %v287
    %v2068 = vunpack.c.h.b16 %v287
    %v2069 = vunpack.c.l.b16 %v288
    %v2070 = vunpack.c.h.b16 %v288
    %v2071 = vunpack.c.l.b16 %v289
    %v2072 = vunpack.c.h.b16 %v289
    %v2073 = vunpack.c.l.b16 %v290
    %v2074 = vunpack.c.h.b16 %v290
    %v2075 = vunpack.c.l.b16 %v291
    %v2076 = vunpack.c.h.b16 %v291
    %v2077 = vunpack.c.l.b16 %v292
    %v2078 = vunpack.c.h.b16 %v292
    %v2079 = vunpack.c.l.b16 %v293
    %v2080 = vunpack.c.h.b16 %v293
    %v2081 = vunpack.c.l.b16 %v294
    %v2082 = vunpack.c.h.b16 %v294
    %v2083 = vunpack.c.l.b16 %v295
    %v2084 = vunpack.c.h.b16 %v295
    %v2085 = vunpack.c.l.b16 %v296
    %v2086 = vunpack.c.h.b16 %v296
    %v2087 = vunpack.c.l.b16 %v297
    %v2088 = vunpack.c.h.b16 %v297
    %v2089 = vunpack.c.l.b16 %v298
    %v2090 = vunpack.c.h.b16 %v298
    %v2091 = vunpack.c.l.b16 %v299
    %v2092 = vunpack.c.h.b16 %v299
    %v2093 = vunpack.c.l.b16 %v300
    %v2094 = vunpack.c.h.b16 %v300
    %v2095 = vunpack.c.l.b16 %v301
    %v2096 = vunpack.c.h.b16 %v301
    %v2097 = vunpack.c.l.b16 %v302
    %v2098 = vunpack.c.h.b16 %v302
    %v2099 = vunpack.c.l.b16 %v303
    %v2100 = vunpack.c.h.b16 %v303
    %v2101 = vunpack.c.l.b16 %v304
    %v2102 = vunpack.c.h.b16 %v304
    %v2103 = vunpack.c.l.b16 %v305
    %v2104 = vunpack.c.h.b16 %v305
    %v2105 = vunpack.c.l.b16 %v306
    %v2106 = vunpack.c.h.b16 %v306
    %v2107 = vunpack.c.l.b16 %v307
    %v2108 = vunpack.c.h.b16 %v307
    %v2109 = vunpack.c.l.b16 %v308
    %v2110 = vunpack.c.h.b16 %v308
    %v2111 = vunpack.c.l.b16 %v309
    %v2112 = vunpack.c.h.b16 %v309
    %v2113 = vunpack.c.l.b16 %v310
    %v2114 = vunpack.c.h.b16 %v310
    %v2115 = vunpack.c.l.b16 %v311
    %v2116 = vunpack.c.h.b16 %v311
    %v2117 = vunpack.c.l.b16 %v312
    %v2118 = vunpack.c.h.b16 %v312
    %v2119 = vunpack.c.l.b16 %v313
    %v2120 = vunpack.c.h.b16 %v313
    %v2121 = vunpack.c.l.b16 %v314
    %v2122 = vunpack.c.h.b16 %v314
    %v2123 = vunpack.c.l.b16 %v315
    %v2124 = vunpack.c.h.b16 %v315
    %v2125 = vunpack.c.l.b16 %v316
    %v2126 = vunpack.c.h.b16 %v316
    %v2127 = vunpack.c.l.b16 %v317
    %v2128 = vunpack.c.h.b16 %v317
    %v2129 = vunpack.c.l.b16 %v318
    %v2130 = vunpack.c.h.b16 %v318
    %v2131 = vunpack.c.l.b16 %v319
    %v2132 = vunpack.c.h.b16 %v319
    %v2133 = vunpack.c.l.b16 %v320
    %v2134 = vunpack.c.h.b16 %v320
    %v2135 = vunpack.c.l.b16 %v321
    %v2136 = vunpack.c.h.b16 %v321
    %v2137 = vunpack.c.l.b16 %v322
    %v2138 = vunpack.c.h.b16 %v322
    %v2139 = vunpack.c.l.b16 %v323
    %v2140 = vunpack.c.h.b16 %v323
    %v2141 = vunpack.c.l.b16 %v324
    %v2142 = vunpack.c.h.b16 %v324
    %v2143 = vunpack.c.l.b16 %v325
    %v2144 = vunpack.c.h.b16 %v325
    %v2145 = vunpack.c.l.b16 %v326
    %v2146 = vunpack.c.h.b16 %v326
    %v2147 = vunpack.c.l.b16 %v327
    %v2148 = vunpack.c.h.b16 %v327
    %v2149 = vunpack.c.l.b16 %v328
    %v2150 = vunpack.c.h.b16 %v328
    %v2151 = vunpack.c.l.b16 %v329
    %v2152 = vunpack.c.h.b16 %v329
    %v2153 = vunpack.c.l.b16 %v330
    %v2154 = vunpack.c.h.b16 %v330
    %v2155 = vunpack.c.l.b16 %v331
    %v2156 = vunpack.c.h.b16 %v331
    %v2157 = vunpack.c.l.b16 %v332
    %v2158 = vunpack.c.h.b16 %v332
    %v2159 = vunpack.c.l.b16 %v333
    %v2160 = vunpack.c.h.b16 %v333
    %v2161 = vunpack.c.l.b16 %v334
    %v2162 = vunpack.c.h.b16 %v334
    %v2163 = vunpack.c.l.b16 %v335
    %v2164 = vunpack.c.h.b16 %v335
    %v2165 = vunpack.c.l.b16 %v336
    %v2166 = vunpack.c.h.b16 %v336
    %v2167 = vunpack.c.l.b16 %v337
    %v2168 = vunpack.c.h.b16 %v337
    %v2169 = vunpack.c.l.b16 %v338
    %v2170 = vunpack.c.h.b16 %v338
    %v2171 = vunpack.c.l.b16 %v339
    %v2172 = vunpack.c.h.b16 %v339
    %v2173 = vunpack.c.l.b16 %v340
    %v2174 = vunpack.c.h.b16 %v340
    %v2175 = vunpack.c.l.b16 %v341
    %v2176 = vunpack.c.h.b16 %v341
    %v2177 = vunpack.c.l.b16 %v342
    %v2178 = vunpack.c.h.b16 %v342
    %v2179 = vunpack.c.l.b16 %v343
    %v2180 = vunpack.c.h.b16 %v343
    %v2181 = vunpack.c.l.b16 %v344
    %v2182 = vunpack.c.h.b16 %v344
    %v2183 = vunpack.c.l.b16 %v345
    %v2184 = vunpack.c.h.b16 %v345
    %v2185 = vunpack.c.l.b16 %v346
    %v2186 = vunpack.c.h.b16 %v346
    %v2187 = vunpack.c.l.b16 %v347
    %v2188 = vunpack.c.h.b16 %v347
    %v2189 = vunpack.c.l.b16 %v348
    %v2190 = vunpack.c.h.b16 %v348
    %v2191 = vunpack.c.l.b16 %v349
    %v2192 = vunpack.c.h.b16 %v349
    %v2193 = vunpack.c.l.b16 %v350
    %v2194 = vunpack.c.h.b16 %v350
    %v2195 = vunpack.c.l.b16 %v351
    %v2196 = vunpack.c.h.b16 %v351
    %v2197 = vunpack.c.l.b16 %v352
    %v2198 = vunpack.c.h.b16 %v352
    %v2199 = vunpack.c.l.b16 %v353
    %v2200 = vunpack.c.h.b16 %v353
    %v2201 = vunpack.c.l.b16 %v354
    %v2202 = vunpack.c.h.b16 %v354
    %v2203 = vunpack.c.l.b16 %v355
    %v2204 = vunpack.c.h.b16 %v355
    %v2205 = vunpack.c.l.b16 %v356
    %v2206 = vunpack.c.h.b16 %v356
    %v2207 = vunpack.c.l.b16 %v357
    %v2208 = vunpack.c.h.b16 %v357
    %v2209 = vunpack.c.l.b16 %v358
    %v2210 = vunpack.c.h.b16 %v358
    %v2211 = vunpack.c.l.b16 %v359
    %v2212 = vunpack.c.h.b16 %v359
    %v2213 = vunpack.c.l.b16 %v360
    %v2214 = vunpack.c.h.b16 %v360
    %v2215 = vunpack.c.l.b16 %v361
    %v2216 = vunpack.c.h.b16 %v361
    %v2217 = vunpack.c.l.b16 %v362
    %v2218 = vunpack.c.h.b16 %v362
    %v2219 = vunpack.c.l.b16 %v363
    %v2220 = vunpack.c.h.b16 %v363
    %v2221 = vunpack.c.l.b16 %v364
    %v2222 = vunpack.c.h.b16 %v364
    %v2223 = vunpack.c.l.b16 %v365
    %v2224 = vunpack.c.h.b16 %v365
    %v2225 = vunpack.c.l.b16 %v366
    %v2226 = vunpack.c.h.b16 %v366
    %v2227 = vunpack.c.l.b16 %v367
    %v2228 = vunpack.c.h.b16 %v367
    %v2229 = vunpack.c.l.b16 %v368
    %v2230 = vunpack.c.h.b16 %v368
    %v2231 = vunpack.c.l.b16 %v369
    %v2232 = vunpack.c.h.b16 %v369
    %v2233 = vunpack.c.l.b16 %v370
    %v2234 = vunpack.c.h.b16 %v370
    %v2235 = vunpack.c.l.b16 %v371
    %v2236 = vunpack.c.h.b16 %v371
    %v2237 = vunpack.c.l.b16 %v372
    %v2238 = vunpack.c.h.b16 %v372
    %v2239 = vunpack.c.l.b16 %v373
    %v2240 = vunpack.c.h.b16 %v373
    %v2241 = vunpack.c.l.b16 %v374
    %v2242 = vunpack.c.h.b16 %v374
    %v2243 = vunpack.c.l.b16 %v375
    %v2244 = vunpack.c.h.b16 %v375
    %v2245 = vunpack.c.l.b16 %v376
    %v2246 = vunpack.c.h.b16 %v376
    %v2247 = vunpack.c.l.b16 %v377
    %v2248 = vunpack.c.h.b16 %v377
    %v2249 = vunpack.c.l.b16 %v378
    %v2250 = vunpack.c.h.b16 %v378
    %v2251 = vunpack.c.l.b16 %v379
    %v2252 = vunpack.c.h.b16 %v379
    %v2253 = vunpack.c.l.b16 %v380
    %v2254 = vunpack.c.h.b16 %v380
    %v2255 = vunpack.c.l.b16 %v381
    %v2256 = vunpack.c.h.b16 %v381
    %v2257 = vunpack.c.l.b16 %v382
    %v2258 = vunpack.c.h.b16 %v382
    %v2259 = vunpack.c.l.b16 %v383
    %v2260 = vunpack.c.h.b16 %v383
    %v2261 = vunpack.c.l.b16 %v384
    %v2262 = vunpack.c.h.b16 %v384
    %v2263 = vunpack.c.l.b16 %v385
    %v2264 = vunpack.c.h.b16 %v385
    %v2265 = vunpack.c.l.b16 %v386
    %v2266 = vunpack.c.h.b16 %v386
    %v2267 = vunpack.c.l.b16 %v387
    %v2268 = vunpack.c.h.b16 %v387
    %v2269 = vunpack.c.l.b16 %v388
    %v2270 = vunpack.c.h.b16 %v388
    %v2271 = vunpack.c.l.b16 %v389
    %v2272 = vunpack.c.h.b16 %v389
    %v2273 = vunpack.c.l.b16 %v390
    %v2274 = vunpack.c.h.b16 %v390
    %v2275 = vunpack.c.l.b16 %v391
    %v2276 = vunpack.c.h.b16 %v391
    %v2277 = vunpack.c.l.b16 %v392
    %v2278 = vunpack.c.h.b16 %v392
    %v2279 = vunpack.c.l.b16 %v393
    %v2280 = vunpack.c.h.b16 %v393
    %v2281 = vunpack.c.l.b16 %v394
    %v2282 = vunpack.c.h.b16 %v394
    %v2283 = vunpack.c.l.b16 %v395
    %v2284 = vunpack.c.h.b16 %v395
    %v2285 = vunpack.c.l.b16 %v396
    %v2286 = vunpack.c.h.b16 %v396
    %v2287 = vunpack.c.l.b16 %v397
    %v2288 = vunpack.c.h.b16 %v397
    %v2289 = vunpack.c.l.b16 %v398
    %v2290 = vunpack.c.h.b16 %v398
    %v2291 = vunpack.c.l.b16 %v399
    %v2292 = vunpack.c.h.b16 %v399
    %v2293 = vunpack.c.l.b16 %v400
    %v2294 = vunpack.c.h.b16 %v400
    %v2295 = vunpack.c.l.b16 %v401
    %v2296 = vunpack.c.h.b16 %v401
    %v2297 = vunpack.c.l.b16 %v402
    %v2298 = vunpack.c.h.b16 %v402
    %v2299 = vunpack.c.l.b16 %v403
    %v2300 = vunpack.c.h.b16 %v403
    %v2301 = vunpack.c.l.b16 %v404
    %v2302 = vunpack.c.h.b16 %v404
    %v2303 = vunpack.c.l.b16 %v405
    %v2304 = vunpack.c.h.b16 %v405
    %v2305 = vunpack.c.l.b16 %v406
    %v2306 = vunpack.c.h.b16 %v406
    %v2307 = vunpack.c.l.b16 %v407
    %v2308 = vunpack.c.h.b16 %v407
    %v2309 = vunpack.c.l.b16 %v408
    %v2310 = vunpack.c.h.b16 %v408
    %v2311 = vunpack.c.l.b16 %v409
    %v2312 = vunpack.c.h.b16 %v409
    %v2313 = vunpack.c.l.b16 %v410
    %v2314 = vunpack.c.h.b16 %v410
    %v2315 = vunpack.c.l.b16 %v411
    %v2316 = vunpack.c.h.b16 %v411
    %v2317 = vunpack.c.l.b16 %v412
    %v2318 = vunpack.c.h.b16 %v412
    %v2319 = vunpack.c.l.b16 %v413
    %v2320 = vunpack.c.h.b16 %v413
    %v2321 = vunpack.c.l.b16 %v414
    %v2322 = vunpack.c.h.b16 %v414
    %v2323 = vunpack.c.l.b16 %v415
    %v2324 = vunpack.c.h.b16 %v415
    %v2325 = vunpack.c.l.b16 %v416
    %v2326 = vunpack.c.h.b16 %v416
    %v2327 = vunpack.c.l.b16 %v417
    %v2328 = vunpack.c.h.b16 %v417
    %v2329 = vunpack.c.l.b16 %v418
    %v2330 = vunpack.c.h.b16 %v418
    %v2331 = vunpack.c.l.b16 %v419
    %v2332 = vunpack.c.h.b16 %v419
    %v2333 = vunpack.c.l.b16 %v420
    %v2334 = vunpack.c.h.b16 %v420
    %v2335 = vunpack.c.l.b16 %v421
    %v2336 = vunpack.c.h.b16 %v421
    %v2337 = vunpack.c.l.b16 %v422
    %v2338 = vunpack.c.h.b16 %v422
    %v2339 = vunpack.c.l.b16 %v423
    %v2340 = vunpack.c.h.b16 %v423
    %v2341 = vunpack.c.l.b16 %v424
    %v2342 = vunpack.c.h.b16 %v424
    %v2343 = vunpack.c.l.b16 %v425
    %v2344 = vunpack.c.h.b16 %v425
    %v2345 = vunpack.c.l.b16 %v426
    %v2346 = vunpack.c.h.b16 %v426
    %v2347 = vunpack.c.l.b16 %v427
    %v2348 = vunpack.c.h.b16 %v427
    %v2349 = vunpack.c.l.b16 %v428
    %v2350 = vunpack.c.h.b16 %v428
    %v2351 = vunpack.c.l.b16 %v429
    %v2352 = vunpack.c.h.b16 %v429
    %v2353 = vunpack.c.l.b16 %v430
    %v2354 = vunpack.c.h.b16 %v430
    %v2355 = vunpack.c.l.b16 %v431
    %v2356 = vunpack.c.h.b16 %v431
    %v2357 = vunpack.c.l.b16 %v432
    %v2358 = vunpack.c.h.b16 %v432
    %v2359 = vunpack.c.l.b16 %v433
    %v2360 = vunpack.c.h.b16 %v433
    %v2361 = vunpack.c.l.b16 %v434
    %v2362 = vunpack.c.h.b16 %v434
    %v2363 = vunpack.c.l.b16 %v435
    %v2364 = vunpack.c.h.b16 %v435
    %v2365 = vunpack.c.l.b16 %v436
    %v2366 = vunpack.c.h.b16 %v436
    %v2367 = vunpack.c.l.b16 %v437
    %v2368 = vunpack.c.h.b16 %v437
    %v2369 = vunpack.c.l.b16 %v438
    %v2370 = vunpack.c.h.b16 %v438
    %v2371 = vunpack.c.l.b16 %v439
    %v2372 = vunpack.c.h.b16 %v439
    %v2373 = vunpack.c.l.b16 %v440
    %v2374 = vunpack.c.h.b16 %v440
    %v2375 = vunpack.c.l.b16 %v441
    %v2376 = vunpack.c.h.b16 %v441
    %v2377 = vunpack.c.l.b16 %v442
    %v2378 = vunpack.c.h.b16 %v442
    %v2379 = vunpack.c.l.b16 %v443
    %v2380 = vunpack.c.h.b16 %v443
    %v2381 = vunpack.c.l.b16 %v444
    %v2382 = vunpack.c.h.b16 %v444
    %v2383 = vunpack.c.l.b16 %v445
    %v2384 = vunpack.c.h.b16 %v445
    %v2385 = vunpack.c.l.b16 %v446
    %v2386 = vunpack.c.h.b16 %v446
    %v2387 = vunpack.c.l.b16 %v447
    %v2388 = vunpack.c.h.b16 %v447
    %v2389 = vunpack.c.l.b16 %v448
    %v2390 = vunpack.c.h.b16 %v448
    %v2391 = vunpack.c.l.b16 %v449
    %v2392 = vunpack.c.h.b16 %v449
    %v2393 = vunpack.c.l.b16 %v450
    %v2394 = vunpack.c.h.b16 %v450
    %v2395 = vunpack.c.l.b16 %v451
    %v2396 = vunpack.c.h.b16 %v451
    %v2397 = vunpack.c.l.b16 %v452
    %v2398 = vunpack.c.h.b16 %v452
    %v2399 = vunpack.c.l.b16 %v453
    %v2400 = vunpack.c.h.b16 %v453
    %v2401 = vunpack.c.l.b16 %v454
    %v2402 = vunpack.c.h.b16 %v454
    %v2403 = vunpack.c.l.b16 %v455
    %v2404 = vunpack.c.h.b16 %v455
    %v2405 = vunpack.c.l.b16 %v456
    %v2406 = vunpack.c.h.b16 %v456
    %v2407 = vunpack.c.l.b16 %v457
    %v2408 = vunpack.c.h.b16 %v457
    %v2409 = vunpack.c.l.b16 %v458
    %v2410 = vunpack.c.h.b16 %v458
    %v2411 = vunpack.c.l.b16 %v459
    %v2412 = vunpack.c.h.b16 %v459
    %v2413 = vunpack.c.l.b16 %v460
    %v2414 = vunpack.c.h.b16 %v460
    %v2415 = vunpack.c.l.b16 %v461
    %v2416 = vunpack.c.h.b16 %v461
    %v2417 = vunpack.c.l.b16 %v462
    %v2418 = vunpack.c.h.b16 %v462
    %v2419 = vunpack.c.l.b16 %v463
    %v2420 = vunpack.c.h.b16 %v463
    %v2421 = vunpack.c.l.b16 %v464
    %v2422 = vunpack.c.h.b16 %v464
    %v2423 = vunpack.c.l.b16 %v465
    %v2424 = vunpack.c.h.b16 %v465
    %v2425 = vunpack.c.l.b16 %v466
    %v2426 = vunpack.c.h.b16 %v466
    %v2427 = vunpack.c.l.b16 %v467
    %v2428 = vunpack.c.h.b16 %v467
    %v2429 = vunpack.c.l.b16 %v468
    %v2430 = vunpack.c.h.b16 %v468
    %v2431 = vunpack.c.l.b16 %v469
    %v2432 = vunpack.c.h.b16 %v469
    %v2433 = vunpack.c.l.b16 %v470
    %v2434 = vunpack.c.h.b16 %v470
    %v2435 = vunpack.c.l.b16 %v471
    %v2436 = vunpack.c.h.b16 %v471
    %v2437 = vunpack.c.l.b16 %v472
    %v2438 = vunpack.c.h.b16 %v472
    %v2439 = vunpack.c.l.b16 %v473
    %v2440 = vunpack.c.h.b16 %v473
    %v2441 = vunpack.c.l.b16 %v474
    %v2442 = vunpack.c.h.b16 %v474
    %v2443 = vunpack.c.l.b16 %v475
    %v2444 = vunpack.c.h.b16 %v475
    %v2445 = vunpack.c.l.b16 %v476
    %v2446 = vunpack.c.h.b16 %v476
    %v2447 = vunpack.c.l.b16 %v477
    %v2448 = vunpack.c.h.b16 %v477
    %v2449 = vunpack.c.l.b16 %v478
    %v2450 = vunpack.c.h.b16 %v478
    %v2451 = vunpack.c.l.b16 %v479
    %v2452 = vunpack.c.h.b16 %v479
    %v2453 = vunpack.c.l.b16 %v480
    %v2454 = vunpack.c.h.b16 %v480
    %v2455 = vunpack.c.l.b16 %v481
    %v2456 = vunpack.c.h.b16 %v481
    %v2457 = vunpack.c.l.b16 %v482
    %v2458 = vunpack.c.h.b16 %v482
    %v2459 = vunpack.c.l.b16 %v483
    %v2460 = vunpack.c.h.b16 %v483
    %v2461 = vunpack.c.l.b16 %v484
    %v2462 = vunpack.c.h.b16 %v484
    %v2463 = vunpack.c.l.b16 %v485
    %v2464 = vunpack.c.h.b16 %v485
    %v2465 = vunpack.c.l.b16 %v486
    %v2466 = vunpack.c.h.b16 %v486
    %v2467 = vunpack.c.l.b16 %v487
    %v2468 = vunpack.c.h.b16 %v487
    %v2469 = vunpack.c.l.b16 %v488
    %v2470 = vunpack.c.h.b16 %v488
    %v2471 = vunpack.c.l.b16 %v489
    %v2472 = vunpack.c.h.b16 %v489
    %v2473 = vunpack.c.l.b16 %v490
    %v2474 = vunpack.c.h.b16 %v490
    %v2475 = vunpack.c.l.b16 %v491
    %v2476 = vunpack.c.h.b16 %v491
    %v2477 = vunpack.c.l.b16 %v492
    %v2478 = vunpack.c.h.b16 %v492
    %v2479 = vunpack.c.l.b16 %v493
    %v2480 = vunpack.c.h.b16 %v493
    %v2481 = vunpack.c.l.b16 %v494
    %v2482 = vunpack.c.h.b16 %v494
    %v2483 = vunpack.c.l.b16 %v495
    %v2484 = vunpack.c.h.b16 %v495
    %v2485 = vunpack.c.l.b16 %v496
    %v2486 = vunpack.c.h.b16 %v496
    %v2487 = vunpack.c.l.b16 %v497
    %v2488 = vunpack.c.h.b16 %v497
    %v2489 = vunpack.c.l.b16 %v498
    %v2490 = vunpack.c.h.b16 %v498
    %v2491 = vunpack.c.l.b16 %v499
    %v2492 = vunpack.c.h.b16 %v499
    %v2493 = vunpack.c.l.b16 %v500
    %v2494 = vunpack.c.h.b16 %v500
    %v2495 = vunpack.c.l.b16 %v501
    %v2496 = vunpack.c.h.b16 %v501
    %v2497 = vunpack.c.l.b16 %v502
    %v2498 = vunpack.c.h.b16 %v502
    %v2499 = vunpack.c.l.b16 %v503
    %v2500 = vunpack.c.h.b16 %v503
    %v2501 = vunpack.c.l.b16 %v504
    %v2502 = vunpack.c.h.b16 %v504
    %v2503 = vunpack.c.l.b16 %v505
    %v2504 = vunpack.c.h.b16 %v505
    %v2505 = vunpack.c.l.b16 %v506
    %v2506 = vunpack.c.h.b16 %v506
    %v2507 = vunpack.c.l.b16 %v507
    %v2508 = vunpack.c.h.b16 %v507
    %v2509 = vunpack.c.l.b16 %v508
    %v2510 = vunpack.c.h.b16 %v508
    %v2511 = vunpack.c.l.b16 %v509
    %v2512 = vunpack.c.h.b16 %v509
    %v2513 = vunpack.c.l.b16 %v510
    %v2514 = vunpack.c.h.b16 %v510
    %v2515 = vunpack.c.l.b16 %v511
    %v2516 = vunpack.c.h.b16 %v511
    %v2517 = vunpack.c.l.b16 %v512
    %v2518 = vunpack.c.h.b16 %v512
    %v2519 = vunpack.c.l.b16 %v513
    %v2520 = vunpack.c.h.b16 %v513
    %v2521 = vunpack.c.l.b16 %v514
    %v2522 = vunpack.c.h.b16 %v514
    %v2523 = vunpack.c.l.b16 %v515
    %v2524 = vunpack.c.h.b16 %v515
    %v2525 = vunpack.c.l.b16 %v516
    %v2526 = vunpack.c.h.b16 %v516
    %v2527 = vunpack.c.l.b16 %v517
    %v2528 = vunpack.c.h.b16 %v517
    %v2529 = vunpack.c.l.b16 %v518
    %v2530 = vunpack.c.h.b16 %v518
    %v2531 = vunpack.c.l.b16 %v519
    %v2532 = vunpack.c.h.b16 %v519
    %v2533 = vunpack.c.l.b16 %v520
    %v2534 = vunpack.c.h.b16 %v520
    %v2535 = vunpack.c.l.b16 %v521
    %v2536 = vunpack.c.h.b16 %v521
    %v2537 = vunpack.c.l.b16 %v522
    %v2538 = vunpack.c.h.b16 %v522
    %v2539 = vunpack.c.l.b16 %v523
    %v2540 = vunpack.c.h.b16 %v523
    %v2541 = vunpack.c.l.b16 %v524
    %v2542 = vunpack.c.h.b16 %v524
    %v2543 = vunpack.c.l.b16 %v525
    %v2544 = vunpack.c.h.b16 %v525
    %v2545 = vunpack.c.l.b16 %v526
    %v2546 = vunpack.c.h.b16 %v526
    %v2547 = vunpack.c.l.b16 %v527
    %v2548 = vunpack.c.h.b16 %v527
    %v2549 = vunpack.c.l.b16 %v528
    %v2550 = vunpack.c.h.b16 %v528
    %v2551 = vunpack.c.l.b16 %v529
    %v2552 = vunpack.c.h.b16 %v529
    %v2553 = vunpack.c.l.b16 %v530
    %v2554 = vunpack.c.h.b16 %v530
    %v2555 = vunpack.c.l.b16 %v531
    %v2556 = vunpack.c.h.b16 %v531
    %v2557 = vunpack.c.l.b16 %v532
    %v2558 = vunpack.c.h.b16 %v532
    %v2559 = vunpack.c.l.b16 %v533
    %v2560 = vunpack.c.h.b16 %v533
    %v2561 = vunpack.c.l.b16 %v534
    %v2562 = vunpack.c.h.b16 %v534
    %v2563 = vunpack.c.l.b16 %v535
    %v2564 = vunpack.c.h.b16 %v535
    %v2565 = vunpack.c.l.b16 %v536
    %v2566 = vunpack.c.h.b16 %v536
    %v2567 = vunpack.c.l.b16 %v537
    %v2568 = vunpack.c.h.b16 %v537
    %v2569 = vunpack.c.l.b16 %v538
    %v2570 = vunpack.c.h.b16 %v538
    %v2571 = vunpack.c.l.b16 %v539
    %v2572 = vunpack.c.h.b16 %v539
    %v2573 = vunpack.c.l.b16 %v540
    %v2574 = vunpack.c.h.b16 %v540
    %v2575 = vunpack.c.l.b16 %v541
    %v2576 = vunpack.c.h.b16 %v541
    %v2577 = vunpack.c.l.b16 %v542
    %v2578 = vunpack.c.h.b16 %v542
    %v2579 = vunpack.c.l.b16 %v543
    %v2580 = vunpack.c.h.b16 %v543
    %v2581 = vunpack.c.l.b16 %v544
    %v2582 = vunpack.c.h.b16 %v544
    %v2583 = vunpack.c.l.b16 %v545
    %v2584 = vunpack.c.h.b16 %v545
    %v2585 = vunpack.c.l.b16 %v546
    %v2586 = vunpack.c.h.b16 %v546
    %v2587 = vunpack.c.l.b16 %v547
    %v2588 = vunpack.c.h.b16 %v547
    %v2589 = vunpack.c.l.b16 %v548
    %v2590 = vunpack.c.h.b16 %v548
    %v2591 = vunpack.c.l.b16 %v549
    %v2592 = vunpack.c.h.b16 %v549
    %v2593 = vunpack.c.l.b16 %v550
    %v2594 = vunpack.c.h.b16 %v550
    %v2595 = vunpack.c.l.b16 %v551
    %v2596 = vunpack.c.h.b16 %v551
    %v2597 = vunpack.c.l.b16 %v552
    %v2598 = vunpack.c.h.b16 %v552
    %v2599 = vunpack.c.l.b16 %v553
    %v2600 = vunpack.c.h.b16 %v553
    %v2601 = vunpack.c.l.b16 %v554
    %v2602 = vunpack.c.h.b16 %v554
    %v2603 = vunpack.c.l.b16 %v555
    %v2604 = vunpack.c.h.b16 %v555
    %v2605 = vunpack.c.l.b16 %v556
    %v2606 = vunpack.c.h.b16 %v556
    %v2607 = vunpack.c.l.b16 %v557
    %v2608 = vunpack.c.h.b16 %v557
    %v2609 = vunpack.c.l.b16 %v558
    %v2610 = vunpack.c.h.b16 %v558
    %v2611 = vunpack.c.l.b16 %v559
    %v2612 = vunpack.c.h.b16 %v559
    %v2613 = vunpack.c.l.b16 %v560
    %v2614 = vunpack.c.h.b16 %v560
    %v2615 = vunpack.c.l.b16 %v561
    %v2616 = vunpack.c.h.b16 %v561
    %v2617 = vunpack.c.l.b16 %v562
    %v2618 = vunpack.c.h.b16 %v562
    %v2619 = vunpack.c.l.b16 %v563
    %v2620 = vunpack.c.h.b16 %v563
    %v2621 = vunpack.c.l.b16 %v564
    %v2622 = vunpack.c.h.b16 %v564
    %v2623 = vunpack.c.l.b16 %v565
    %v2624 = vunpack.c.h.b16 %v565
    %v2625 = vunpack.c.l.b16 %v566
    %v2626 = vunpack.c.h.b16 %v566
    %v2627 = vunpack.c.l.b16 %v567
    %v2628 = vunpack.c.h.b16 %v567
    %v2629 = vunpack.c.l.b16 %v568
    %v2630 = vunpack.c.h.b16 %v568
    %v2631 = vunpack.c.l.b16 %v569
    %v2632 = vunpack.c.h.b16 %v569
    %v2633 = vunpack.c.l.b16 %v570
    %v2634 = vunpack.c.h.b16 %v570
    %v2635 = vunpack.c.l.b16 %v571
    %v2636 = vunpack.c.h.b16 %v571
    %v2637 = vunpack.c.l.b16 %v572
    %v2638 = vunpack.c.h.b16 %v572
    %v2639 = vunpack.c.l.b16 %v573
    %v2640 = vunpack.c.h.b16 %v573
    %v2641 = vunpack.c.l.b16 %v574
    %v2642 = vunpack.c.h.b16 %v574
    %v2643 = vunpack.c.l.b16 %v575
    %v2644 = vunpack.c.h.b16 %v575
    %v2645 = vunpack.c.l.b16 %v576
    %v2646 = vunpack.c.h.b16 %v576
    %v2647 = vunpack.c.l.b16 %v577
    %v2648 = vunpack.c.h.b16 %v577
    %v2649 = vunpack.c.l.b16 %v578
    %v2650 = vunpack.c.h.b16 %v578
    %v2651 = vunpack.c.l.b16 %v579
    %v2652 = vunpack.c.h.b16 %v579
    %v2653 = vunpack.c.l.b16 %v580
    %v2654 = vunpack.c.h.b16 %v580
    %v2655 = vunpack.c.l.b16 %v581
    %v2656 = vunpack.c.h.b16 %v581
    %v2657 = vunpack.c.l.b16 %v582
    %v2658 = vunpack.c.h.b16 %v582
    %v2659 = vunpack.c.l.b16 %v583
    %v2660 = vunpack.c.h.b16 %v583
    %v2661 = vunpack.c.l.b16 %v584
    %v2662 = vunpack.c.h.b16 %v584
    %v2663 = vunpack.c.l.b16 %v585
    %v2664 = vunpack.c.h.b16 %v585
    %v2665 = vunpack.c.l.b16 %v586
    %v2666 = vunpack.c.h.b16 %v586
    %v2667 = vunpack.c.l.b16 %v587
    %v2668 = vunpack.c.h.b16 %v587
    %v2669 = vunpack.c.l.b16 %v588
    %v2670 = vunpack.c.h.b16 %v588
    %v2671 = vunpack.c.l.b16 %v589
    %v2672 = vunpack.c.h.b16 %v589
    %v2673 = vunpack.c.l.b16 %v590
    %v2674 = vunpack.c.h.b16 %v590
    %v2675 = vunpack.c.l.b16 %v591
    %v2676 = vunpack.c.h.b16 %v591
    %v2677 = vunpack.c.l.b16 %v592
    %v2678 = vunpack.c.h.b16 %v592
    %v2679 = vunpack.c.l.b16 %v593
    %v2680 = vunpack.c.h.b16 %v593
    %v2681 = vunpack.c.l.b16 %v594
    %v2682 = vunpack.c.h.b16 %v594
    %v2683 = vunpack.c.l.b16 %v595
    %v2684 = vunpack.c.h.b16 %v595
    %v2685 = vunpack.c.l.b16 %v596
    %v2686 = vunpack.c.h.b16 %v596
    %v2687 = vunpack.c.l.b16 %v597
    %v2688 = vunpack.c.h.b16 %v597
    %v2689 = vunpack.c.l.b16 %v598
    %v2690 = vunpack.c.h.b16 %v598
    %v2691 = vunpack.c.l.b16 %v599
    %v2692 = vunpack.c.h.b16 %v599
    %v2693 = vunpack.c.l.b16 %v600
    %v2694 = vunpack.c.h.b16 %v600
    %v2695 = vunpack.c.l.b16 %v601
    %v2696 = vunpack.c.h.b16 %v601
    %v2697 = vunpack.c.l.b16 %v602
    %v2698 = vunpack.c.h.b16 %v602
    %v2699 = vunpack.c.l.b16 %v603
    %v2700 = vunpack.c.h.b16 %v603
    %v2701 = vunpack.c.l.b16 %v604
    %v2702 = vunpack.c.h.b16 %v604
    %v2703 = vunpack.c.l.b16 %v605
    %v2704 = vunpack.c.h.b16 %v605
    %v2705 = vunpack.c.l.b16 %v606
    %v2706 = vunpack.c.h.b16 %v606
    %v2707 = vunpack.c.l.b16 %v607
    %v2708 = vunpack.c.h.b16 %v607
    %v2709 = vunpack.c.l.b16 %v608
    %v2710 = vunpack.c.h.b16 %v608
    %v2711 = vunpack.c.l.b16 %v609
    %v2712 = vunpack.c.h.b16 %v609
    %v2713 = vunpack.c.l.b16 %v610
    %v2714 = vunpack.c.h.b16 %v610
    %v2715 = vunpack.c.l.b16 %v611
    %v2716 = vunpack.c.h.b16 %v611
    %v2717 = vunpack.c.l.b16 %v612
    %v2718 = vunpack.c.h.b16 %v612
    %v2719 = vunpack.c.l.b16 %v613
    %v2720 = vunpack.c.h.b16 %v613
    %v2721 = vunpack.c.l.b16 %v614
    %v2722 = vunpack.c.h.b16 %v614
    %v2723 = vunpack.c.l.b16 %v615
    %v2724 = vunpack.c.h.b16 %v615
    %v2725 = vunpack.c.l.b16 %v616
    %v2726 = vunpack.c.h.b16 %v616
    %v2727 = vunpack.c.l.b16 %v617
    %v2728 = vunpack.c.h.b16 %v617
    %v2729 = vunpack.c.l.b16 %v618
    %v2730 = vunpack.c.h.b16 %v618
    %v2731 = vunpack.c.l.b16 %v619
    %v2732 = vunpack.c.h.b16 %v619
    %v2733 = vunpack.c.l.b16 %v620
    %v2734 = vunpack.c.h.b16 %v620
    %v2735 = vunpack.c.l.b16 %v621
    %v2736 = vunpack.c.h.b16 %v621
    %v2737 = vunpack.c.l.b16 %v622
    %v2738 = vunpack.c.h.b16 %v622
    %v2739 = vunpack.c.l.b16 %v623
    %v2740 = vunpack.c.h.b16 %v623
    %v2741 = vunpack.c.l.b16 %v624
    %v2742 = vunpack.c.h.b16 %v624
    %v2743 = vunpack.c.l.b16 %v625
    %v2744 = vunpack.c.h.b16 %v625
    %v2745 = vunpack.c.l.b16 %v626
    %v2746 = vunpack.c.h.b16 %v626
    %v2747 = vunpack.c.l.b16 %v627
    %v2748 = vunpack.c.h.b16 %v627
    %v2749 = vunpack.c.l.b16 %v628
    %v2750 = vunpack.c.h.b16 %v628
    %v2751 = vunpack.c.l.b16 %v629
    %v2752 = vunpack.c.h.b16 %v629
    %v2753 = vunpack.c.l.b16 %v630
    %v2754 = vunpack.c.h.b16 %v630
    %v2755 = vunpack.c.l.b16 %v631
    %v2756 = vunpack.c.h.b16 %v631
    %v2757 = vunpack.c.l.b16 %v632
    %v2758 = vunpack.c.h.b16 %v632
    %v2759 = vunpack.c.l.b16 %v633
    %v2760 = vunpack.c.h.b16 %v633
    %v2761 = vunpack.c.l.b16 %v634
    %v2762 = vunpack.c.h.b16 %v634
    %v2763 = vunpack.c.l.b16 %v635
    %v2764 = vunpack.c.h.b16 %v635
    %v2765 = vunpack.c.l.b16 %v636
    %v2766 = vunpack.c.h.b16 %v636
    %v2767 = vunpack.c.l.b16 %v637
    %v2768 = vunpack.c.h.b16 %v637
    %v2769 = vunpack.c.l.b16 %v638
    %v2770 = vunpack.c.h.b16 %v638
    %v2771 = vunpack.c.l.b16 %v639
    %v2772 = vunpack.c.h.b16 %v639
    %v2773 = vunpack.c.l.b16 %v640
    %v2774 = vunpack.c.h.b16 %v640
    %v2775 = vunpack.c.l.b16 %v641
    %v2776 = vunpack.c.h.b16 %v641
    %v2777 = vunpack.c.l.b16 %v642
    %v2778 = vunpack.c.h.b16 %v642
    %v2779 = vunpack.c.l.b16 %v643
    %v2780 = vunpack.c.h.b16 %v643
    %v2781 = vunpack.c.l.b16 %v644
    %v2782 = vunpack.c.h.b16 %v644
    %v2783 = vunpack.c.l.b16 %v645
    %v2784 = vunpack.c.h.b16 %v645
    %v2785 = vunpack.c.l.b16 %v646
    %v2786 = vunpack.c.h.b16 %v646
    %v2787 = vunpack.c.l.b16 %v647
    %v2788 = vunpack.c.h.b16 %v647
    %v2789 = vunpack.c.l.b16 %v648
    %v2790 = vunpack.c.h.b16 %v648
    %v2791 = vunpack.c.l.b16 %v649
    %v2792 = vunpack.c.h.b16 %v649
    %v2793 = vunpack.c.l.b16 %v650
    %v2794 = vunpack.c.h.b16 %v650
    %v2795 = vunpack.c.l.b16 %v651
    %v2796 = vunpack.c.h.b16 %v651
    %v2797 = vunpack.c.l.b16 %v652
    %v2798 = vunpack.c.h.b16 %v652
    %v2799 = vunpack.c.l.b16 %v653
    %v2800 = vunpack.c.h.b16 %v653
    %v2801 = vunpack.c.l.b16 %v654
    %v2802 = vunpack.c.h.b16 %v654
    %v2803 = vunpack.c.l.b16 %v655
    %v2804 = vunpack.c.h.b16 %v655
    %v2805 = vunpack.c.l.b16 %v656
    %v2806 = vunpack.c.h.b16 %v656
    %v2807 = vunpack.c.l.b16 %v657
    %v2808 = vunpack.c.h.b16 %v657
    %v2809 = vunpack.c.l.b16 %v658
    %v2810 = vunpack.c.h.b16 %v658
    %v2811 = vunpack.c.l.b16 %v659
    %v2812 = vunpack.c.h.b16 %v659
    %v2813 = vunpack.c.l.b16 %v660
    %v2814 = vunpack.c.h.b16 %v660
    %v2815 = vunpack.c.l.b16 %v661
    %v2816 = vunpack.c.h.b16 %v661
    %v2817 = vunpack.c.l.b16 %v662
    %v2818 = vunpack.c.h.b16 %v662
    %v2819 = vunpack.c.l.b16 %v663
    %v2820 = vunpack.c.h.b16 %v663
    %v2821 = vunpack.c.l.b16 %v664
    %v2822 = vunpack.c.h.b16 %v664
    %v2823 = vunpack.c.l.b16 %v665
    %v2824 = vunpack.c.h.b16 %v665
    %v2825 = vunpack.c.l.b16 %v666
    %v2826 = vunpack.c.h.b16 %v666
    %v2827 = vunpack.c.l.b16 %v667
    %v2828 = vunpack.c.h.b16 %v667
    %v2829 = vunpack.c.l.b16 %v668
    %v2830 = vunpack.c.h.b16 %v668
    %v2831 = vunpack.c.l.b16 %v669
    %v2832 = vunpack.c.h.b16 %v669
    %v2833 = vunpack.c.l.b16 %v670
    %v2834 = vunpack.c.h.b16 %v670
    %v2835 = vunpack.c.l.b16 %v671
    %v2836 = vunpack.c.h.b16 %v671
    %v2837 = vunpack.c.l.b16 %v672
    %v2838 = vunpack.c.h.b16 %v672
    %v2839 = vunpack.c.l.b16 %v673
    %v2840 = vunpack.c.h.b16 %v673
    %v2841 = vunpack.c.l.b16 %v674
    %v2842 = vunpack.c.h.b16 %v674
    %v2843 = vunpack.c.l.b16 %v675
    %v2844 = vunpack.c.h.b16 %v675
    %v2845 = vunpack.c.l.b16 %v676
    %v2846 = vunpack.c.h.b16 %v676
    %v2847 = vunpack.c.l.b16 %v677
    %v2848 = vunpack.c.h.b16 %v677
    %v2849 = vunpack.c.l.b16 %v678
    %v2850 = vunpack.c.h.b16 %v678
    %v2851 = vunpack.c.l.b16 %v679
    %v2852 = vunpack.c.h.b16 %v679
    %v2853 = vunpack.c.l.b16 %v680
    %v2854 = vunpack.c.h.b16 %v680
    %v2855 = vunpack.c.l.b16 %v681
    %v2856 = vunpack.c.h.b16 %v681
    %v2857 = vunpack.c.l.b16 %v682
    %v2858 = vunpack.c.h.b16 %v682
    %v2859 = vunpack.c.l.b16 %v683
    %v2860 = vunpack.c.h.b16 %v683
    %v2861 = vunpack.c.l.b16 %v684
    %v2862 = vunpack.c.h.b16 %v684
    %v2863 = vunpack.c.l.b16 %v685
    %v2864 = vunpack.c.h.b16 %v685
    %v2865 = vunpack.c.l.b16 %v686
    %v2866 = vunpack.c.h.b16 %v686
    %v2867 = vunpack.c.l.b16 %v687
    %v2868 = vunpack.c.h.b16 %v687
    %v2869 = vunpack.c.l.b16 %v688
    %v2870 = vunpack.c.h.b16 %v688
    %v2871 = vunpack.c.l.b16 %v689
    %v2872 = vunpack.c.h.b16 %v689
    %v2873 = vunpack.c.l.b16 %v690
    %v2874 = vunpack.c.h.b16 %v690
    %v2875 = vunpack.c.l.b16 %v691
    %v2876 = vunpack.c.h.b16 %v691
    %v2877 = vunpack.c.l.b16 %v692
    %v2878 = vunpack.c.h.b16 %v692
    %v2879 = vunpack.c.l.b16 %v693
    %v2880 = vunpack.c.h.b16 %v693
    %v2881 = vunpack.c.l.b16 %v694
    %v2882 = vunpack.c.h.b16 %v694
    %v2883 = vunpack.c.l.b16 %v695
    %v2884 = vunpack.c.h.b16 %v695
    %v2885 = vunpack.c.l.b16 %v696
    %v2886 = vunpack.c.h.b16 %v696
    %v2887 = vunpack.c.l.b16 %v697
    %v2888 = vunpack.c.h.b16 %v697
    %v2889 = vunpack.c.l.b16 %v698
    %v2890 = vunpack.c.h.b16 %v698
    %v2891 = vunpack.c.l.b16 %v699
    %v2892 = vunpack.c.h.b16 %v699
    %v2893 = vunpack.c.l.b16 %v700
    %v2894 = vunpack.c.h.b16 %v700
    %v2895 = vunpack.c.l.b16 %v701
    %v2896 = vunpack.c.h.b16 %v701
    %v2897 = vunpack.c.l.b16 %v702
    %v2898 = vunpack.c.h.b16 %v702
    %v2899 = vunpack.c.l.b16 %v703
    %v2900 = vunpack.c.h.b16 %v703
    %v2901 = vunpack.c.l.b16 %v704
    %v2902 = vunpack.c.h.b16 %v704
    %v2903 = vunpack.c.l.b16 %v705
    %v2904 = vunpack.c.h.b16 %v705
    %v2905 = vunpack.c.l.b16 %v706
    %v2906 = vunpack.c.h.b16 %v706
    %v2907 = vunpack.c.l.b16 %v707
    %v2908 = vunpack.c.h.b16 %v707
    %v2909 = vunpack.c.l.b16 %v708
    %v2910 = vunpack.c.h.b16 %v708
    %v2911 = vunpack.c.l.b16 %v709
    %v2912 = vunpack.c.h.b16 %v709
    %v2913 = vunpack.c.l.b16 %v710
    %v2914 = vunpack.c.h.b16 %v710
    %v2915 = vunpack.c.l.b16 %v711
    %v2916 = vunpack.c.h.b16 %v711
    %v2917 = vunpack.c.l.b16 %v712
    %v2918 = vunpack.c.h.b16 %v712
    %v2919 = vunpack.c.l.b16 %v713
    %v2920 = vunpack.c.h.b16 %v713
    %v2921 = vunpack.c.l.b16 %v714
    %v2922 = vunpack.c.h.b16 %v714
    %v2923 = vunpack.c.l.b16 %v715
    %v2924 = vunpack.c.h.b16 %v715
    %v2925 = vunpack.c.l.b16 %v716
    %v2926 = vunpack.c.h.b16 %v716
    %v2927 = vunpack.c.l.b16 %v717
    %v2928 = vunpack.c.h.b16 %v717
    %v2929 = vunpack.c.l.b16 %v718
    %v2930 = vunpack.c.h.b16 %v718
    %v2931 = vunpack.c.l.b16 %v719
    %v2932 = vunpack.c.h.b16 %v719
    %v2933 = vunpack.c.l.b16 %v720
    %v2934 = vunpack.c.h.b16 %v720
    %v2935 = vunpack.c.l.b16 %v721
    %v2936 = vunpack.c.h.b16 %v721
    %v2937 = vunpack.c.l.b16 %v722
    %v2938 = vunpack.c.h.b16 %v722
    %v2939 = vunpack.c.l.b16 %v723
    %v2940 = vunpack.c.h.b16 %v723
    %v2941 = vunpack.c.l.b16 %v724
    %v2942 = vunpack.c.h.b16 %v724
    %v2943 = vunpack.c.l.b16 %v725
    %v2944 = vunpack.c.h.b16 %v725
    %v2945 = vunpack.c.l.b16 %v726
    %v2946 = vunpack.c.h.b16 %v726
    %v2947 = vunpack.c.l.b16 %v727
    %v2948 = vunpack.c.h.b16 %v727
    %v2949 = vunpack.c.l.b16 %v728
    %v2950 = vunpack.c.h.b16 %v728
    %v2951 = vunpack.c.l.b16 %v729
    %v2952 = vunpack.c.h.b16 %v729
    %v2953 = vunpack.c.l.b16 %v730
    %v2954 = vunpack.c.h.b16 %v730
    %v2955 = vunpack.c.l.b16 %v731
    %v2956 = vunpack.c.h.b16 %v731
    %v2957 = vunpack.c.l.b16 %v732
    %v2958 = vunpack.c.h.b16 %v732
    %v2959 = vunpack.c.l.b16 %v733
    %v2960 = vunpack.c.h.b16 %v733
    %v2961 = vunpack.c.l.b16 %v734
    %v2962 = vunpack.c.h.b16 %v734
    %v2963 = vunpack.c.l.b16 %v735
    %v2964 = vunpack.c.h.b16 %v735
    %v2965 = vunpack.c.l.b16 %v736
    %v2966 = vunpack.c.h.b16 %v736
    %v2967 = vunpack.c.l.b16 %v737
    %v2968 = vunpack.c.h.b16 %v737
    %v2969 = vunpack.c.l.b16 %v738
    %v2970 = vunpack.c.h.b16 %v738
    %v2971 = vunpack.c.l.b16 %v739
    %v2972 = vunpack.c.h.b16 %v739
    %v2973 = vunpack.c.l.b16 %v740
    %v2974 = vunpack.c.h.b16 %v740
    %v2975 = vunpack.c.l.b16 %v741
    %v2976 = vunpack.c.h.b16 %v741
    %v2977 = vunpack.c.l.b16 %v742
    %v2978 = vunpack.c.h.b16 %v742
    %v2979 = vunpack.c.l.b16 %v743
    %v2980 = vunpack.c.h.b16 %v743
    %v2981 = vunpack.c.l.b16 %v744
    %v2982 = vunpack.c.h.b16 %v744
    %v2983 = vunpack.c.l.b16 %v745
    %v2984 = vunpack.c.h.b16 %v745
    %v2985 = vunpack.c.l.b16 %v746
    %v2986 = vunpack.c.h.b16 %v746
    %v2987 = vunpack.c.l.b16 %v747
    %v2988 = vunpack.c.h.b16 %v747
    %v2989 = vunpack.c.l.b16 %v748
    %v2990 = vunpack.c.h.b16 %v748
    %v2991 = vunpack.c.l.b16 %v749
    %v2992 = vunpack.c.h.b16 %v749
    %v2993 = vunpack.c.l.b16 %v750
    %v2994 = vunpack.c.h.b16 %v750
    %v2995 = vunpack.c.l.b16 %v751
    %v2996 = vunpack.c.h.b16 %v751
    %v2997 = vunpack.c.l.b16 %v752
    %v2998 = vunpack.c.h.b16 %v752
    %v2999 = vunpack.c.l.b16 %v753
    %v3000 = vunpack.c.h.b16 %v753
    %v3001 = vunpack.c.l.b16 %v754
    %v3002 = vunpack.c.h.b16 %v754
    %v3003 = vunpack.c.l.b16 %v755
    %v3004 = vunpack.c.h.b16 %v755
    %v3005 = vunpack.c.l.b16 %v756
    %v3006 = vunpack.c.h.b16 %v756
    %v3007 = vunpack.c.l.b16 %v757
    %v3008 = vunpack.c.h.b16 %v757
    %v3009 = vunpack.c.l.b16 %v758
    %v3010 = vunpack.c.h.b16 %v758
    %v3011 = vunpack.c.l.b16 %v759
    %v3012 = vunpack.c.h.b16 %v759
    %v3013 = vunpack.c.l.b16 %v760
    %v3014 = vunpack.c.h.b16 %v760
    %v3015 = vunpack.c.l.b16 %v761
    %v3016 = vunpack.c.h.b16 %v761
    %v3017 = vunpack.c.l.b16 %v762
    %v3018 = vunpack.c.h.b16 %v762
    %v3019 = vunpack.c.l.b16 %v763
    %v3020 = vunpack.c.h.b16 %v763
    %v3021 = vunpack.c.l.b16 %v764
    %v3022 = vunpack.c.h.b16 %v764
    %v3023 = vunpack.c.l.b16 %v765
    %v3024 = vunpack.c.h.b16 %v765
    %v3025 = vunpack.c.l.b16 %v766
    %v3026 = vunpack.c.h.b16 %v766
    %v3027 = vunpack.c.l.b16 %v767
    %v3028 = vunpack.c.h.b16 %v767
    %v3029 = vunpack.c.l.b16 %v768
    %v3030 = vunpack.c.h.b16 %v768
    %v3031 = vunpack.c.l.b16 %v769
    %v3032 = vunpack.c.h.b16 %v769
    %v3033 = vunpack.c.l.b16 %v770
    %v3034 = vunpack.c.h.b16 %v770
    %v3035 = vunpack.c.l.b16 %v771
    %v3036 = vunpack.c.h.b16 %v771
    %v3037 = vunpack.c.l.b16 %v772
    %v3038 = vunpack.c.h.b16 %v772
    %v3039 = vunpack.c.l.b16 %v773
    %v3040 = vunpack.c.h.b16 %v773
    %v3041 = vunpack.c.l.b16 %v774
    %v3042 = vunpack.c.h.b16 %v774
    %v3043 = vunpack.c.l.b16 %v775
    %v3044 = vunpack.c.h.b16 %v775
    %v3045 = vunpack.c.l.b16 %v776
    %v3046 = vunpack.c.h.b16 %v776
    %v3047 = vunpack.c.l.b16 %v777
    %v3048 = vunpack.c.h.b16 %v777
    %v3049 = vunpack.c.l.b16 %v778
    %v3050 = vunpack.c.h.b16 %v778
    %v3051 = vunpack.c.l.b16 %v779
    %v3052 = vunpack.c.h.b16 %v779
    %v3053 = vunpack.c.l.b16 %v780
    %v3054 = vunpack.c.h.b16 %v780
    %v3055 = vunpack.c.l.b16 %v781
    %v3056 = vunpack.c.h.b16 %v781
    %v3057 = vunpack.c.l.b16 %v782
    %v3058 = vunpack.c.h.b16 %v782
    %v3059 = vunpack.c.l.b16 %v783
    %v3060 = vunpack.c.h.b16 %v783
    %v3061 = vunpack.c.l.b16 %v784
    %v3062 = vunpack.c.h.b16 %v784
    %v3063 = vunpack.c.l.b16 %v785
    %v3064 = vunpack.c.h.b16 %v785
    %v3065 = vunpack.c.l.b16 %v786
    %v3066 = vunpack.c.h.b16 %v786
    %v3067 = vunpack.c.l.b16 %v787
    %v3068 = vunpack.c.h.b16 %v787
    %v3069 = vunpack.c.l.b16 %v788
    %v3070 = vunpack.c.h.b16 %v788
    %v3071 = vunpack.c.l.b16 %v789
    %v3072 = vunpack.c.h.b16 %v789
    %v3073 = vunpack.c.l.b16 %v790
    %v3074 = vunpack.c.h.b16 %v790
    %v3075 = vunpack.c.l.b16 %v791
    %v3076 = vunpack.c.h.b16 %v791
    %v3077 = vunpack.c.l.b16 %v792
    %v3078 = vunpack.c.h.b16 %v792
    %v3079 = vunpack.c.l.b16 %v793
    %v3080 = vunpack.c.h.b16 %v793
    %v3081 = vunpack.c.l.b16 %v794
    %v3082 = vunpack.c.h.b16 %v794
    %v3083 = vunpack.c.l.b16 %v795
    %v3084 = vunpack.c.h.b16 %v795
    %v3085 = vunpack.c.l.b16 %v796
    %v3086 = vunpack.c.h.b16 %v796
    %v3087 = vunpack.c.l.b16 %v797
    %v3088 = vunpack.c.h.b16 %v797
    %v3089 = vunpack.c.l.b16 %v798
    %v3090 = vunpack.c.h.b16 %v798
    %v3091 = vunpack.c.l.b16 %v799
    %v3092 = vunpack.c.h.b16 %v799
    %v3093 = vunpack.c.l.b16 %v800
    %v3094 = vunpack.c.h.b16 %v800
    %v3095 = vunpack.c.l.b16 %v801
    %v3096 = vunpack.c.h.b16 %v801
    %v3097 = vunpack.c.l.b16 %v802
    %v3098 = vunpack.c.h.b16 %v802
    %v3099 = vunpack.c.l.b16 %v803
    %v3100 = vunpack.c.h.b16 %v803
    %v3101 = vunpack.c.l.b16 %v804
    %v3102 = vunpack.c.h.b16 %v804
    %v3103 = vunpack.c.l.b16 %v805
    %v3104 = vunpack.c.h.b16 %v805
    %v3105 = vunpack.c.l.b16 %v806
    %v3106 = vunpack.c.h.b16 %v806
    %v3107 = vunpack.c.l.b16 %v807
    %v3108 = vunpack.c.h.b16 %v807
    %v3109 = vunpack.c.l.b16 %v808
    %v3110 = vunpack.c.h.b16 %v808
    %v3111 = vunpack.c.l.b16 %v809
    %v3112 = vunpack.c.h.b16 %v809
    %v3113 = vunpack.c.l.b16 %v810
    %v3114 = vunpack.c.h.b16 %v810
    %v3115 = vunpack.c.l.b16 %v811
    %v3116 = vunpack.c.h.b16 %v811
    %v3117 = vunpack.c.l.b16 %v812
    %v3118 = vunpack.c.h.b16 %v812
    %v3119 = vunpack.c.l.b16 %v813
    %v3120 = vunpack.c.h.b16 %v813
    %v3121 = vunpack.c.l.b16 %v814
    %v3122 = vunpack.c.h.b16 %v814
    %v3123 = vunpack.c.l.b16 %v815
    %v3124 = vunpack.c.h.b16 %v815
    %v3125 = vunpack.c.l.b16 %v816
    %v3126 = vunpack.c.h.b16 %v816
    %v3127 = vunpack.c.l.b16 %v817
    %v3128 = vunpack.c.h.b16 %v817
    %v3129 = vunpack.c.l.b16 %v818
    %v3130 = vunpack.c.h.b16 %v818
    %v3131 = vunpack.c.l.b16 %v819
    %v3132 = vunpack.c.h.b16 %v819
    %v3133 = vunpack.c.l.b16 %v820
    %v3134 = vunpack.c.h.b16 %v820
    %v3135 = vunpack.c.l.b16 %v821
    %v3136 = vunpack.c.h.b16 %v821
    %v3137 = vunpack.c.l.b16 %v822
    %v3138 = vunpack.c.h.b16 %v822
    %v3139 = vunpack.c.l.b16 %v823
    %v3140 = vunpack.c.h.b16 %v823
    %v3141 = vunpack.c.l.b16 %v824
    %v3142 = vunpack.c.h.b16 %v824
    %v3143 = vunpack.c.l.b16 %v825
    %v3144 = vunpack.c.h.b16 %v825
    %v3145 = vunpack.c.l.b16 %v826
    %v3146 = vunpack.c.h.b16 %v826
    %v3147 = vunpack.c.l.b16 %v827
    %v3148 = vunpack.c.h.b16 %v827
    %v3149 = vunpack.c.l.b16 %v828
    %v3150 = vunpack.c.h.b16 %v828
    %v3151 = vunpack.c.l.b16 %v829
    %v3152 = vunpack.c.h.b16 %v829
    %v3153 = vunpack.c.l.b16 %v830
    %v3154 = vunpack.c.h.b16 %v830
    %v3155 = vunpack.c.l.b16 %v831
    %v3156 = vunpack.c.h.b16 %v831
    %v3157 = vunpack.c.l.b16 %v832
    %v3158 = vunpack.c.h.b16 %v832
    %v3159 = vunpack.c.l.b16 %v833
    %v3160 = vunpack.c.h.b16 %v833
    %v3161 = vunpack.c.l.b16 %v834
    %v3162 = vunpack.c.h.b16 %v834
    %v3163 = vunpack.c.l.b16 %v835
    %v3164 = vunpack.c.h.b16 %v835
    %v3165 = vunpack.c.l.b16 %v836
    %v3166 = vunpack.c.h.b16 %v836
    %v3167 = vunpack.c.l.b16 %v837
    %v3168 = vunpack.c.h.b16 %v837
    %v3169 = vunpack.c.l.b16 %v838
    %v3170 = vunpack.c.h.b16 %v838
    %v3171 = vunpack.c.l.b16 %v839
    %v3172 = vunpack.c.h.b16 %v839
    %v3173 = vunpack.c.l.b16 %v840
    %v3174 = vunpack.c.h.b16 %v840
    %v3175 = vunpack.c.l.b16 %v841
    %v3176 = vunpack.c.h.b16 %v841
    %v3177 = vunpack.c.l.b16 %v842
    %v3178 = vunpack.c.h.b16 %v842
    %v3179 = vunpack.c.l.b16 %v843
    %v3180 = vunpack.c.h.b16 %v843
    %v3181 = vunpack.c.l.b16 %v844
    %v3182 = vunpack.c.h.b16 %v844
    %v3183 = vunpack.c.l.b16 %v845
    %v3184 = vunpack.c.h.b16 %v845
    %v3185 = vunpack.c.l.b16 %v846
    %v3186 = vunpack.c.h.b16 %v846
    %v3187 = vunpack.c.l.b16 %v847
    %v3188 = vunpack.c.h.b16 %v847
    %v3189 = vunpack.c.l.b16 %v848
    %v3190 = vunpack.c.h.b16 %v848
    %v3191 = vunpack.c.l.b16 %v849
    %v3192 = vunpack.c.h.b16 %v849
    %v3193 = vunpack.c.l.b16 %v850
    %v3194 = vunpack.c.h.b16 %v850
    %v3195 = vunpack.c.l.b16 %v851
    %v3196 = vunpack.c.h.b16 %v851
    %v3197 = vunpack.c.l.b16 %v852
    %v3198 = vunpack.c.h.b16 %v852
    %v3199 = vunpack.c.l.b16 %v853
    %v3200 = vunpack.c.h.b16 %v853
    %v3201 = vunpack.c.l.b16 %v854
    %v3202 = vunpack.c.h.b16 %v854
    %v3203 = vunpack.c.l.b16 %v855
    %v3204 = vunpack.c.h.b16 %v855
    %v3205 = vunpack.c.l.b16 %v856
    %v3206 = vunpack.c.h.b16 %v856
    %v3207 = vunpack.c.l.b16 %v857
    %v3208 = vunpack.c.h.b16 %v857
    %v3209 = vunpack.c.l.b16 %v858
    %v3210 = vunpack.c.h.b16 %v858
    %v3211 = vunpack.c.l.b16 %v859
    %v3212 = vunpack.c.h.b16 %v859
    %v3213 = vunpack.c.l.b16 %v860
    %v3214 = vunpack.c.h.b16 %v860
    %v3215 = vunpack.c.l.b16 %v861
    %v3216 = vunpack.c.h.b16 %v861
    %v3217 = vunpack.c.l.b16 %v862
    %v3218 = vunpack.c.h.b16 %v862
    %v3219 = vunpack.c.l.b16 %v863
    %v3220 = vunpack.c.h.b16 %v863
    %v3221 = vunpack.c.l.b16 %v864
    %v3222 = vunpack.c.h.b16 %v864
    %v3223 = vunpack.c.l.b16 %v865
    %v3224 = vunpack.c.h.b16 %v865
    %v3225 = vunpack.c.l.b16 %v866
    %v3226 = vunpack.c.h.b16 %v866
    %v3227 = vunpack.c.l.b16 %v867
    %v3228 = vunpack.c.h.b16 %v867
    %v3229 = vunpack.c.l.b16 %v868
    %v3230 = vunpack.c.h.b16 %v868
    %v3231 = vunpack.c.l.b16 %v869
    %v3232 = vunpack.c.h.b16 %v869
    %v3233 = vunpack.c.l.b16 %v870
    %v3234 = vunpack.c.h.b16 %v870
    %v3235 = vunpack.c.l.b16 %v871
    %v3236 = vunpack.c.h.b16 %v871
    %v3237 = vunpack.c.l.b16 %v872
    %v3238 = vunpack.c.h.b16 %v872
    %v3239 = vunpack.c.l.b16 %v873
    %v3240 = vunpack.c.h.b16 %v873
    %v3241 = vunpack.c.l.b16 %v874
    %v3242 = vunpack.c.h.b16 %v874
    %v3243 = vunpack.c.l.b16 %v875
    %v3244 = vunpack.c.h.b16 %v875
    %v3245 = vunpack.c.l.b16 %v876
    %v3246 = vunpack.c.h.b16 %v876
    %v3247 = vunpack.c.l.b16 %v877
    %v3248 = vunpack.c.h.b16 %v877
    %v3249 = vunpack.c.l.b16 %v878
    %v3250 = vunpack.c.h.b16 %v878
    %v3251 = vunpack.c.l.b16 %v879
    %v3252 = vunpack.c.h.b16 %v879
    %v3253 = vunpack.c.l.b16 %v880
    %v3254 = vunpack.c.h.b16 %v880
    %v3255 = vunpack.c.l.b16 %v881
    %v3256 = vunpack.c.h.b16 %v881
    %v3257 = vunpack.c.l.b16 %v882
    %v3258 = vunpack.c.h.b16 %v882
    %v3259 = vunpack.c.l.b16 %v883
    %v3260 = vunpack.c.h.b16 %v883
    %v3261 = vpack.c.b16 %v1707, %v1693
    %v3262 = vpack.c.b16 %v1708, %v1694
    %v3263 = vpack.c.b16 %v1709, %v1695
    %v3264 = vpack.c.b16 %v1710, %v1696
    %v3265 = vpack.c.b16 %v1711, %v1697
    %v3266 = vpack.c.b16 %v1712, %v1698
    %v3267 = vpack.c.b16 %v1713, %v1699
    %v3268 = vpack.c.b16 %v1714, %v1700
    %v3269 = vpack.c.b16 %v1715, %v1701
    %v3270 = vpack.c.b16 %v1716, %v1702
    %v3271 = vpack.c.b16 %v1717, %v1703
    %v3272 = vpack.c.b16 %v1718, %v1704
    %v3273 = vpack.c.b16 %v1719, %v1705
    %v3274 = vpack.c.b16 %v1720, %v1706
    %v3275 = vpack.c.b16 %v1735, %v1721
    %v3276 = vpack.c.b16 %v1736, %v1722
    %v3277 = vpack.c.b16 %v1737, %v1723
    %v3278 = vpack.c.b16 %v1738, %v1724
    %v3279 = vpack.c.b16 %v1739, %v1725
    %v3280 = vpack.c.b16 %v1740, %v1726
    %v3281 = vpack.c.b16 %v1741, %v1727
    %v3282 = vpack.c.b16 %v1742, %v1728
    %v3283 = vpack.c.b16 %v1743, %v1729
    %v3284 = vpack.c.b16 %v1744, %v1730
    %v3285 = vpack.c.b16 %v1745, %v1731
    %v3286 = vpack.c.b16 %v1746, %v1732
    %v3287 = vpack.c.b16 %v1747, %v1733
    %v3288 = vpack.c.b16 %v1748, %v1734
    %v3289 = vpack.c.b16 %v1763, %v1749
    %v3290 = vpack.c.b16 %v1764, %v1750
    %v3291 = vpack.c.b16 %v1765, %v1751
    %v3292 = vpack.c.b16 %v1766, %v1752
    %v3293 = vpack.c.b16 %v1767, %v1753
    %v3294 = vpack.c.b16 %v1768, %v1754
    %v3295 = vpack.c.b16 %v1769, %v1755
    %v3296 = vpack.c.b16 %v1770, %v1756
    %v3297 = vpack.c.b16 %v1771, %v1757
    %v3298 = vpack.c.b16 %v1772, %v1758
    %v3299 = vpack.c.b16 %v1773, %v1759
    %v3300 = vpack.c.b16 %v1774, %v1760
    %v3301 = vpack.c.b16 %v1775, %v1761
    %v3302 = vpack.c.b16 %v1776, %v1762
    %v3303 = vpack.c.b16 %v1791, %v1777
    %v3304 = vpack.c.b16 %v1792, %v1778
    %v3305 = vpack.c.b16 %v1793, %v1779
    %v3306 = vpack.c.b16 %v1794, %v1780
    %v3307 = vpack.c.b16 %v1795, %v1781
    %v3308 = vpack.c.b16 %v1796, %v1782
    %v3309 = vpack.c.b16 %v1797, %v1783
    %v3310 = vpack.c.b16 %v1798, %v1784
    %v3311 = vpack.c.b16 %v1799, %v1785
    %v3312 = vpack.c.b16 %v1800, %v1786
    %v3313 = vpack.c.b16 %v1801, %v1787
    %v3314 = vpack.c.b16 %v1802, %v1788
    %v3315 = vpack.c.b16 %v1803, %v1789
    %v3316 = vpack.c.b16 %v1804, %v1790
    %v3317 = vpack.c.b16 %v1819, %v1805
    %v3318 = vpack.c.b16 %v1820, %v1806
    %v3319 = vpack.c.b16 %v1821, %v1807
    %v3320 = vpack.c.b16 %v1822, %v1808
    %v3321 = vpack.c.b16 %v1823, %v1809
    %v3322 = vpack.c.b16 %v1824, %v1810
    %v3323 = vpack.c.b16 %v1825, %v1811
    %v3324 = vpack.c.b16 %v1826, %v1812
    %v3325 = vpack.c.b16 %v1827, %v1813
    %v3326 = vpack.c.b16 %v1828, %v1814
    %v3327 = vpack.c.b16 %v1829, %v1815
    %v3328 = vpack.c.b16 %v1830, %v1816
    %v3329 = vpack.c.b16 %v1831, %v1817
    %v3330 = vpack.c.b16 %v1832, %v1818
    %v3331 = vpack.c.b16 %v1847, %v1833
    %v3332 = vpack.c.b16 %v1848, %v1834
    %v3333 = vpack.c.b16 %v1849, %v1835
    %v3334 = vpack.c.b16 %v1850, %v1836
    %v3335 = vpack.c.b16 %v1851, %v1837
    %v3336 = vpack.c.b16 %v1852, %v1838
    %v3337 = vpack.c.b16 %v1853, %v1839
    %v3338 = vpack.c.b16 %v1854, %v1840
    %v3339 = vpack.c.b16 %v1855, %v1841
    %v3340 = vpack.c.b16 %v1856, %v1842
    %v3341 = vpack.c.b16 %v1857, %v1843
    %v3342 = vpack.c.b16 %v1858, %v1844
    %v3343 = vpack.c.b16 %v1859, %v1845
    %v3344 = vpack.c.b16 %v1860, %v1846
    %v3345 = vpack.c.b16 %v1875, %v1861
    %v3346 = vpack.c.b16 %v1876, %v1862
    %v3347 = vpack.c.b16 %v1877, %v1863
    %v3348 = vpack.c.b16 %v1878, %v1864
    %v3349 = vpack.c.b16 %v1879, %v1865
    %v3350 = vpack.c.b16 %v1880, %v1866
    %v3351 = vpack.c.b16 %v1881, %v1867
    %v3352 = vpack.c.b16 %v1882, %v1868
    %v3353 = vpack.c.b16 %v1883, %v1869
    %v3354 = vpack.c.b16 %v1884, %v1870
    %v3355 = vpack.c.b16 %v1885, %v1871
    %v3356 = vpack.c.b16 %v1886, %v1872
    %v3357 = vpack.c.b16 %v1887, %v1873
    %v3358 = vpack.c.b16 %v1888, %v1874
    %v3359 = vpack.c.b16 %v1903, %v1889
    %v3360 = vpack.c.b16 %v1904, %v1890
    %v3361 = vpack.c.b16 %v1905, %v1891
    %v3362 = vpack.c.b16 %v1906, %v1892
    %v3363 = vpack.c.b16 %v1907, %v1893
    %v3364 = vpack.c.b16 %v1908, %v1894
    %v3365 = vpack.c.b16 %v1909, %v1895
    %v3366 = vpack.c.b16 %v1910, %v1896
    %v3367 = vpack.c.b16 %v1911, %v1897
    %v3368 = vpack.c.b16 %v1912, %v1898
    %v3369 = vpack.c.b16 %v1913, %v1899
    %v3370 = vpack.c.b16 %v1914, %v1900
    %v3371 = vpack.c.b16 %v1915, %v1901
    %v3372 = vpack.c.b16 %v1916, %v1902
    %v3373 = vpack.c.b16 %v1931, %v1917
    %v3374 = vpack.c.b16 %v1932, %v1918
    %v3375 = vpack.c.b16 %v1933, %v1919
    %v3376 = vpack.c.b16 %v1934, %v1920
    %v3377 = vpack.c.b16 %v1935, %v1921
    %v3378 = vpack.c.b16 %v1936, %v1922
    %v3379 = vpack.c.b16 %v1937, %v1923
    %v3380 = vpack.c.b16 %v1938, %v1924
    %v3381 = vpack.c.b16 %v1939, %v1925
    %v3382 = vpack.c.b16 %v1940, %v1926
    %v3383 = vpack.c.b16 %v1941, %v1927
    %v3384 = vpack.c.b16 %v1942, %v1928
    %v3385 = vpack.c.b16 %v1943, %v1929
    %v3386 = vpack.c.b16 %v1944, %v1930
    %v3387 = vpack.c.b16 %v1959, %v1945
    %v3388 = vpack.c.b16 %v1960, %v1946
    %v3389 = vpack.c.b16 %v1961, %v1947
    %v3390 = vpack.c.b16 %v1962, %v1948
    %v3391 = vpack.c.b16 %v1963, %v1949
    %v3392 = vpack.c.b16 %v1964, %v1950
    %v3393 = vpack.c.b16 %v1965, %v1951
    %v3394 = vpack.c.b16 %v1966, %v1952
    %v3395 = vpack.c.b16 %v1967, %v1953
    %v3396 = vpack.c.b16 %v1968, %v1954
    %v3397 = vpack.c.b16 %v1969, %v1955
    %v3398 = vpack.c.b16 %v1970, %v1956
    %v3399 = vpack.c.b16 %v1971, %v1957
    %v3400 = vpack.c.b16 %v1972, %v1958
    %v3401 = vpack.c.b16 %v1987, %v1973
    %v3402 = vpack.c.b16 %v1988, %v1974
    %v3403 = vpack.c.b16 %v1989, %v1975
    %v3404 = vpack.c.b16 %v1990, %v1976
    %v3405 = vpack.c.b16 %v1991, %v1977
    %v3406 = vpack.c.b16 %v1992, %v1978
    %v3407 = vpack.c.b16 %v1993, %v1979
    %v3408 = vpack.c.b16 %v1994, %v1980
    %v3409 = vpack.c.b16 %v1995, %v1981
    %v3410 = vpack.c.b16 %v1996, %v1982
    %v3411 = vpack.c.b16 %v1997, %v1983
    %v3412 = vpack.c.b16 %v1998, %v1984
    %v3413 = vpack.c.b16 %v1999, %v1985
    %v3414 = vpack.c.b16 %v2000, %v1986
    %v3415 = vpack.c.b16 %v2015, %v2001
    %v3416 = vpack.c.b16 %v2016, %v2002
    %v3417 = vpack.c.b16 %v2017, %v2003
    %v3418 = vpack.c.b16 %v2018, %v2004
    %v3419 = vpack.c.b16 %v2019, %v2005
    %v3420 = vpack.c.b16 %v2020, %v2006
    %v3421 = vpack.c.b16 %v2021, %v2007
    %v3422 = vpack.c.b16 %v2022, %v2008
    %v3423 = vpack.c.b16 %v2023, %v2009
    %v3424 = vpack.c.b16 %v2024, %v2010
    %v3425 = vpack.c.b16 %v2025, %v2011
    %v3426 = vpack.c.b16 %v2026, %v2012
    %v3427 = vpack.c.b16 %v2027, %v2013
    %v3428 = vpack.c.b16 %v2028, %v2014
    %v3429 = vpack.c.b16 %v2043, %v2029
    %v3430 = vpack.c.b16 %v2044, %v2030
    %v3431 = vpack.c.b16 %v2045, %v2031
    %v3432 = vpack.c.b16 %v2046, %v2032
    %v3433 = vpack.c.b16 %v2047, %v2033
    %v3434 = vpack.c.b16 %v2048, %v2034
    %v3435 = vpack.c.b16 %v2049, %v2035
    %v3436 = vpack.c.b16 %v2050, %v2036
    %v3437 = vpack.c.b16 %v2051, %v2037
    %v3438 = vpack.c.b16 %v2052, %v2038
    %v3439 = vpack.c.b16 %v2053, %v2039
    %v3440 = vpack.c.b16 %v2054, %v2040
    %v3441 = vpack.c.b16 %v2055, %v2041
    %v3442 = vpack.c.b16 %v2056, %v2042
    %v3443 = vpack.c.b16 %v2071, %v2057
    %v3444 = vpack.c.b16 %v2072, %v2058
    %v3445 = vpack.c.b16 %v2073, %v2059
    %v3446 = vpack.c.b16 %v2074, %v2060
    %v3447 = vpack.c.b16 %v2075, %v2061
    %v3448 = vpack.c.b16 %v2076, %v2062
    %v3449 = vpack.c.b16 %v2077, %v2063
    %v3450 = vpack.c.b16 %v2078, %v2064
    %v3451 = vpack.c.b16 %v2079, %v2065
    %v3452 = vpack.c.b16 %v2080, %v2066
    %v3453 = vpack.c.b16 %v2081, %v2067
    %v3454 = vpack.c.b16 %v2082, %v2068
    %v3455 = vpack.c.b16 %v2083, %v2069
    %v3456 = vpack.c.b16 %v2084, %v2070
    %v3457 = vpack.c.b16 %v2099, %v2085
    %v3458 = vpack.c.b16 %v2100, %v2086
    %v3459 = vpack.c.b16 %v2101, %v2087
    %v3460 = vpack.c.b16 %v2102, %v2088
    %v3461 = vpack.c.b16 %v2103, %v2089
    %v3462 = vpack.c.b16 %v2104, %v2090
    %v3463 = vpack.c.b16 %v2105, %v2091
    %v3464 = vpack.c.b16 %v2106, %v2092
    %v3465 = vpack.c.b16 %v2107, %v2093
    %v3466 = vpack.c.b16 %v2108, %v2094
    %v3467 = vpack.c.b16 %v2109, %v2095
    %v3468 = vpack.c.b16 %v2110, %v2096
    %v3469 = vpack.c.b16 %v2111, %v2097
    %v3470 = vpack.c.b16 %v2112, %v2098
    %v3471 = vpack.c.b16 %v2127, %v2113
    %v3472 = vpack.c.b16 %v2128, %v2114
    %v3473 = vpack.c.b16 %v2129, %v2115
    %v3474 = vpack.c.b16 %v2130, %v2116
    %v3475 = vpack.c.b16 %v2131, %v2117
    %v3476 = vpack.c.b16 %v2132, %v2118
    %v3477 = vpack.c.b16 %v2133, %v2119
    %v3478 = vpack.c.b16 %v2134, %v2120
    %v3479 = vpack.c.b16 %v2135, %v2121
    %v3480 = vpack.c.b16 %v2136, %v2122
    %v3481 = vpack.c.b16 %v2137, %v2123
    %v3482 = vpack.c.b16 %v2138, %v2124
    %v3483 = vpack.c.b16 %v2139, %v2125
    %v3484 = vpack.c.b16 %v2140, %v2126
    %v3485 = vpack.c.b16 %v2155, %v2141
    %v3486 = vpack.c.b16 %v2156, %v2142
    %v3487 = vpack.c.b16 %v2157, %v2143
    %v3488 = vpack.c.b16 %v2158, %v2144
    %v3489 = vpack.c.b16 %v2159, %v2145
    %v3490 = vpack.c.b16 %v2160, %v2146
    %v3491 = vpack.c.b16 %v2161, %v2147
    %v3492 = vpack.c.b16 %v2162, %v2148
    %v3493 = vpack.c.b16 %v2163, %v2149
    %v3494 = vpack.c.b16 %v2164, %v2150
    %v3495 = vpack.c.b16 %v2165, %v2151
    %v3496 = vpack.c.b16 %v2166, %v2152
    %v3497 = vpack.c.b16 %v2167, %v2153
    %v3498 = vpack.c.b16 %v2168, %v2154
    %v3499 = vpack.c.b16 %v2183, %v2169
    %v3500 = vpack.c.b16 %v2184, %v2170
    %v3501 = vpack.c.b16 %v2185, %v2171
    %v3502 = vpack.c.b16 %v2186, %v2172
    %v3503 = vpack.c.b16 %v2187, %v2173
    %v3504 = vpack.c.b16 %v2188, %v2174
    %v3505 = vpack.c.b16 %v2189, %v2175
    %v3506 = vpack.c.b16 %v2190, %v2176
    %v3507 = vpack.c.b16 %v2191, %v2177
    %v3508 = vpack.c.b16 %v2192, %v2178
    %v3509 = vpack.c.b16 %v2193, %v2179
    %v3510 = vpack.c.b16 %v2194, %v2180
    %v3511 = vpack.c.b16 %v2195, %v2181
    %v3512 = vpack.c.b16 %v2196, %v2182
    %v3513 = vpack.c.b16 %v2211, %v2197
    %v3514 = vpack.c.b16 %v2212, %v2198
    %v3515 = vpack.c.b16 %v2213, %v2199
    %v3516 = vpack.c.b16 %v2214, %v2200
    %v3517 = vpack.c.b16 %v2215, %v2201
    %v3518 = vpack.c.b16 %v2216, %v2202
    %v3519 = vpack.c.b16 %v2217, %v2203
    %v3520 = vpack.c.b16 %v2218, %v2204
    %v3521 = vpack.c.b16 %v2219, %v2205
    %v3522 = vpack.c.b16 %v2220, %v2206
    %v3523 = vpack.c.b16 %v2221, %v2207
    %v3524 = vpack.c.b16 %v2222, %v2208
    %v3525 = vpack.c.b16 %v2223, %v2209
    %v3526 = vpack.c.b16 %v2224, %v2210
    %v3527 = vpack.c.b16 %v2239, %v2225
    %v3528 = vpack.c.b16 %v2240, %v2226
    %v3529 = vpack.c.b16 %v2241, %v2227
    %v3530 = vpack.c.b16 %v2242, %v2228
    %v3531 = vpack.c.b16 %v2243, %v2229
    %v3532 = vpack.c.b16 %v2244, %v2230
    %v3533 = vpack.c.b16 %v2245, %v2231
    %v3534 = vpack.c.b16 %v2246, %v2232
    %v3535 = vpack.c.b16 %v2247, %v2233
    %v3536 = vpack.c.b16 %v2248, %v2234
    %v3537 = vpack.c.b16 %v2249, %v2235
    %v3538 = vpack.c.b16 %v2250, %v2236
    %v3539 = vpack.c.b16 %v2251, %v2237
    %v3540 = vpack.c.b16 %v2252, %v2238
    %v3541 = vpack.c.b16 %v2267, %v2253
    %v3542 = vpack.c.b16 %v2268, %v2254
    %v3543 = vpack.c.b16 %v2269, %v2255
    %v3544 = vpack.c.b16 %v2270, %v2256
    %v3545 = vpack.c.b16 %v2271, %v2257
    %v3546 = vpack.c.b16 %v2272, %v2258
    %v3547 = vpack.c.b16 %v2273, %v2259
    %v3548 = vpack.c.b16 %v2274, %v2260
    %v3549 = vpack.c.b16 %v2275, %v2261
    %v3550 = vpack.c.b16 %v2276, %v2262
    %v3551 = vpack.c.b16 %v2277, %v2263
    %v3552 = vpack.c.b16 %v2278, %v2264
    %v3553 = vpack.c.b16 %v2279, %v2265
    %v3554 = vpack.c.b16 %v2280, %v2266
    %v3555 = vpack.c.b16 %v2295, %v2281
    %v3556 = vpack.c.b16 %v2296, %v2282
    %v3557 = vpack.c.b16 %v2297, %v2283
    %v3558 = vpack.c.b16 %v2298, %v2284
    %v3559 = vpack.c.b16 %v2299, %v2285
    %v3560 = vpack.c.b16 %v2300, %v2286
    %v3561 = vpack.c.b16 %v2301, %v2287
    %v3562 = vpack.c.b16 %v2302, %v2288
    %v3563 = vpack.c.b16 %v2303, %v2289
    %v3564 = vpack.c.b16 %v2304, %v2290
    %v3565 = vpack.c.b16 %v2305, %v2291
    %v3566 = vpack.c.b16 %v2306, %v2292
    %v3567 = vpack.c.b16 %v2307, %v2293
    %v3568 = vpack.c.b16 %v2308, %v2294
    %v3569 = vpack.c.b16 %v2323, %v2309
    %v3570 = vpack.c.b16 %v2324, %v2310
    %v3571 = vpack.c.b16 %v2325, %v2311
    %v3572 = vpack.c.b16 %v2326, %v2312
    %v3573 = vpack.c.b16 %v2327, %v2313
    %v3574 = vpack.c.b16 %v2328, %v2314
    %v3575 = vpack.c.b16 %v2329, %v2315
    %v3576 = vpack.c.b16 %v2330, %v2316
    %v3577 = vpack.c.b16 %v2331, %v2317
    %v3578 = vpack.c.b16 %v2332, %v2318
    %v3579 = vpack.c.b16 %v2333, %v2319
    %v3580 = vpack.c.b16 %v2334, %v2320
    %v3581 = vpack.c.b16 %v2335, %v2321
    %v3582 = vpack.c.b16 %v2336, %v2322
    %v3583 = vpack.c.b16 %v2351, %v2337
    %v3584 = vpack.c.b16 %v2352, %v2338
    %v3585 = vpack.c.b16 %v2353, %v2339
    %v3586 = vpack.c.b16 %v2354, %v2340
    %v3587 = vpack.c.b16 %v2355, %v2341
    %v3588 = vpack.c.b16 %v2356, %v2342
    %v3589 = vpack.c.b16 %v2357, %v2343
    %v3590 = vpack.c.b16 %v2358, %v2344
    %v3591 = vpack.c.b16 %v2359, %v2345
    %v3592 = vpack.c.b16 %v2360, %v2346
    %v3593 = vpack.c.b16 %v2361, %v2347
    %v3594 = vpack.c.b16 %v2362, %v2348
    %v3595 = vpack.c.b16 %v2363, %v2349
    %v3596 = vpack.c.b16 %v2364, %v2350
    %v3597 = vpack.c.b16 %v2379, %v2365
    %v3598 = vpack.c.b16 %v2380, %v2366
    %v3599 = vpack.c.b16 %v2381, %v2367
    %v3600 = vpack.c.b16 %v2382, %v2368
    %v3601 = vpack.c.b16 %v2383, %v2369
    %v3602 = vpack.c.b16 %v2384, %v2370
    %v3603 = vpack.c.b16 %v2385, %v2371
    %v3604 = vpack.c.b16 %v2386, %v2372
    %v3605 = vpack.c.b16 %v2387, %v2373
    %v3606 = vpack.c.b16 %v2388, %v2374
    %v3607 = vpack.c.b16 %v2389, %v2375
    %v3608 = vpack.c.b16 %v2390, %v2376
    %v3609 = vpack.c.b16 %v2391, %v2377
    %v3610 = vpack.c.b16 %v2392, %v2378
    %v3611 = vpack.c.b16 %v2407, %v2393
    %v3612 = vpack.c.b16 %v2408, %v2394
    %v3613 = vpack.c.b16 %v2409, %v2395
    %v3614 = vpack.c.b16 %v2410, %v2396
    %v3615 = vpack.c.b16 %v2411, %v2397
    %v3616 = vpack.c.b16 %v2412, %v2398
    %v3617 = vpack.c.b16 %v2413, %v2399
    %v3618 = vpack.c.b16 %v2414, %v2400
    %v3619 = vpack.c.b16 %v2415, %v2401
    %v3620 = vpack.c.b16 %v2416, %v2402
    %v3621 = vpack.c.b16 %v2417, %v2403
    %v3622 = vpack.c.b16 %v2418, %v2404
    %v3623 = vpack.c.b16 %v2419, %v2405
    %v3624 = vpack.c.b16 %v2420, %v2406
    %v3625 = vpack.c.b16 %v2435, %v2421
    %v3626 = vpack.c.b16 %v2436, %v2422
    %v3627 = vpack.c.b16 %v2437, %v2423
    %v3628 = vpack.c.b16 %v2438, %v2424
    %v3629 = vpack.c.b16 %v2439, %v2425
    %v3630 = vpack.c.b16 %v2440, %v2426
    %v3631 = vpack.c.b16 %v2441, %v2427
    %v3632 = vpack.c.b16 %v2442, %v2428
    %v3633 = vpack.c.b16 %v2443, %v2429
    %v3634 = vpack.c.b16 %v2444, %v2430
    %v3635 = vpack.c.b16 %v2445, %v2431
    %v3636 = vpack.c.b16 %v2446, %v2432
    %v3637 = vpack.c.b16 %v2447, %v2433
    %v3638 = vpack.c.b16 %v2448, %v2434
    %v3639 = vpack.c.b16 %v2463, %v2449
    %v3640 = vpack.c.b16 %v2464, %v2450
    %v3641 = vpack.c.b16 %v2465, %v2451
    %v3642 = vpack.c.b16 %v2466, %v2452
    %v3643 = vpack.c.b16 %v2467, %v2453
    %v3644 = vpack.c.b16 %v2468, %v2454
    %v3645 = vpack.c.b16 %v2469, %v2455
    %v3646 = vpack.c.b16 %v2470, %v2456
    %v3647 = vpack.c.b16 %v2471, %v2457
    %v3648 = vpack.c.b16 %v2472, %v2458
    %v3649 = vpack.c.b16 %v2473, %v2459
    %v3650 = vpack.c.b16 %v2474, %v2460
    %v3651 = vpack.c.b16 %v2475, %v2461
    %v3652 = vpack.c.b16 %v2476, %v2462
    %v3653 = vpack.c.b16 %v2491, %v2477
    %v3654 = vpack.c.b16 %v2492, %v2478
    %v3655 = vpack.c.b16 %v2493, %v2479
    %v3656 = vpack.c.b16 %v2494, %v2480
    %v3657 = vpack.c.b16 %v2495, %v2481
    %v3658 = vpack.c.b16 %v2496, %v2482
    %v3659 = vpack.c.b16 %v2497, %v2483
    %v3660 = vpack.c.b16 %v2498, %v2484
    %v3661 = vpack.c.b16 %v2499, %v2485
    %v3662 = vpack.c.b16 %v2500, %v2486
    %v3663 = vpack.c.b16 %v2501, %v2487
    %v3664 = vpack.c.b16 %v2502, %v2488
    %v3665 = vpack.c.b16 %v2503, %v2489
    %v3666 = vpack.c.b16 %v2504, %v2490
    %v3667 = vpack.c.b16 %v2519, %v2505
    %v3668 = vpack.c.b16 %v2520, %v2506
    %v3669 = vpack.c.b16 %v2521, %v2507
    %v3670 = vpack.c.b16 %v2522, %v2508
    %v3671 = vpack.c.b16 %v2523, %v2509
    %v3672 = vpack.c.b16 %v2524, %v2510
    %v3673 = vpack.c.b16 %v2525, %v2511
    %v3674 = vpack.c.b16 %v2526, %v2512
    %v3675 = vpack.c.b16 %v2527, %v2513
    %v3676 = vpack.c.b16 %v2528, %v2514
    %v3677 = vpack.c.b16 %v2529, %v2515
    %v3678 = vpack.c.b16 %v2530, %v2516
    %v3679 = vpack.c.b16 %v2531, %v2517
    %v3680 = vpack.c.b16 %v2532, %v2518
    %v3681 = vpack.c.b16 %v2547, %v2533
    %v3682 = vpack.c.b16 %v2548, %v2534
    %v3683 = vpack.c.b16 %v2549, %v2535
    %v3684 = vpack.c.b16 %v2550, %v2536
    %v3685 = vpack.c.b16 %v2551, %v2537
    %v3686 = vpack.c.b16 %v2552, %v2538
    %v3687 = vpack.c.b16 %v2553, %v2539
    %v3688 = vpack.c.b16 %v2554, %v2540
    %v3689 = vpack.c.b16 %v2555, %v2541
    %v3690 = vpack.c.b16 %v2556, %v2542
    %v3691 = vpack.c.b16 %v2557, %v2543
    %v3692 = vpack.c.b16 %v2558, %v2544
    %v3693 = vpack.c.b16 %v2559, %v2545
    %v3694 = vpack.c.b16 %v2560, %v2546
    %v3695 = vpack.c.b16 %v2575, %v2561
    %v3696 = vpack.c.b16 %v2576, %v2562
    %v3697 = vpack.c.b16 %v2577, %v2563
    %v3698 = vpack.c.b16 %v2578, %v2564
    %v3699 = vpack.c.b16 %v2579, %v2565
    %v3700 = vpack.c.b16 %v2580, %v2566
    %v3701 = vpack.c.b16 %v2581, %v2567
    %v3702 = vpack.c.b16 %v2582, %v2568
    %v3703 = vpack.c.b16 %v2583, %v2569
    %v3704 = vpack.c.b16 %v2584, %v2570
    %v3705 = vpack.c.b16 %v2585, %v2571
    %v3706 = vpack.c.b16 %v2586, %v2572
    %v3707 = vpack.c.b16 %v2587, %v2573
    %v3708 = vpack.c.b16 %v2588, %v2574
    %v3709 = vpack.c.b16 %v2603, %v2589
    %v3710 = vpack.c.b16 %v2604, %v2590
    %v3711 = vpack.c.b16 %v2605, %v2591
    %v3712 = vpack.c.b16 %v2606, %v2592
    %v3713 = vpack.c.b16 %v2607, %v2593
    %v3714 = vpack.c.b16 %v2608, %v2594
    %v3715 = vpack.c.b16 %v2609, %v2595
    %v3716 = vpack.c.b16 %v2610, %v2596
    %v3717 = vpack.c.b16 %v2611, %v2597
    %v3718 = vpack.c.b16 %v2612, %v2598
    %v3719 = vpack.c.b16 %v2613, %v2599
    %v3720 = vpack.c.b16 %v2614, %v2600
    %v3721 = vpack.c.b16 %v2615, %v2601
    %v3722 = vpack.c.b16 %v2616, %v2602
    %v3723 = vpack.c.b16 %v2631, %v2617
    %v3724 = vpack.c.b16 %v2632, %v2618
    %v3725 = vpack.c.b16 %v2633, %v2619
    %v3726 = vpack.c.b16 %v2634, %v2620
    %v3727 = vpack.c.b16 %v2635, %v2621
    %v3728 = vpack.c.b16 %v2636, %v2622
    %v3729 = vpack.c.b16 %v2637, %v2623
    %v3730 = vpack.c.b16 %v2638, %v2624
    %v3731 = vpack.c.b16 %v2639, %v2625
    %v3732 = vpack.c.b16 %v2640, %v2626
    %v3733 = vpack.c.b16 %v2641, %v2627
    %v3734 = vpack.c.b16 %v2642, %v2628
    %v3735 = vpack.c.b16 %v2643, %v2629
    %v3736 = vpack.c.b16 %v2644, %v2630
    %v3737 = vpack.c.b16 %v2659, %v2645
    %v3738 = vpack.c.b16 %v2660, %v2646
    %v3739 = vpack.c.b16 %v2661, %v2647
    %v3740 = vpack.c.b16 %v2662, %v2648
    %v3741 = vpack.c.b16 %v2663, %v2649
    %v3742 = vpack.c.b16 %v2664, %v2650
    %v3743 = vpack.c.b16 %v2665, %v2651
    %v3744 = vpack.c.b16 %v2666, %v2652
    %v3745 = vpack.c.b16 %v2667, %v2653
    %v3746 = vpack.c.b16 %v2668, %v2654
    %v3747 = vpack.c.b16 %v2669, %v2655
    %v3748 = vpack.c.b16 %v2670, %v2656
    %v3749 = vpack.c.b16 %v2671, %v2657
    %v3750 = vpack.c.b16 %v2672, %v2658
    %v3751 = vpack.c.b16 %v2687, %v2673
    %v3752 = vpack.c.b16 %v2688, %v2674
    %v3753 = vpack.c.b16 %v2689, %v2675
    %v3754 = vpack.c.b16 %v2690, %v2676
    %v3755 = vpack.c.b16 %v2691, %v2677
    %v3756 = vpack.c.b16 %v2692, %v2678
    %v3757 = vpack.c.b16 %v2693, %v2679
    %v3758 = vpack.c.b16 %v2694, %v2680
    %v3759 = vpack.c.b16 %v2695, %v2681
    %v3760 = vpack.c.b16 %v2696, %v2682
    %v3761 = vpack.c.b16 %v2697, %v2683
    %v3762 = vpack.c.b16 %v2698, %v2684
    %v3763 = vpack.c.b16 %v2699, %v2685
    %v3764 = vpack.c.b16 %v2700, %v2686
    %v3765 = vpack.c.b16 %v2715, %v2701
    %v3766 = vpack.c.b16 %v2716, %v2702
    %v3767 = vpack.c.b16 %v2717, %v2703
    %v3768 = vpack.c.b16 %v2718, %v2704
    %v3769 = vpack.c.b16 %v2719, %v2705
    %v3770 = vpack.c.b16 %v2720, %v2706
    %v3771 = vpack.c.b16 %v2721, %v2707
    %v3772 = vpack.c.b16 %v2722, %v2708
    %v3773 = vpack.c.b16 %v2723, %v2709
    %v3774 = vpack.c.b16 %v2724, %v2710
    %v3775 = vpack.c.b16 %v2725, %v2711
    %v3776 = vpack.c.b16 %v2726, %v2712
    %v3777 = vpack.c.b16 %v2727, %v2713
    %v3778 = vpack.c.b16 %v2728, %v2714
    %v3779 = vpack.c.b16 %v2743, %v2729
    %v3780 = vpack.c.b16 %v2744, %v2730
    %v3781 = vpack.c.b16 %v2745, %v2731
    %v3782 = vpack.c.b16 %v2746, %v2732
    %v3783 = vpack.c.b16 %v2747, %v2733
    %v3784 = vpack.c.b16 %v2748, %v2734
    %v3785 = vpack.c.b16 %v2749, %v2735
    %v3786 = vpack.c.b16 %v2750, %v2736
    %v3787 = vpack.c.b16 %v2751, %v2737
    %v3788 = vpack.c.b16 %v2752, %v2738
    %v3789 = vpack.c.b16 %v2753, %v2739
    %v3790 = vpack.c.b16 %v2754, %v2740
    %v3791 = vpack.c.b16 %v2755, %v2741
    %v3792 = vpack.c.b16 %v2756, %v2742
    %v3793 = vpack.c.b16 %v2771, %v2757
    %v3794 = vpack.c.b16 %v2772, %v2758
    %v3795 = vpack.c.b16 %v2773, %v2759
    %v3796 = vpack.c.b16 %v2774, %v2760
    %v3797 = vpack.c.b16 %v2775, %v2761
    %v3798 = vpack.c.b16 %v2776, %v2762
    %v3799 = vpack.c.b16 %v2777, %v2763
    %v3800 = vpack.c.b16 %v2778, %v2764
    %v3801 = vpack.c.b16 %v2779, %v2765
    %v3802 = vpack.c.b16 %v2780, %v2766
    %v3803 = vpack.c.b16 %v2781, %v2767
    %v3804 = vpack.c.b16 %v2782, %v2768
    %v3805 = vpack.c.b16 %v2783, %v2769
    %v3806 = vpack.c.b16 %v2784, %v2770
    %v3807 = vpack.c.b16 %v2799, %v2785
    %v3808 = vpack.c.b16 %v2800, %v2786
    %v3809 = vpack.c.b16 %v2801, %v2787
    %v3810 = vpack.c.b16 %v2802, %v2788
    %v3811 = vpack.c.b16 %v2803, %v2789
    %v3812 = vpack.c.b16 %v2804, %v2790
    %v3813 = vpack.c.b16 %v2805, %v2791
    %v3814 = vpack.c.b16 %v2806, %v2792
    %v3815 = vpack.c.b16 %v2807, %v2793
    %v3816 = vpack.c.b16 %v2808, %v2794
    %v3817 = vpack.c.b16 %v2809, %v2795
    %v3818 = vpack.c.b16 %v2810, %v2796
    %v3819 = vpack.c.b16 %v2811, %v2797
    %v3820 = vpack.c.b16 %v2812, %v2798
    %v3821 = vpack.c.b16 %v2827, %v2813
    %v3822 = vpack.c.b16 %v2828, %v2814
    %v3823 = vpack.c.b16 %v2829, %v2815
    %v3824 = vpack.c.b16 %v2830, %v2816
    %v3825 = vpack.c.b16 %v2831, %v2817
    %v3826 = vpack.c.b16 %v2832, %v2818
    %v3827 = vpack.c.b16 %v2833, %v2819
    %v3828 = vpack.c.b16 %v2834, %v2820
    %v3829 = vpack.c.b16 %v2835, %v2821
    %v3830 = vpack.c.b16 %v2836, %v2822
    %v3831 = vpack.c.b16 %v2837, %v2823
    %v3832 = vpack.c.b16 %v2838, %v2824
    %v3833 = vpack.c.b16 %v2839, %v2825
    %v3834 = vpack.c.b16 %v2840, %v2826
    %v3835 = vpack.c.b16 %v2855, %v2841
    %v3836 = vpack.c.b16 %v2856, %v2842
    %v3837 = vpack.c.b16 %v2857, %v2843
    %v3838 = vpack.c.b16 %v2858, %v2844
    %v3839 = vpack.c.b16 %v2859, %v2845
    %v3840 = vpack.c.b16 %v2860, %v2846
    %v3841 = vpack.c.b16 %v2861, %v2847
    %v3842 = vpack.c.b16 %v2862, %v2848
    %v3843 = vpack.c.b16 %v2863, %v2849
    %v3844 = vpack.c.b16 %v2864, %v2850
    %v3845 = vpack.c.b16 %v2865, %v2851
    %v3846 = vpack.c.b16 %v2866, %v2852
    %v3847 = vpack.c.b16 %v2867, %v2853
    %v3848 = vpack.c.b16 %v2868, %v2854
    %v3849 = vpack.c.b16 %v2883, %v2869
    %v3850 = vpack.c.b16 %v2884, %v2870
    %v3851 = vpack.c.b16 %v2885, %v2871
    %v3852 = vpack.c.b16 %v2886, %v2872
    %v3853 = vpack.c.b16 %v2887, %v2873
    %v3854 = vpack.c.b16 %v2888, %v2874
    %v3855 = vpack.c.b16 %v2889, %v2875
    %v3856 = vpack.c.b16 %v2890, %v2876
    %v3857 = vpack.c.b16 %v2891, %v2877
    %v3858 = vpack.c.b16 %v2892, %v2878
    %v3859 = vpack.c.b16 %v2893, %v2879
    %v3860 = vpack.c.b16 %v2894, %v2880
    %v3861 = vpack.c.b16 %v2895, %v2881
    %v3862 = vpack.c.b16 %v2896, %v2882
    %v3863 = vpack.c.b16 %v2911, %v2897
    %v3864 = vpack.c.b16 %v2912, %v2898
    %v3865 = vpack.c.b16 %v2913, %v2899
    %v3866 = vpack.c.b16 %v2914, %v2900
    %v3867 = vpack.c.b16 %v2915, %v2901
    %v3868 = vpack.c.b16 %v2916, %v2902
    %v3869 = vpack.c.b16 %v2917, %v2903
    %v3870 = vpack.c.b16 %v2918, %v2904
    %v3871 = vpack.c.b16 %v2919, %v2905
    %v3872 = vpack.c.b16 %v2920, %v2906
    %v3873 = vpack.c.b16 %v2921, %v2907
    %v3874 = vpack.c.b16 %v2922, %v2908
    %v3875 = vpack.c.b16 %v2923, %v2909
    %v3876 = vpack.c.b16 %v2924, %v2910
    %v3877 = vpack.c.b16 %v2939, %v2925
    %v3878 = vpack.c.b16 %v2940, %v2926
    %v3879 = vpack.c.b16 %v2941, %v2927
    %v3880 = vpack.c.b16 %v2942, %v2928
    %v3881 = vpack.c.b16 %v2943, %v2929
    %v3882 = vpack.c.b16 %v2944, %v2930
    %v3883 = vpack.c.b16 %v2945, %v2931
    %v3884 = vpack.c.b16 %v2946, %v2932
    %v3885 = vpack.c.b16 %v2947, %v2933
    %v3886 = vpack.c.b16 %v2948, %v2934
    %v3887 = vpack.c.b16 %v2949, %v2935
    %v3888 = vpack.c.b16 %v2950, %v2936
    %v3889 = vpack.c.b16 %v2951, %v2937
    %v3890 = vpack.c.b16 %v2952, %v2938
    %v3891 = vpack.c.b16 %v2967, %v2953
    %v3892 = vpack.c.b16 %v2968, %v2954
    %v3893 = vpack.c.b16 %v2969, %v2955
    %v3894 = vpack.c.b16 %v2970, %v2956
    %v3895 = vpack.c.b16 %v2971, %v2957
    %v3896 = vpack.c.b16 %v2972, %v2958
    %v3897 = vpack.c.b16 %v2973, %v2959
    %v3898 = vpack.c.b16 %v2974, %v2960
    %v3899 = vpack.c.b16 %v2975, %v2961
    %v3900 = vpack.c.b16 %v2976, %v2962
    %v3901 = vpack.c.b16 %v2977, %v2963
    %v3902 = vpack.c.b16 %v2978, %v2964
    %v3903 = vpack.c.b16 %v2979, %v2965
    %v3904 = vpack.c.b16 %v2980, %v2966
    %v3905 = vpack.c.b16 %v2995, %v2981
    %v3906 = vpack.c.b16 %v2996, %v2982
    %v3907 = vpack.c.b16 %v2997, %v2983
    %v3908 = vpack.c.b16 %v2998, %v2984
    %v3909 = vpack.c.b16 %v2999, %v2985
    %v3910 = vpack.c.b16 %v3000, %v2986
    %v3911 = vpack.c.b16 %v3001, %v2987
    %v3912 = vpack.c.b16 %v3002, %v2988
    %v3913 = vpack.c.b16 %v3003, %v2989
    %v3914 = vpack.c.b16 %v3004, %v2990
    %v3915 = vpack.c.b16 %v3005, %v2991
    %v3916 = vpack.c.b16 %v3006, %v2992
    %v3917 = vpack.c.b16 %v3007, %v2993
    %v3918 = vpack.c.b16 %v3008, %v2994
    %v3919 = vpack.c.b16 %v3023, %v3009
    %v3920 = vpack.c.b16 %v3024, %v3010
    %v3921 = vpack.c.b16 %v3025, %v3011
    %v3922 = vpack.c.b16 %v3026, %v3012
    %v3923 = vpack.c.b16 %v3027, %v3013
    %v3924 = vpack.c.b16 %v3028, %v3014
    %v3925 = vpack.c.b16 %v3029, %v3015
    %v3926 = vpack.c.b16 %v3030, %v3016
    %v3927 = vpack.c.b16 %v3031, %v3017
    %v3928 = vpack.c.b16 %v3032, %v3018
    %v3929 = vpack.c.b16 %v3033, %v3019
    %v3930 = vpack.c.b16 %v3034, %v3020
    %v3931 = vpack.c.b16 %v3035, %v3021
    %v3932 = vpack.c.b16 %v3036, %v3022
    %v3933 = vpack.c.b16 %v3051, %v3037
    %v3934 = vpack.c.b16 %v3052, %v3038
    %v3935 = vpack.c.b16 %v3053, %v3039
    %v3936 = vpack.c.b16 %v3054, %v3040
    %v3937 = vpack.c.b16 %v3055, %v3041
    %v3938 = vpack.c.b16 %v3056, %v3042
    %v3939 = vpack.c.b16 %v3057, %v3043
    %v3940 = vpack.c.b16 %v3058, %v3044
    %v3941 = vpack.c.b16 %v3059, %v3045
    %v3942 = vpack.c.b16 %v3060, %v3046
    %v3943 = vpack.c.b16 %v3061, %v3047
    %v3944 = vpack.c.b16 %v3062, %v3048
    %v3945 = vpack.c.b16 %v3063, %v3049
    %v3946 = vpack.c.b16 %v3064, %v3050
    %v3947 = vpack.c.b16 %v3079, %v3065
    %v3948 = vpack.c.b16 %v3080, %v3066
    %v3949 = vpack.c.b16 %v3081, %v3067
    %v3950 = vpack.c.b16 %v3082, %v3068
    %v3951 = vpack.c.b16 %v3083, %v3069
    %v3952 = vpack.c.b16 %v3084, %v3070
    %v3953 = vpack.c.b16 %v3085, %v3071
    %v3954 = vpack.c.b16 %v3086, %v3072
    %v3955 = vpack.c.b16 %v3087, %v3073
    %v3956 = vpack.c.b16 %v3088, %v3074
    %v3957 = vpack.c.b16 %v3089, %v3075
    %v3958 = vpack.c.b16 %v3090, %v3076
    %v3959 = vpack.c.b16 %v3091, %v3077
    %v3960 = vpack.c.b16 %v3092, %v3078
    %v3961 = vpack.c.b16 %v3107, %v3093
    %v3962 = vpack.c.b16 %v3108, %v3094
    %v3963 = vpack.c.b16 %v3109, %v3095
    %v3964 = vpack.c.b16 %v3110, %v3096
    %v3965 = vpack.c.b16 %v3111, %v3097
    %v3966 = vpack.c.b16 %v3112, %v3098
    %v3967 = vpack.c.b16 %v3113, %v3099
    %v3968 = vpack.c.b16 %v3114, %v3100
    %v3969 = vpack.c.b16 %v3115, %v3101
    %v3970 = vpack.c.b16 %v3116, %v3102
    %v3971 = vpack.c.b16 %v3117, %v3103
    %v3972 = vpack.c.b16 %v3118, %v3104
    %v3973 = vpack.c.b16 %v3119, %v3105
    %v3974 = vpack.c.b16 %v3120, %v3106
    %v3975 = vpack.c.b16 %v3135, %v3121
    %v3976 = vpack.c.b16 %v3136, %v3122
    %v3977 = vpack.c.b16 %v3137, %v3123
    %v3978 = vpack.c.b16 %v3138, %v3124
    %v3979 = vpack.c.b16 %v3139, %v3125
    %v3980 = vpack.c.b16 %v3140, %v3126
    %v3981 = vpack.c.b16 %v3141, %v3127
    %v3982 = vpack.c.b16 %v3142, %v3128
    %v3983 = vpack.c.b16 %v3143, %v3129
    %v3984 = vpack.c.b16 %v3144, %v3130
    %v3985 = vpack.c.b16 %v3145, %v3131
    %v3986 = vpack.c.b16 %v3146, %v3132
    %v3987 = vpack.c.b16 %v3147, %v3133
    %v3988 = vpack.c.b16 %v3148, %v3134
    %v3989 = vpack.c.b16 %v3163, %v3149
    %v3990 = vpack.c.b16 %v3164, %v3150
    %v3991 = vpack.c.b16 %v3165, %v3151
    %v3992 = vpack.c.b16 %v3166, %v3152
    %v3993 = vpack.c.b16 %v3167, %v3153
    %v3994 = vpack.c.b16 %v3168, %v3154
    %v3995 = vpack.c.b16 %v3169, %v3155
    %v3996 = vpack.c.b16 %v3170, %v3156
    %v3997 = vpack.c.b16 %v3171, %v3157
    %v3998 = vpack.c.b16 %v3172, %v3158
    %v3999 = vpack.c.b16 %v3173, %v3159
    %v4000 = vpack.c.b16 %v3174, %v3160
    %v4001 = vpack.c.b16 %v3175, %v3161
    %v4002 = vpack.c.b16 %v3176, %v3162
    %v4003 = vpack.c.b16 %v3191, %v3177
    %v4004 = vpack.c.b16 %v3192, %v3178
    %v4005 = vpack.c.b16 %v3193, %v3179
    %v4006 = vpack.c.b16 %v3194, %v3180
    %v4007 = vpack.c.b16 %v3195, %v3181
    %v4008 = vpack.c.b16 %v3196, %v3182
    %v4009 = vpack.c.b16 %v3197, %v3183
    %v4010 = vpack.c.b16 %v3198, %v3184
    %v4011 = vpack.c.b16 %v3199, %v3185
    %v4012 = vpack.c.b16 %v3200, %v3186
    %v4013 = vpack.c.b16 %v3201, %v3187
    %v4014 = vpack.c.b16 %v3202, %v3188
    %v4015 = vpack.c.b16 %v3203, %v3189
    %v4016 = vpack.c.b16 %v3204, %v3190
    %v4017 = vpack.c.b16 %v3219, %v3205
    %v4018 = vpack.c.b16 %v3220, %v3206
    %v4019 = vpack.c.b16 %v3221, %v3207
    %v4020 = vpack.c.b16 %v3222, %v3208
    %v4021 = vpack.c.b16 %v3223, %v3209
    %v4022 = vpack.c.b16 %v3224, %v3210
    %v4023 = vpack.c.b16 %v3225, %v3211
    %v4024 = vpack.c.b16 %v3226, %v3212
    %v4025 = vpack.c.b16 %v3227, %v3213
    %v4026 = vpack.c.b16 %v3228, %v3214
    %v4027 = vpack.c.b16 %v3229, %v3215
    %v4028 = vpack.c.b16 %v3230, %v3216
    %v4029 = vpack.c.b16 %v3231, %v3217
    %v4030 = vpack.c.b16 %v3232, %v3218
    %v4031 = vpack.c.b16 %v3247, %v3233
    %v4032 = vpack.c.b16 %v3248, %v3234
    %v4033 = vpack.c.b16 %v3249, %v3235
    %v4034 = vpack.c.b16 %v3250, %v3236
    %v4035 = vpack.c.b16 %v3251, %v3237
    %v4036 = vpack.c.b16 %v3252, %v3238
    %v4037 = vpack.c.b16 %v3253, %v3239
    %v4038 = vpack.c.b16 %v3254, %v3240
    %v4039 = vpack.c.b16 %v3255, %v3241
    %v4040 = vpack.c.b16 %v3256, %v3242
    %v4041 = vpack.c.b16 %v3257, %v3243
    %v4042 = vpack.c.b16 %v3258, %v3244
    %v4043 = vpack.c.b16 %v3259, %v3245
    %v4044 = vpack.c.b16 %v3260, %v3246
    %4829 = vmatpush.bf16.msra.mxu0 %v3359
    %4830 = vmatpush.bf16.msra.mxu0 %v3345
    %4831 = vmatpush.bf16.msra.mxu0 %v3331
    %4832 = vmatpush.bf16.msra.mxu0 %v3317
    %4833 = vmatpush.bf16.msra.mxu0 %v3303
    %4834 = vmatpush.bf16.msra.mxu0 %v3289
    %4835 = vmatpush.bf16.msra.mxu0 %v3275
    %4836 = vmatpush.bf16.msra.mxu0 %v3261
    %4837 = vmatmul.bf16.gmra.mxu0 %v895
    %v4838 = vpop.f32.mrf.mxu0
    %v4839 = vadd.f32 0.0, %v4838
    %v4840 = vpop.f32.mrf.mxu0
    %4841 = vdwg.mxu0
    %4842 = vmatpush.bf16.msra.mxu0 %v3471
    %4843 = vmatpush.bf16.msra.mxu0 %v3457
    %4844 = vmatpush.bf16.msra.mxu0 %v3443
    %4845 = vmatpush.bf16.msra.mxu0 %v3429
    %4846 = vmatpush.bf16.msra.mxu0 %v3415
    %4847 = vmatpush.bf16.msra.mxu0 %v3401
    %4848 = vmatpush.bf16.msra.mxu0 %v3387
    %4849 = vmatpush.bf16.msra.mxu0 %v3373
    %4850 = vmatmul.bf16.gmra.mxu0 %v896
    %v4851 = vpop.f32.mrf.mxu0
    %v4852 = vadd.f32 %v4839, %v4851
    %v4853 = vpop.f32.mrf.mxu0
    %4854 = vdwg.mxu0
    %4855 = vmatpush.bf16.msra.mxu0 %v3583
    %4856 = vmatpush.bf16.msra.mxu0 %v3569
    %4857 = vmatpush.bf16.msra.mxu0 %v3555
    %4858 = vmatpush.bf16.msra.mxu0 %v3541
    %4859 = vmatpush.bf16.msra.mxu0 %v3527
    %4860 = vmatpush.bf16.msra.mxu0 %v3513
    %4861 = vmatpush.bf16.msra.mxu0 %v3499
    %4862 = vmatpush.bf16.msra.mxu0 %v3485
    %4863 = vmatmul.bf16.gmra.mxu0 %v897
    %v4864 = vpop.f32.mrf.mxu0
    %v4865 = vadd.f32 %v4852, %v4864
    %v4866 = vpop.f32.mrf.mxu0
    %4867 = vdwg.mxu0
    %4868 = vmatpush.bf16.msra.mxu0 %v3695
    %4869 = vmatpush.bf16.msra.mxu0 %v3681
    %4870 = vmatpush.bf16.msra.mxu0 %v3667
    %4871 = vmatpush.bf16.msra.mxu0 %v3653
    %4872 = vmatpush.bf16.msra.mxu0 %v3639
    %4873 = vmatpush.bf16.msra.mxu0 %v3625
    %4874 = vmatpush.bf16.msra.mxu0 %v3611
    %4875 = vmatpush.bf16.msra.mxu0 %v3597
    %4876 = vmatmul.bf16.gmra.mxu0 %v898
    %v4877 = vpop.f32.mrf.mxu0
    %v4878 = vadd.f32 %v4865, %v4877
    %v4879 = vpop.f32.mrf.mxu0
    %4880 = vdwg.mxu0
    %4881 = vmatpush.bf16.msra.mxu0 %v3807
    %4882 = vmatpush.bf16.msra.mxu0 %v3793
    %4883 = vmatpush.bf16.msra.mxu0 %v3779
    %4884 = vmatpush.bf16.msra.mxu0 %v3765
    %4885 = vmatpush.bf16.msra.mxu0 %v3751
    %4886 = vmatpush.bf16.msra.mxu0 %v3737
    %4887 = vmatpush.bf16.msra.mxu0 %v3723
    %4888 = vmatpush.bf16.msra.mxu0 %v3709
    %4889 = vmatmul.bf16.gmra.mxu0 %v899
    %v4890 = vpop.f32.mrf.mxu0
    %v4891 = vadd.f32 %v4878, %v4890
    %v4892 = vpop.f32.mrf.mxu0
    %4893 = vdwg.mxu0
    %4894 = vmatpush.bf16.msra.mxu0 %v3919
    %4895 = vmatpush.bf16.msra.mxu0 %v3905
    %4896 = vmatpush.bf16.msra.mxu0 %v3891
    %4897 = vmatpush.bf16.msra.mxu0 %v3877
    %4898 = vmatpush.bf16.msra.mxu0 %v3863
    %4899 = vmatpush.bf16.msra.mxu0 %v3849
    %4900 = vmatpush.bf16.msra.mxu0 %v3835
    %4901 = vmatpush.bf16.msra.mxu0 %v3821
    %4902 = vmatmul.bf16.gmra.mxu0 %v900
    %v4903 = vpop.f32.mrf.mxu0
    %v4904 = vadd.f32 %v4891, %v4903
    %v4905 = vpop.f32.mrf.mxu0
    %4906 = vdwg.mxu0
    %4907 = vmatpush.bf16.msra.mxu0 %v4031
    %4908 = vmatpush.bf16.msra.mxu0 %v4017
    %4909 = vmatpush.bf16.msra.mxu0 %v4003
    %4910 = vmatpush.bf16.msra.mxu0 %v3989
    %4911 = vmatpush.bf16.msra.mxu0 %v3975
    %4912 = vmatpush.bf16.msra.mxu0 %v3961
    %4913 = vmatpush.bf16.msra.mxu0 %v3947
    %4914 = vmatpush.bf16.msra.mxu0 %v3933
    %4915 = vmatmul.bf16.gmra.mxu0 %v901
    %v4916 = vpop.f32.mrf.mxu0
    %v4917 = vadd.f32 %v4904, %v4916
    %v4918 = vpop.f32.mrf.mxu0
    %4919 = vdwg.mxu0
    %4920 = vmatpush.bf16.msra.mxu0 %v3360
    %4921 = vmatpush.bf16.msra.mxu0 %v3346
    %4922 = vmatpush.bf16.msra.mxu0 %v3332
    %4923 = vmatpush.bf16.msra.mxu0 %v3318
    %4924 = vmatpush.bf16.msra.mxu0 %v3304
    %4925 = vmatpush.bf16.msra.mxu0 %v3290
    %4926 = vmatpush.bf16.msra.mxu0 %v3276
    %4927 = vmatpush.bf16.msra.mxu0 %v3262
    %4928 = vmatmul.bf16.gmra.mxu0 %v895
    %v4929 = vpop.f32.mrf.mxu0
    %v4930 = vadd.f32 0.0, %v4929
    %v4931 = vpop.f32.mrf.mxu0
    %4932 = vdwg.mxu0
    %4933 = vmatpush.bf16.msra.mxu0 %v3472
    %4934 = vmatpush.bf16.msra.mxu0 %v3458
    %4935 = vmatpush.bf16.msra.mxu0 %v3444
    %4936 = vmatpush.bf16.msra.mxu0 %v3430
    %4937 = vmatpush.bf16.msra.mxu0 %v3416
    %4938 = vmatpush.bf16.msra.mxu0 %v3402
    %4939 = vmatpush.bf16.msra.mxu0 %v3388
    %4940 = vmatpush.bf16.msra.mxu0 %v3374
    %4941 = vmatmul.bf16.gmra.mxu0 %v896
    %v4942 = vpop.f32.mrf.mxu0
    %v4943 = vadd.f32 %v4930, %v4942
    %v4944 = vpop.f32.mrf.mxu0
    %4945 = vdwg.mxu0
    %4946 = vmatpush.bf16.msra.mxu0 %v3584
    %4947 = vmatpush.bf16.msra.mxu0 %v3570
    %4948 = vmatpush.bf16.msra.mxu0 %v3556
    %4949 = vmatpush.bf16.msra.mxu0 %v3542
    %4950 = vmatpush.bf16.msra.mxu0 %v3528
    %4951 = vmatpush.bf16.msra.mxu0 %v3514
    %4952 = vmatpush.bf16.msra.mxu0 %v3500
    %4953 = vmatpush.bf16.msra.mxu0 %v3486
    %4954 = vmatmul.bf16.gmra.mxu0 %v897
    %v4955 = vpop.f32.mrf.mxu0
    %v4956 = vadd.f32 %v4943, %v4955
    %v4957 = vpop.f32.mrf.mxu0
    %4958 = vdwg.mxu0
    %4959 = vmatpush.bf16.msra.mxu0 %v3696
    %4960 = vmatpush.bf16.msra.mxu0 %v3682
    %4961 = vmatpush.bf16.msra.mxu0 %v3668
    %4962 = vmatpush.bf16.msra.mxu0 %v3654
    %4963 = vmatpush.bf16.msra.mxu0 %v3640
    %4964 = vmatpush.bf16.msra.mxu0 %v3626
    %4965 = vmatpush.bf16.msra.mxu0 %v3612
    %4966 = vmatpush.bf16.msra.mxu0 %v3598
    %4967 = vmatmul.bf16.gmra.mxu0 %v898
    %v4968 = vpop.f32.mrf.mxu0
    %v4969 = vadd.f32 %v4956, %v4968
    %v4970 = vpop.f32.mrf.mxu0
    %4971 = vdwg.mxu0
    %4972 = vmatpush.bf16.msra.mxu0 %v3808
    %4973 = vmatpush.bf16.msra.mxu0 %v3794
    %4974 = vmatpush.bf16.msra.mxu0 %v3780
    %4975 = vmatpush.bf16.msra.mxu0 %v3766
    %4976 = vmatpush.bf16.msra.mxu0 %v3752
    %4977 = vmatpush.bf16.msra.mxu0 %v3738
    %4978 = vmatpush.bf16.msra.mxu0 %v3724
    %4979 = vmatpush.bf16.msra.mxu0 %v3710
    %4980 = vmatmul.bf16.gmra.mxu0 %v899
    %v4981 = vpop.f32.mrf.mxu0
    %v4982 = vadd.f32 %v4969, %v4981
    %v4983 = vpop.f32.mrf.mxu0
    %4984 = vdwg.mxu0
    %4985 = vmatpush.bf16.msra.mxu0 %v3920
    %4986 = vmatpush.bf16.msra.mxu0 %v3906
    %4987 = vmatpush.bf16.msra.mxu0 %v3892
    %4988 = vmatpush.bf16.msra.mxu0 %v3878
    %4989 = vmatpush.bf16.msra.mxu0 %v3864
    %4990 = vmatpush.bf16.msra.mxu0 %v3850
    %4991 = vmatpush.bf16.msra.mxu0 %v3836
    %4992 = vmatpush.bf16.msra.mxu0 %v3822
    %4993 = vmatmul.bf16.gmra.mxu0 %v900
    %v4994 = vpop.f32.mrf.mxu0
    %v4995 = vadd.f32 %v4982, %v4994
    %v4996 = vpop.f32.mrf.mxu0
    %4997 = vdwg.mxu0
    %4998 = vmatpush.bf16.msra.mxu0 %v4032
    %4999 = vmatpush.bf16.msra.mxu0 %v4018
    %5000 = vmatpush.bf16.msra.mxu0 %v4004
    %5001 = vmatpush.bf16.msra.mxu0 %v3990
    %5002 = vmatpush.bf16.msra.mxu0 %v3976
    %5003 = vmatpush.bf16.msra.mxu0 %v3962
    %5004 = vmatpush.bf16.msra.mxu0 %v3948
    %5005 = vmatpush.bf16.msra.mxu0 %v3934
    %5006 = vmatmul.bf16.gmra.mxu0 %v901
    %v5007 = vpop.f32.mrf.mxu0
    %v5008 = vadd.f32 %v4995, %v5007
    %v5009 = vpop.f32.mrf.mxu0
    %5010 = vdwg.mxu0
    %5011 = vmatpush.bf16.msra.mxu0 %v3361
    %5012 = vmatpush.bf16.msra.mxu0 %v3347
    %5013 = vmatpush.bf16.msra.mxu0 %v3333
    %5014 = vmatpush.bf16.msra.mxu0 %v3319
    %5015 = vmatpush.bf16.msra.mxu0 %v3305
    %5016 = vmatpush.bf16.msra.mxu0 %v3291
    %5017 = vmatpush.bf16.msra.mxu0 %v3277
    %5018 = vmatpush.bf16.msra.mxu0 %v3263
    %5019 = vmatmul.bf16.gmra.mxu0 %v895
    %v5020 = vpop.f32.mrf.mxu0
    %v5021 = vadd.f32 0.0, %v5020
    %v5022 = vpop.f32.mrf.mxu0
    %5023 = vdwg.mxu0
    %5024 = vmatpush.bf16.msra.mxu0 %v3473
    %5025 = vmatpush.bf16.msra.mxu0 %v3459
    %5026 = vmatpush.bf16.msra.mxu0 %v3445
    %5027 = vmatpush.bf16.msra.mxu0 %v3431
    %5028 = vmatpush.bf16.msra.mxu0 %v3417
    %5029 = vmatpush.bf16.msra.mxu0 %v3403
    %5030 = vmatpush.bf16.msra.mxu0 %v3389
    %5031 = vmatpush.bf16.msra.mxu0 %v3375
    %5032 = vmatmul.bf16.gmra.mxu0 %v896
    %v5033 = vpop.f32.mrf.mxu0
    %v5034 = vadd.f32 %v5021, %v5033
    %v5035 = vpop.f32.mrf.mxu0
    %5036 = vdwg.mxu0
    %5037 = vmatpush.bf16.msra.mxu0 %v3585
    %5038 = vmatpush.bf16.msra.mxu0 %v3571
    %5039 = vmatpush.bf16.msra.mxu0 %v3557
    %5040 = vmatpush.bf16.msra.mxu0 %v3543
    %5041 = vmatpush.bf16.msra.mxu0 %v3529
    %5042 = vmatpush.bf16.msra.mxu0 %v3515
    %5043 = vmatpush.bf16.msra.mxu0 %v3501
    %5044 = vmatpush.bf16.msra.mxu0 %v3487
    %5045 = vmatmul.bf16.gmra.mxu0 %v897
    %v5046 = vpop.f32.mrf.mxu0
    %v5047 = vadd.f32 %v5034, %v5046
    %v5048 = vpop.f32.mrf.mxu0
    %5049 = vdwg.mxu0
    %5050 = vmatpush.bf16.msra.mxu0 %v3697
    %5051 = vmatpush.bf16.msra.mxu0 %v3683
    %5052 = vmatpush.bf16.msra.mxu0 %v3669
    %5053 = vmatpush.bf16.msra.mxu0 %v3655
    %5054 = vmatpush.bf16.msra.mxu0 %v3641
    %5055 = vmatpush.bf16.msra.mxu0 %v3627
    %5056 = vmatpush.bf16.msra.mxu0 %v3613
    %5057 = vmatpush.bf16.msra.mxu0 %v3599
    %5058 = vmatmul.bf16.gmra.mxu0 %v898
    %v5059 = vpop.f32.mrf.mxu0
    %v5060 = vadd.f32 %v5047, %v5059
    %v5061 = vpop.f32.mrf.mxu0
    %5062 = vdwg.mxu0
    %5063 = vmatpush.bf16.msra.mxu0 %v3809
    %5064 = vmatpush.bf16.msra.mxu0 %v3795
    %5065 = vmatpush.bf16.msra.mxu0 %v3781
    %5066 = vmatpush.bf16.msra.mxu0 %v3767
    %5067 = vmatpush.bf16.msra.mxu0 %v3753
    %5068 = vmatpush.bf16.msra.mxu0 %v3739
    %5069 = vmatpush.bf16.msra.mxu0 %v3725
    %5070 = vmatpush.bf16.msra.mxu0 %v3711
    %5071 = vmatmul.bf16.gmra.mxu0 %v899
    %v5072 = vpop.f32.mrf.mxu0
    %v5073 = vadd.f32 %v5060, %v5072
    %v5074 = vpop.f32.mrf.mxu0
    %5075 = vdwg.mxu0
    %5076 = vmatpush.bf16.msra.mxu0 %v3921
    %5077 = vmatpush.bf16.msra.mxu0 %v3907
    %5078 = vmatpush.bf16.msra.mxu0 %v3893
    %5079 = vmatpush.bf16.msra.mxu0 %v3879
    %5080 = vmatpush.bf16.msra.mxu0 %v3865
    %5081 = vmatpush.bf16.msra.mxu0 %v3851
    %5082 = vmatpush.bf16.msra.mxu0 %v3837
    %5083 = vmatpush.bf16.msra.mxu0 %v3823
    %5084 = vmatmul.bf16.gmra.mxu0 %v900
    %v5085 = vpop.f32.mrf.mxu0
    %v5086 = vadd.f32 %v5073, %v5085
    %v5087 = vpop.f32.mrf.mxu0
    %5088 = vdwg.mxu0
    %5089 = vmatpush.bf16.msra.mxu0 %v4033
    %5090 = vmatpush.bf16.msra.mxu0 %v4019
    %5091 = vmatpush.bf16.msra.mxu0 %v4005
    %5092 = vmatpush.bf16.msra.mxu0 %v3991
    %5093 = vmatpush.bf16.msra.mxu0 %v3977
    %5094 = vmatpush.bf16.msra.mxu0 %v3963
    %5095 = vmatpush.bf16.msra.mxu0 %v3949
    %5096 = vmatpush.bf16.msra.mxu0 %v3935
    %5097 = vmatmul.bf16.gmra.mxu0 %v901
    %v5098 = vpop.f32.mrf.mxu0
    %v5099 = vadd.f32 %v5086, %v5098
    %v5100 = vpop.f32.mrf.mxu0
    %5101 = vdwg.mxu0
    %5102 = vmatpush.bf16.msra.mxu0 %v3362
    %5103 = vmatpush.bf16.msra.mxu0 %v3348
    %5104 = vmatpush.bf16.msra.mxu0 %v3334
    %5105 = vmatpush.bf16.msra.mxu0 %v3320
    %5106 = vmatpush.bf16.msra.mxu0 %v3306
    %5107 = vmatpush.bf16.msra.mxu0 %v3292
    %5108 = vmatpush.bf16.msra.mxu0 %v3278
    %5109 = vmatpush.bf16.msra.mxu0 %v3264
    %5110 = vmatmul.bf16.gmra.mxu0 %v895
    %v5111 = vpop.f32.mrf.mxu0
    %v5112 = vadd.f32 0.0, %v5111
    %v5113 = vpop.f32.mrf.mxu0
    %5114 = vdwg.mxu0
    %5115 = vmatpush.bf16.msra.mxu0 %v3474
    %5116 = vmatpush.bf16.msra.mxu0 %v3460
    %5117 = vmatpush.bf16.msra.mxu0 %v3446
    %5118 = vmatpush.bf16.msra.mxu0 %v3432
    %5119 = vmatpush.bf16.msra.mxu0 %v3418
    %5120 = vmatpush.bf16.msra.mxu0 %v3404
    %5121 = vmatpush.bf16.msra.mxu0 %v3390
    %5122 = vmatpush.bf16.msra.mxu0 %v3376
    %5123 = vmatmul.bf16.gmra.mxu0 %v896
    %v5124 = vpop.f32.mrf.mxu0
    %v5125 = vadd.f32 %v5112, %v5124
    %v5126 = vpop.f32.mrf.mxu0
    %5127 = vdwg.mxu0
    %5128 = vmatpush.bf16.msra.mxu0 %v3586
    %5129 = vmatpush.bf16.msra.mxu0 %v3572
    %5130 = vmatpush.bf16.msra.mxu0 %v3558
    %5131 = vmatpush.bf16.msra.mxu0 %v3544
    %5132 = vmatpush.bf16.msra.mxu0 %v3530
    %5133 = vmatpush.bf16.msra.mxu0 %v3516
    %5134 = vmatpush.bf16.msra.mxu0 %v3502
    %5135 = vmatpush.bf16.msra.mxu0 %v3488
    %5136 = vmatmul.bf16.gmra.mxu0 %v897
    %v5137 = vpop.f32.mrf.mxu0
    %v5138 = vadd.f32 %v5125, %v5137
    %v5139 = vpop.f32.mrf.mxu0
    %5140 = vdwg.mxu0
    %5141 = vmatpush.bf16.msra.mxu0 %v3698
    %5142 = vmatpush.bf16.msra.mxu0 %v3684
    %5143 = vmatpush.bf16.msra.mxu0 %v3670
    %5144 = vmatpush.bf16.msra.mxu0 %v3656
    %5145 = vmatpush.bf16.msra.mxu0 %v3642
    %5146 = vmatpush.bf16.msra.mxu0 %v3628
    %5147 = vmatpush.bf16.msra.mxu0 %v3614
    %5148 = vmatpush.bf16.msra.mxu0 %v3600
    %5149 = vmatmul.bf16.gmra.mxu0 %v898
    %v5150 = vpop.f32.mrf.mxu0
    %v5151 = vadd.f32 %v5138, %v5150
    %v5152 = vpop.f32.mrf.mxu0
    %5153 = vdwg.mxu0
    %5154 = vmatpush.bf16.msra.mxu0 %v3810
    %5155 = vmatpush.bf16.msra.mxu0 %v3796
    %5156 = vmatpush.bf16.msra.mxu0 %v3782
    %5157 = vmatpush.bf16.msra.mxu0 %v3768
    %5158 = vmatpush.bf16.msra.mxu0 %v3754
    %5159 = vmatpush.bf16.msra.mxu0 %v3740
    %5160 = vmatpush.bf16.msra.mxu0 %v3726
    %5161 = vmatpush.bf16.msra.mxu0 %v3712
    %5162 = vmatmul.bf16.gmra.mxu0 %v899
    %v5163 = vpop.f32.mrf.mxu0
    %v5164 = vadd.f32 %v5151, %v5163
    %v5165 = vpop.f32.mrf.mxu0
    %5166 = vdwg.mxu0
    %5167 = vmatpush.bf16.msra.mxu0 %v3922
    %5168 = vmatpush.bf16.msra.mxu0 %v3908
    %5169 = vmatpush.bf16.msra.mxu0 %v3894
    %5170 = vmatpush.bf16.msra.mxu0 %v3880
    %5171 = vmatpush.bf16.msra.mxu0 %v3866
    %5172 = vmatpush.bf16.msra.mxu0 %v3852
    %5173 = vmatpush.bf16.msra.mxu0 %v3838
    %5174 = vmatpush.bf16.msra.mxu0 %v3824
    %5175 = vmatmul.bf16.gmra.mxu0 %v900
    %v5176 = vpop.f32.mrf.mxu0
    %v5177 = vadd.f32 %v5164, %v5176
    %v5178 = vpop.f32.mrf.mxu0
    %5179 = vdwg.mxu0
    %5180 = vmatpush.bf16.msra.mxu0 %v4034
    %5181 = vmatpush.bf16.msra.mxu0 %v4020
    %5182 = vmatpush.bf16.msra.mxu0 %v4006
    %5183 = vmatpush.bf16.msra.mxu0 %v3992
    %5184 = vmatpush.bf16.msra.mxu0 %v3978
    %5185 = vmatpush.bf16.msra.mxu0 %v3964
    %5186 = vmatpush.bf16.msra.mxu0 %v3950
    %5187 = vmatpush.bf16.msra.mxu0 %v3936
    %5188 = vmatmul.bf16.gmra.mxu0 %v901
    %v5189 = vpop.f32.mrf.mxu0
    %v5190 = vadd.f32 %v5177, %v5189
    %v5191 = vpop.f32.mrf.mxu0
    %5192 = vdwg.mxu0
    %5193 = vmatpush.bf16.msra.mxu0 %v3363
    %5194 = vmatpush.bf16.msra.mxu0 %v3349
    %5195 = vmatpush.bf16.msra.mxu0 %v3335
    %5196 = vmatpush.bf16.msra.mxu0 %v3321
    %5197 = vmatpush.bf16.msra.mxu0 %v3307
    %5198 = vmatpush.bf16.msra.mxu0 %v3293
    %5199 = vmatpush.bf16.msra.mxu0 %v3279
    %5200 = vmatpush.bf16.msra.mxu0 %v3265
    %5201 = vmatmul.bf16.gmra.mxu0 %v895
    %v5202 = vpop.f32.mrf.mxu0
    %v5203 = vadd.f32 0.0, %v5202
    %v5204 = vpop.f32.mrf.mxu0
    %5205 = vdwg.mxu0
    %5206 = vmatpush.bf16.msra.mxu0 %v3475
    %5207 = vmatpush.bf16.msra.mxu0 %v3461
    %5208 = vmatpush.bf16.msra.mxu0 %v3447
    %5209 = vmatpush.bf16.msra.mxu0 %v3433
    %5210 = vmatpush.bf16.msra.mxu0 %v3419
    %5211 = vmatpush.bf16.msra.mxu0 %v3405
    %5212 = vmatpush.bf16.msra.mxu0 %v3391
    %5213 = vmatpush.bf16.msra.mxu0 %v3377
    %5214 = vmatmul.bf16.gmra.mxu0 %v896
    %v5215 = vpop.f32.mrf.mxu0
    %v5216 = vadd.f32 %v5203, %v5215
    %v5217 = vpop.f32.mrf.mxu0
    %5218 = vdwg.mxu0
    %5219 = vmatpush.bf16.msra.mxu0 %v3587
    %5220 = vmatpush.bf16.msra.mxu0 %v3573
    %5221 = vmatpush.bf16.msra.mxu0 %v3559
    %5222 = vmatpush.bf16.msra.mxu0 %v3545
    %5223 = vmatpush.bf16.msra.mxu0 %v3531
    %5224 = vmatpush.bf16.msra.mxu0 %v3517
    %5225 = vmatpush.bf16.msra.mxu0 %v3503
    %5226 = vmatpush.bf16.msra.mxu0 %v3489
    %5227 = vmatmul.bf16.gmra.mxu0 %v897
    %v5228 = vpop.f32.mrf.mxu0
    %v5229 = vadd.f32 %v5216, %v5228
    %v5230 = vpop.f32.mrf.mxu0
    %5231 = vdwg.mxu0
    %5232 = vmatpush.bf16.msra.mxu0 %v3699
    %5233 = vmatpush.bf16.msra.mxu0 %v3685
    %5234 = vmatpush.bf16.msra.mxu0 %v3671
    %5235 = vmatpush.bf16.msra.mxu0 %v3657
    %5236 = vmatpush.bf16.msra.mxu0 %v3643
    %5237 = vmatpush.bf16.msra.mxu0 %v3629
    %5238 = vmatpush.bf16.msra.mxu0 %v3615
    %5239 = vmatpush.bf16.msra.mxu0 %v3601
    %5240 = vmatmul.bf16.gmra.mxu0 %v898
    %v5241 = vpop.f32.mrf.mxu0
    %v5242 = vadd.f32 %v5229, %v5241
    %v5243 = vpop.f32.mrf.mxu0
    %5244 = vdwg.mxu0
    %5245 = vmatpush.bf16.msra.mxu0 %v3811
    %5246 = vmatpush.bf16.msra.mxu0 %v3797
    %5247 = vmatpush.bf16.msra.mxu0 %v3783
    %5248 = vmatpush.bf16.msra.mxu0 %v3769
    %5249 = vmatpush.bf16.msra.mxu0 %v3755
    %5250 = vmatpush.bf16.msra.mxu0 %v3741
    %5251 = vmatpush.bf16.msra.mxu0 %v3727
    %5252 = vmatpush.bf16.msra.mxu0 %v3713
    %5253 = vmatmul.bf16.gmra.mxu0 %v899
    %v5254 = vpop.f32.mrf.mxu0
    %v5255 = vadd.f32 %v5242, %v5254
    %v5256 = vpop.f32.mrf.mxu0
    %5257 = vdwg.mxu0
    %5258 = vmatpush.bf16.msra.mxu0 %v3923
    %5259 = vmatpush.bf16.msra.mxu0 %v3909
    %5260 = vmatpush.bf16.msra.mxu0 %v3895
    %5261 = vmatpush.bf16.msra.mxu0 %v3881
    %5262 = vmatpush.bf16.msra.mxu0 %v3867
    %5263 = vmatpush.bf16.msra.mxu0 %v3853
    %5264 = vmatpush.bf16.msra.mxu0 %v3839
    %5265 = vmatpush.bf16.msra.mxu0 %v3825
    %5266 = vmatmul.bf16.gmra.mxu0 %v900
    %v5267 = vpop.f32.mrf.mxu0
    %v5268 = vadd.f32 %v5255, %v5267
    %v5269 = vpop.f32.mrf.mxu0
    %5270 = vdwg.mxu0
    %5271 = vmatpush.bf16.msra.mxu0 %v4035
    %5272 = vmatpush.bf16.msra.mxu0 %v4021
    %5273 = vmatpush.bf16.msra.mxu0 %v4007
    %5274 = vmatpush.bf16.msra.mxu0 %v3993
    %5275 = vmatpush.bf16.msra.mxu0 %v3979
    %5276 = vmatpush.bf16.msra.mxu0 %v3965
    %5277 = vmatpush.bf16.msra.mxu0 %v3951
    %5278 = vmatpush.bf16.msra.mxu0 %v3937
    %5279 = vmatmul.bf16.gmra.mxu0 %v901
    %v5280 = vpop.f32.mrf.mxu0
    %v5281 = vadd.f32 %v5268, %v5280
    %v5282 = vpop.f32.mrf.mxu0
    %5283 = vdwg.mxu0
    %5284 = vmatpush.bf16.msra.mxu0 %v3364
    %5285 = vmatpush.bf16.msra.mxu0 %v3350
    %5286 = vmatpush.bf16.msra.mxu0 %v3336
    %5287 = vmatpush.bf16.msra.mxu0 %v3322
    %5288 = vmatpush.bf16.msra.mxu0 %v3308
    %5289 = vmatpush.bf16.msra.mxu0 %v3294
    %5290 = vmatpush.bf16.msra.mxu0 %v3280
    %5291 = vmatpush.bf16.msra.mxu0 %v3266
    %5292 = vmatmul.bf16.gmra.mxu0 %v895
    %v5293 = vpop.f32.mrf.mxu0
    %v5294 = vadd.f32 0.0, %v5293
    %v5295 = vpop.f32.mrf.mxu0
    %5296 = vdwg.mxu0
    %5297 = vmatpush.bf16.msra.mxu0 %v3476
    %5298 = vmatpush.bf16.msra.mxu0 %v3462
    %5299 = vmatpush.bf16.msra.mxu0 %v3448
    %5300 = vmatpush.bf16.msra.mxu0 %v3434
    %5301 = vmatpush.bf16.msra.mxu0 %v3420
    %5302 = vmatpush.bf16.msra.mxu0 %v3406
    %5303 = vmatpush.bf16.msra.mxu0 %v3392
    %5304 = vmatpush.bf16.msra.mxu0 %v3378
    %5305 = vmatmul.bf16.gmra.mxu0 %v896
    %v5306 = vpop.f32.mrf.mxu0
    %v5307 = vadd.f32 %v5294, %v5306
    %v5308 = vpop.f32.mrf.mxu0
    %5309 = vdwg.mxu0
    %5310 = vmatpush.bf16.msra.mxu0 %v3588
    %5311 = vmatpush.bf16.msra.mxu0 %v3574
    %5312 = vmatpush.bf16.msra.mxu0 %v3560
    %5313 = vmatpush.bf16.msra.mxu0 %v3546
    %5314 = vmatpush.bf16.msra.mxu0 %v3532
    %5315 = vmatpush.bf16.msra.mxu0 %v3518
    %5316 = vmatpush.bf16.msra.mxu0 %v3504
    %5317 = vmatpush.bf16.msra.mxu0 %v3490
    %5318 = vmatmul.bf16.gmra.mxu0 %v897
    %v5319 = vpop.f32.mrf.mxu0
    %v5320 = vadd.f32 %v5307, %v5319
    %v5321 = vpop.f32.mrf.mxu0
    %5322 = vdwg.mxu0
    %5323 = vmatpush.bf16.msra.mxu0 %v3700
    %5324 = vmatpush.bf16.msra.mxu0 %v3686
    %5325 = vmatpush.bf16.msra.mxu0 %v3672
    %5326 = vmatpush.bf16.msra.mxu0 %v3658
    %5327 = vmatpush.bf16.msra.mxu0 %v3644
    %5328 = vmatpush.bf16.msra.mxu0 %v3630
    %5329 = vmatpush.bf16.msra.mxu0 %v3616
    %5330 = vmatpush.bf16.msra.mxu0 %v3602
    %5331 = vmatmul.bf16.gmra.mxu0 %v898
    %v5332 = vpop.f32.mrf.mxu0
    %v5333 = vadd.f32 %v5320, %v5332
    %v5334 = vpop.f32.mrf.mxu0
    %5335 = vdwg.mxu0
    %5336 = vmatpush.bf16.msra.mxu0 %v3812
    %5337 = vmatpush.bf16.msra.mxu0 %v3798
    %5338 = vmatpush.bf16.msra.mxu0 %v3784
    %5339 = vmatpush.bf16.msra.mxu0 %v3770
    %5340 = vmatpush.bf16.msra.mxu0 %v3756
    %5341 = vmatpush.bf16.msra.mxu0 %v3742
    %5342 = vmatpush.bf16.msra.mxu0 %v3728
    %5343 = vmatpush.bf16.msra.mxu0 %v3714
    %5344 = vmatmul.bf16.gmra.mxu0 %v899
    %v5345 = vpop.f32.mrf.mxu0
    %v5346 = vadd.f32 %v5333, %v5345
    %v5347 = vpop.f32.mrf.mxu0
    %5348 = vdwg.mxu0
    %5349 = vmatpush.bf16.msra.mxu0 %v3924
    %5350 = vmatpush.bf16.msra.mxu0 %v3910
    %5351 = vmatpush.bf16.msra.mxu0 %v3896
    %5352 = vmatpush.bf16.msra.mxu0 %v3882
    %5353 = vmatpush.bf16.msra.mxu0 %v3868
    %5354 = vmatpush.bf16.msra.mxu0 %v3854
    %5355 = vmatpush.bf16.msra.mxu0 %v3840
    %5356 = vmatpush.bf16.msra.mxu0 %v3826
    %5357 = vmatmul.bf16.gmra.mxu0 %v900
    %v5358 = vpop.f32.mrf.mxu0
    %v5359 = vadd.f32 %v5346, %v5358
    %v5360 = vpop.f32.mrf.mxu0
    %5361 = vdwg.mxu0
    %5362 = vmatpush.bf16.msra.mxu0 %v4036
    %5363 = vmatpush.bf16.msra.mxu0 %v4022
    %5364 = vmatpush.bf16.msra.mxu0 %v4008
    %5365 = vmatpush.bf16.msra.mxu0 %v3994
    %5366 = vmatpush.bf16.msra.mxu0 %v3980
    %5367 = vmatpush.bf16.msra.mxu0 %v3966
    %5368 = vmatpush.bf16.msra.mxu0 %v3952
    %5369 = vmatpush.bf16.msra.mxu0 %v3938
    %5370 = vmatmul.bf16.gmra.mxu0 %v901
    %v5371 = vpop.f32.mrf.mxu0
    %v5372 = vadd.f32 %v5359, %v5371
    %v5373 = vpop.f32.mrf.mxu0
    %5374 = vdwg.mxu0
    %5375 = vmatpush.bf16.msra.mxu0 %v3365
    %5376 = vmatpush.bf16.msra.mxu0 %v3351
    %5377 = vmatpush.bf16.msra.mxu0 %v3337
    %5378 = vmatpush.bf16.msra.mxu0 %v3323
    %5379 = vmatpush.bf16.msra.mxu0 %v3309
    %5380 = vmatpush.bf16.msra.mxu0 %v3295
    %5381 = vmatpush.bf16.msra.mxu0 %v3281
    %5382 = vmatpush.bf16.msra.mxu0 %v3267
    %5383 = vmatmul.bf16.gmra.mxu0 %v895
    %v5384 = vpop.f32.mrf.mxu0
    %v5385 = vadd.f32 0.0, %v5384
    %v5386 = vpop.f32.mrf.mxu0
    %5387 = vdwg.mxu0
    %5388 = vmatpush.bf16.msra.mxu0 %v3477
    %5389 = vmatpush.bf16.msra.mxu0 %v3463
    %5390 = vmatpush.bf16.msra.mxu0 %v3449
    %5391 = vmatpush.bf16.msra.mxu0 %v3435
    %5392 = vmatpush.bf16.msra.mxu0 %v3421
    %5393 = vmatpush.bf16.msra.mxu0 %v3407
    %5394 = vmatpush.bf16.msra.mxu0 %v3393
    %5395 = vmatpush.bf16.msra.mxu0 %v3379
    %5396 = vmatmul.bf16.gmra.mxu0 %v896
    %v5397 = vpop.f32.mrf.mxu0
    %v5398 = vadd.f32 %v5385, %v5397
    %v5399 = vpop.f32.mrf.mxu0
    %5400 = vdwg.mxu0
    %5401 = vmatpush.bf16.msra.mxu0 %v3589
    %5402 = vmatpush.bf16.msra.mxu0 %v3575
    %5403 = vmatpush.bf16.msra.mxu0 %v3561
    %5404 = vmatpush.bf16.msra.mxu0 %v3547
    %5405 = vmatpush.bf16.msra.mxu0 %v3533
    %5406 = vmatpush.bf16.msra.mxu0 %v3519
    %5407 = vmatpush.bf16.msra.mxu0 %v3505
    %5408 = vmatpush.bf16.msra.mxu0 %v3491
    %5409 = vmatmul.bf16.gmra.mxu0 %v897
    %v5410 = vpop.f32.mrf.mxu0
    %v5411 = vadd.f32 %v5398, %v5410
    %v5412 = vpop.f32.mrf.mxu0
    %5413 = vdwg.mxu0
    %5414 = vmatpush.bf16.msra.mxu0 %v3701
    %5415 = vmatpush.bf16.msra.mxu0 %v3687
    %5416 = vmatpush.bf16.msra.mxu0 %v3673
    %5417 = vmatpush.bf16.msra.mxu0 %v3659
    %5418 = vmatpush.bf16.msra.mxu0 %v3645
    %5419 = vmatpush.bf16.msra.mxu0 %v3631
    %5420 = vmatpush.bf16.msra.mxu0 %v3617
    %5421 = vmatpush.bf16.msra.mxu0 %v3603
    %5422 = vmatmul.bf16.gmra.mxu0 %v898
    %v5423 = vpop.f32.mrf.mxu0
    %v5424 = vadd.f32 %v5411, %v5423
    %v5425 = vpop.f32.mrf.mxu0
    %5426 = vdwg.mxu0
    %5427 = vmatpush.bf16.msra.mxu0 %v3813
    %5428 = vmatpush.bf16.msra.mxu0 %v3799
    %5429 = vmatpush.bf16.msra.mxu0 %v3785
    %5430 = vmatpush.bf16.msra.mxu0 %v3771
    %5431 = vmatpush.bf16.msra.mxu0 %v3757
    %5432 = vmatpush.bf16.msra.mxu0 %v3743
    %5433 = vmatpush.bf16.msra.mxu0 %v3729
    %5434 = vmatpush.bf16.msra.mxu0 %v3715
    %5435 = vmatmul.bf16.gmra.mxu0 %v899
    %v5436 = vpop.f32.mrf.mxu0
    %v5437 = vadd.f32 %v5424, %v5436
    %v5438 = vpop.f32.mrf.mxu0
    %5439 = vdwg.mxu0
    %5440 = vmatpush.bf16.msra.mxu0 %v3925
    %5441 = vmatpush.bf16.msra.mxu0 %v3911
    %5442 = vmatpush.bf16.msra.mxu0 %v3897
    %5443 = vmatpush.bf16.msra.mxu0 %v3883
    %5444 = vmatpush.bf16.msra.mxu0 %v3869
    %5445 = vmatpush.bf16.msra.mxu0 %v3855
    %5446 = vmatpush.bf16.msra.mxu0 %v3841
    %5447 = vmatpush.bf16.msra.mxu0 %v3827
    %5448 = vmatmul.bf16.gmra.mxu0 %v900
    %v5449 = vpop.f32.mrf.mxu0
    %v5450 = vadd.f32 %v5437, %v5449
    %v5451 = vpop.f32.mrf.mxu0
    %5452 = vdwg.mxu0
    %5453 = vmatpush.bf16.msra.mxu0 %v4037
    %5454 = vmatpush.bf16.msra.mxu0 %v4023
    %5455 = vmatpush.bf16.msra.mxu0 %v4009
    %5456 = vmatpush.bf16.msra.mxu0 %v3995
    %5457 = vmatpush.bf16.msra.mxu0 %v3981
    %5458 = vmatpush.bf16.msra.mxu0 %v3967
    %5459 = vmatpush.bf16.msra.mxu0 %v3953
    %5460 = vmatpush.bf16.msra.mxu0 %v3939
    %5461 = vmatmul.bf16.gmra.mxu0 %v901
    %v5462 = vpop.f32.mrf.mxu0
    %v5463 = vadd.f32 %v5450, %v5462
    %v5464 = vpop.f32.mrf.mxu0
    %5465 = vdwg.mxu0
    %5466 = vmatpush.bf16.msra.mxu0 %v3366
    %5467 = vmatpush.bf16.msra.mxu0 %v3352
    %5468 = vmatpush.bf16.msra.mxu0 %v3338
    %5469 = vmatpush.bf16.msra.mxu0 %v3324
    %5470 = vmatpush.bf16.msra.mxu0 %v3310
    %5471 = vmatpush.bf16.msra.mxu0 %v3296
    %5472 = vmatpush.bf16.msra.mxu0 %v3282
    %5473 = vmatpush.bf16.msra.mxu0 %v3268
    %5474 = vmatmul.bf16.gmra.mxu0 %v895
    %v5475 = vpop.f32.mrf.mxu0
    %v5476 = vadd.f32 0.0, %v5475
    %v5477 = vpop.f32.mrf.mxu0
    %5478 = vdwg.mxu0
    %5479 = vmatpush.bf16.msra.mxu0 %v3478
    %5480 = vmatpush.bf16.msra.mxu0 %v3464
    %5481 = vmatpush.bf16.msra.mxu0 %v3450
    %5482 = vmatpush.bf16.msra.mxu0 %v3436
    %5483 = vmatpush.bf16.msra.mxu0 %v3422
    %5484 = vmatpush.bf16.msra.mxu0 %v3408
    %5485 = vmatpush.bf16.msra.mxu0 %v3394
    %5486 = vmatpush.bf16.msra.mxu0 %v3380
    %5487 = vmatmul.bf16.gmra.mxu0 %v896
    %v5488 = vpop.f32.mrf.mxu0
    %v5489 = vadd.f32 %v5476, %v5488
    %v5490 = vpop.f32.mrf.mxu0
    %5491 = vdwg.mxu0
    %5492 = vmatpush.bf16.msra.mxu0 %v3590
    %5493 = vmatpush.bf16.msra.mxu0 %v3576
    %5494 = vmatpush.bf16.msra.mxu0 %v3562
    %5495 = vmatpush.bf16.msra.mxu0 %v3548
    %5496 = vmatpush.bf16.msra.mxu0 %v3534
    %5497 = vmatpush.bf16.msra.mxu0 %v3520
    %5498 = vmatpush.bf16.msra.mxu0 %v3506
    %5499 = vmatpush.bf16.msra.mxu0 %v3492
    %5500 = vmatmul.bf16.gmra.mxu0 %v897
    %v5501 = vpop.f32.mrf.mxu0
    %v5502 = vadd.f32 %v5489, %v5501
    %v5503 = vpop.f32.mrf.mxu0
    %5504 = vdwg.mxu0
    %5505 = vmatpush.bf16.msra.mxu0 %v3702
    %5506 = vmatpush.bf16.msra.mxu0 %v3688
    %5507 = vmatpush.bf16.msra.mxu0 %v3674
    %5508 = vmatpush.bf16.msra.mxu0 %v3660
    %5509 = vmatpush.bf16.msra.mxu0 %v3646
    %5510 = vmatpush.bf16.msra.mxu0 %v3632
    %5511 = vmatpush.bf16.msra.mxu0 %v3618
    %5512 = vmatpush.bf16.msra.mxu0 %v3604
    %5513 = vmatmul.bf16.gmra.mxu0 %v898
    %v5514 = vpop.f32.mrf.mxu0
    %v5515 = vadd.f32 %v5502, %v5514
    %v5516 = vpop.f32.mrf.mxu0
    %5517 = vdwg.mxu0
    %5518 = vmatpush.bf16.msra.mxu0 %v3814
    %5519 = vmatpush.bf16.msra.mxu0 %v3800
    %5520 = vmatpush.bf16.msra.mxu0 %v3786
    %5521 = vmatpush.bf16.msra.mxu0 %v3772
    %5522 = vmatpush.bf16.msra.mxu0 %v3758
    %5523 = vmatpush.bf16.msra.mxu0 %v3744
    %5524 = vmatpush.bf16.msra.mxu0 %v3730
    %5525 = vmatpush.bf16.msra.mxu0 %v3716
    %5526 = vmatmul.bf16.gmra.mxu0 %v899
    %v5527 = vpop.f32.mrf.mxu0
    %v5528 = vadd.f32 %v5515, %v5527
    %v5529 = vpop.f32.mrf.mxu0
    %5530 = vdwg.mxu0
    %5531 = vmatpush.bf16.msra.mxu0 %v3926
    %5532 = vmatpush.bf16.msra.mxu0 %v3912
    %5533 = vmatpush.bf16.msra.mxu0 %v3898
    %5534 = vmatpush.bf16.msra.mxu0 %v3884
    %5535 = vmatpush.bf16.msra.mxu0 %v3870
    %5536 = vmatpush.bf16.msra.mxu0 %v3856
    %5537 = vmatpush.bf16.msra.mxu0 %v3842
    %5538 = vmatpush.bf16.msra.mxu0 %v3828
    %5539 = vmatmul.bf16.gmra.mxu0 %v900
    %v5540 = vpop.f32.mrf.mxu0
    %v5541 = vadd.f32 %v5528, %v5540
    %v5542 = vpop.f32.mrf.mxu0
    %5543 = vdwg.mxu0
    %5544 = vmatpush.bf16.msra.mxu0 %v4038
    %5545 = vmatpush.bf16.msra.mxu0 %v4024
    %5546 = vmatpush.bf16.msra.mxu0 %v4010
    %5547 = vmatpush.bf16.msra.mxu0 %v3996
    %5548 = vmatpush.bf16.msra.mxu0 %v3982
    %5549 = vmatpush.bf16.msra.mxu0 %v3968
    %5550 = vmatpush.bf16.msra.mxu0 %v3954
    %5551 = vmatpush.bf16.msra.mxu0 %v3940
    %5552 = vmatmul.bf16.gmra.mxu0 %v901
    %v5553 = vpop.f32.mrf.mxu0
    %v5554 = vadd.f32 %v5541, %v5553
    %v5555 = vpop.f32.mrf.mxu0
    %5556 = vdwg.mxu0
    %5557 = vmatpush.bf16.msra.mxu0 %v3367
    %5558 = vmatpush.bf16.msra.mxu0 %v3353
    %5559 = vmatpush.bf16.msra.mxu0 %v3339
    %5560 = vmatpush.bf16.msra.mxu0 %v3325
    %5561 = vmatpush.bf16.msra.mxu0 %v3311
    %5562 = vmatpush.bf16.msra.mxu0 %v3297
    %5563 = vmatpush.bf16.msra.mxu0 %v3283
    %5564 = vmatpush.bf16.msra.mxu0 %v3269
    %5565 = vmatmul.bf16.gmra.mxu0 %v895
    %v5566 = vpop.f32.mrf.mxu0
    %v5567 = vadd.f32 0.0, %v5566
    %v5568 = vpop.f32.mrf.mxu0
    %5569 = vdwg.mxu0
    %5570 = vmatpush.bf16.msra.mxu0 %v3479
    %5571 = vmatpush.bf16.msra.mxu0 %v3465
    %5572 = vmatpush.bf16.msra.mxu0 %v3451
    %5573 = vmatpush.bf16.msra.mxu0 %v3437
    %5574 = vmatpush.bf16.msra.mxu0 %v3423
    %5575 = vmatpush.bf16.msra.mxu0 %v3409
    %5576 = vmatpush.bf16.msra.mxu0 %v3395
    %5577 = vmatpush.bf16.msra.mxu0 %v3381
    %5578 = vmatmul.bf16.gmra.mxu0 %v896
    %v5579 = vpop.f32.mrf.mxu0
    %v5580 = vadd.f32 %v5567, %v5579
    %v5581 = vpop.f32.mrf.mxu0
    %5582 = vdwg.mxu0
    %5583 = vmatpush.bf16.msra.mxu0 %v3591
    %5584 = vmatpush.bf16.msra.mxu0 %v3577
    %5585 = vmatpush.bf16.msra.mxu0 %v3563
    %5586 = vmatpush.bf16.msra.mxu0 %v3549
    %5587 = vmatpush.bf16.msra.mxu0 %v3535
    %5588 = vmatpush.bf16.msra.mxu0 %v3521
    %5589 = vmatpush.bf16.msra.mxu0 %v3507
    %5590 = vmatpush.bf16.msra.mxu0 %v3493
    %5591 = vmatmul.bf16.gmra.mxu0 %v897
    %v5592 = vpop.f32.mrf.mxu0
    %v5593 = vadd.f32 %v5580, %v5592
    %v5594 = vpop.f32.mrf.mxu0
    %5595 = vdwg.mxu0
    %5596 = vmatpush.bf16.msra.mxu0 %v3703
    %5597 = vmatpush.bf16.msra.mxu0 %v3689
    %5598 = vmatpush.bf16.msra.mxu0 %v3675
    %5599 = vmatpush.bf16.msra.mxu0 %v3661
    %5600 = vmatpush.bf16.msra.mxu0 %v3647
    %5601 = vmatpush.bf16.msra.mxu0 %v3633
    %5602 = vmatpush.bf16.msra.mxu0 %v3619
    %5603 = vmatpush.bf16.msra.mxu0 %v3605
    %5604 = vmatmul.bf16.gmra.mxu0 %v898
    %v5605 = vpop.f32.mrf.mxu0
    %v5606 = vadd.f32 %v5593, %v5605
    %v5607 = vpop.f32.mrf.mxu0
    %5608 = vdwg.mxu0
    %5609 = vmatpush.bf16.msra.mxu0 %v3815
    %5610 = vmatpush.bf16.msra.mxu0 %v3801
    %5611 = vmatpush.bf16.msra.mxu0 %v3787
    %5612 = vmatpush.bf16.msra.mxu0 %v3773
    %5613 = vmatpush.bf16.msra.mxu0 %v3759
    %5614 = vmatpush.bf16.msra.mxu0 %v3745
    %5615 = vmatpush.bf16.msra.mxu0 %v3731
    %5616 = vmatpush.bf16.msra.mxu0 %v3717
    %5617 = vmatmul.bf16.gmra.mxu0 %v899
    %v5618 = vpop.f32.mrf.mxu0
    %v5619 = vadd.f32 %v5606, %v5618
    %v5620 = vpop.f32.mrf.mxu0
    %5621 = vdwg.mxu0
    %5622 = vmatpush.bf16.msra.mxu0 %v3927
    %5623 = vmatpush.bf16.msra.mxu0 %v3913
    %5624 = vmatpush.bf16.msra.mxu0 %v3899
    %5625 = vmatpush.bf16.msra.mxu0 %v3885
    %5626 = vmatpush.bf16.msra.mxu0 %v3871
    %5627 = vmatpush.bf16.msra.mxu0 %v3857
    %5628 = vmatpush.bf16.msra.mxu0 %v3843
    %5629 = vmatpush.bf16.msra.mxu0 %v3829
    %5630 = vmatmul.bf16.gmra.mxu0 %v900
    %v5631 = vpop.f32.mrf.mxu0
    %v5632 = vadd.f32 %v5619, %v5631
    %v5633 = vpop.f32.mrf.mxu0
    %5634 = vdwg.mxu0
    %5635 = vmatpush.bf16.msra.mxu0 %v4039
    %5636 = vmatpush.bf16.msra.mxu0 %v4025
    %5637 = vmatpush.bf16.msra.mxu0 %v4011
    %5638 = vmatpush.bf16.msra.mxu0 %v3997
    %5639 = vmatpush.bf16.msra.mxu0 %v3983
    %5640 = vmatpush.bf16.msra.mxu0 %v3969
    %5641 = vmatpush.bf16.msra.mxu0 %v3955
    %5642 = vmatpush.bf16.msra.mxu0 %v3941
    %5643 = vmatmul.bf16.gmra.mxu0 %v901
    %v5644 = vpop.f32.mrf.mxu0
    %v5645 = vadd.f32 %v5632, %v5644
    %v5646 = vpop.f32.mrf.mxu0
    %5647 = vdwg.mxu0
    %5648 = vmatpush.bf16.msra.mxu0 %v3368
    %5649 = vmatpush.bf16.msra.mxu0 %v3354
    %5650 = vmatpush.bf16.msra.mxu0 %v3340
    %5651 = vmatpush.bf16.msra.mxu0 %v3326
    %5652 = vmatpush.bf16.msra.mxu0 %v3312
    %5653 = vmatpush.bf16.msra.mxu0 %v3298
    %5654 = vmatpush.bf16.msra.mxu0 %v3284
    %5655 = vmatpush.bf16.msra.mxu0 %v3270
    %5656 = vmatmul.bf16.gmra.mxu0 %v895
    %v5657 = vpop.f32.mrf.mxu0
    %v5658 = vadd.f32 0.0, %v5657
    %v5659 = vpop.f32.mrf.mxu0
    %5660 = vdwg.mxu0
    %5661 = vmatpush.bf16.msra.mxu0 %v3480
    %5662 = vmatpush.bf16.msra.mxu0 %v3466
    %5663 = vmatpush.bf16.msra.mxu0 %v3452
    %5664 = vmatpush.bf16.msra.mxu0 %v3438
    %5665 = vmatpush.bf16.msra.mxu0 %v3424
    %5666 = vmatpush.bf16.msra.mxu0 %v3410
    %5667 = vmatpush.bf16.msra.mxu0 %v3396
    %5668 = vmatpush.bf16.msra.mxu0 %v3382
    %5669 = vmatmul.bf16.gmra.mxu0 %v896
    %v5670 = vpop.f32.mrf.mxu0
    %v5671 = vadd.f32 %v5658, %v5670
    %v5672 = vpop.f32.mrf.mxu0
    %5673 = vdwg.mxu0
    %5674 = vmatpush.bf16.msra.mxu0 %v3592
    %5675 = vmatpush.bf16.msra.mxu0 %v3578
    %5676 = vmatpush.bf16.msra.mxu0 %v3564
    %5677 = vmatpush.bf16.msra.mxu0 %v3550
    %5678 = vmatpush.bf16.msra.mxu0 %v3536
    %5679 = vmatpush.bf16.msra.mxu0 %v3522
    %5680 = vmatpush.bf16.msra.mxu0 %v3508
    %5681 = vmatpush.bf16.msra.mxu0 %v3494
    %5682 = vmatmul.bf16.gmra.mxu0 %v897
    %v5683 = vpop.f32.mrf.mxu0
    %v5684 = vadd.f32 %v5671, %v5683
    %v5685 = vpop.f32.mrf.mxu0
    %5686 = vdwg.mxu0
    %5687 = vmatpush.bf16.msra.mxu0 %v3704
    %5688 = vmatpush.bf16.msra.mxu0 %v3690
    %5689 = vmatpush.bf16.msra.mxu0 %v3676
    %5690 = vmatpush.bf16.msra.mxu0 %v3662
    %5691 = vmatpush.bf16.msra.mxu0 %v3648
    %5692 = vmatpush.bf16.msra.mxu0 %v3634
    %5693 = vmatpush.bf16.msra.mxu0 %v3620
    %5694 = vmatpush.bf16.msra.mxu0 %v3606
    %5695 = vmatmul.bf16.gmra.mxu0 %v898
    %v5696 = vpop.f32.mrf.mxu0
    %v5697 = vadd.f32 %v5684, %v5696
    %v5698 = vpop.f32.mrf.mxu0
    %5699 = vdwg.mxu0
    %5700 = vmatpush.bf16.msra.mxu0 %v3816
    %5701 = vmatpush.bf16.msra.mxu0 %v3802
    %5702 = vmatpush.bf16.msra.mxu0 %v3788
    %5703 = vmatpush.bf16.msra.mxu0 %v3774
    %5704 = vmatpush.bf16.msra.mxu0 %v3760
    %5705 = vmatpush.bf16.msra.mxu0 %v3746
    %5706 = vmatpush.bf16.msra.mxu0 %v3732
    %5707 = vmatpush.bf16.msra.mxu0 %v3718
    %5708 = vmatmul.bf16.gmra.mxu0 %v899
    %v5709 = vpop.f32.mrf.mxu0
    %v5710 = vadd.f32 %v5697, %v5709
    %v5711 = vpop.f32.mrf.mxu0
    %5712 = vdwg.mxu0
    %5713 = vmatpush.bf16.msra.mxu0 %v3928
    %5714 = vmatpush.bf16.msra.mxu0 %v3914
    %5715 = vmatpush.bf16.msra.mxu0 %v3900
    %5716 = vmatpush.bf16.msra.mxu0 %v3886
    %5717 = vmatpush.bf16.msra.mxu0 %v3872
    %5718 = vmatpush.bf16.msra.mxu0 %v3858
    %5719 = vmatpush.bf16.msra.mxu0 %v3844
    %5720 = vmatpush.bf16.msra.mxu0 %v3830
    %5721 = vmatmul.bf16.gmra.mxu0 %v900
    %v5722 = vpop.f32.mrf.mxu0
    %v5723 = vadd.f32 %v5710, %v5722
    %v5724 = vpop.f32.mrf.mxu0
    %5725 = vdwg.mxu0
    %5726 = vmatpush.bf16.msra.mxu0 %v4040
    %5727 = vmatpush.bf16.msra.mxu0 %v4026
    %5728 = vmatpush.bf16.msra.mxu0 %v4012
    %5729 = vmatpush.bf16.msra.mxu0 %v3998
    %5730 = vmatpush.bf16.msra.mxu0 %v3984
    %5731 = vmatpush.bf16.msra.mxu0 %v3970
    %5732 = vmatpush.bf16.msra.mxu0 %v3956
    %5733 = vmatpush.bf16.msra.mxu0 %v3942
    %5734 = vmatmul.bf16.gmra.mxu0 %v901
    %v5735 = vpop.f32.mrf.mxu0
    %v5736 = vadd.f32 %v5723, %v5735
    %v5737 = vpop.f32.mrf.mxu0
    %5738 = vdwg.mxu0
    %5739 = vmatpush.bf16.msra.mxu0 %v3369
    %5740 = vmatpush.bf16.msra.mxu0 %v3355
    %5741 = vmatpush.bf16.msra.mxu0 %v3341
    %5742 = vmatpush.bf16.msra.mxu0 %v3327
    %5743 = vmatpush.bf16.msra.mxu0 %v3313
    %5744 = vmatpush.bf16.msra.mxu0 %v3299
    %5745 = vmatpush.bf16.msra.mxu0 %v3285
    %5746 = vmatpush.bf16.msra.mxu0 %v3271
    %5747 = vmatmul.bf16.gmra.mxu0 %v895
    %v5748 = vpop.f32.mrf.mxu0
    %v5749 = vadd.f32 0.0, %v5748
    %v5750 = vpop.f32.mrf.mxu0
    %5751 = vdwg.mxu0
    %5752 = vmatpush.bf16.msra.mxu0 %v3481
    %5753 = vmatpush.bf16.msra.mxu0 %v3467
    %5754 = vmatpush.bf16.msra.mxu0 %v3453
    %5755 = vmatpush.bf16.msra.mxu0 %v3439
    %5756 = vmatpush.bf16.msra.mxu0 %v3425
    %5757 = vmatpush.bf16.msra.mxu0 %v3411
    %5758 = vmatpush.bf16.msra.mxu0 %v3397
    %5759 = vmatpush.bf16.msra.mxu0 %v3383
    %5760 = vmatmul.bf16.gmra.mxu0 %v896
    %v5761 = vpop.f32.mrf.mxu0
    %v5762 = vadd.f32 %v5749, %v5761
    %v5763 = vpop.f32.mrf.mxu0
    %5764 = vdwg.mxu0
    %5765 = vmatpush.bf16.msra.mxu0 %v3593
    %5766 = vmatpush.bf16.msra.mxu0 %v3579
    %5767 = vmatpush.bf16.msra.mxu0 %v3565
    %5768 = vmatpush.bf16.msra.mxu0 %v3551
    %5769 = vmatpush.bf16.msra.mxu0 %v3537
    %5770 = vmatpush.bf16.msra.mxu0 %v3523
    %5771 = vmatpush.bf16.msra.mxu0 %v3509
    %5772 = vmatpush.bf16.msra.mxu0 %v3495
    %5773 = vmatmul.bf16.gmra.mxu0 %v897
    %v5774 = vpop.f32.mrf.mxu0
    %v5775 = vadd.f32 %v5762, %v5774
    %v5776 = vpop.f32.mrf.mxu0
    %5777 = vdwg.mxu0
    %5778 = vmatpush.bf16.msra.mxu0 %v3705
    %5779 = vmatpush.bf16.msra.mxu0 %v3691
    %5780 = vmatpush.bf16.msra.mxu0 %v3677
    %5781 = vmatpush.bf16.msra.mxu0 %v3663
    %5782 = vmatpush.bf16.msra.mxu0 %v3649
    %5783 = vmatpush.bf16.msra.mxu0 %v3635
    %5784 = vmatpush.bf16.msra.mxu0 %v3621
    %5785 = vmatpush.bf16.msra.mxu0 %v3607
    %5786 = vmatmul.bf16.gmra.mxu0 %v898
    %v5787 = vpop.f32.mrf.mxu0
    %v5788 = vadd.f32 %v5775, %v5787
    %v5789 = vpop.f32.mrf.mxu0
    %5790 = vdwg.mxu0
    %5791 = vmatpush.bf16.msra.mxu0 %v3817
    %5792 = vmatpush.bf16.msra.mxu0 %v3803
    %5793 = vmatpush.bf16.msra.mxu0 %v3789
    %5794 = vmatpush.bf16.msra.mxu0 %v3775
    %5795 = vmatpush.bf16.msra.mxu0 %v3761
    %5796 = vmatpush.bf16.msra.mxu0 %v3747
    %5797 = vmatpush.bf16.msra.mxu0 %v3733
    %5798 = vmatpush.bf16.msra.mxu0 %v3719
    %5799 = vmatmul.bf16.gmra.mxu0 %v899
    %v5800 = vpop.f32.mrf.mxu0
    %v5801 = vadd.f32 %v5788, %v5800
    %v5802 = vpop.f32.mrf.mxu0
    %5803 = vdwg.mxu0
    %5804 = vmatpush.bf16.msra.mxu0 %v3929
    %5805 = vmatpush.bf16.msra.mxu0 %v3915
    %5806 = vmatpush.bf16.msra.mxu0 %v3901
    %5807 = vmatpush.bf16.msra.mxu0 %v3887
    %5808 = vmatpush.bf16.msra.mxu0 %v3873
    %5809 = vmatpush.bf16.msra.mxu0 %v3859
    %5810 = vmatpush.bf16.msra.mxu0 %v3845
    %5811 = vmatpush.bf16.msra.mxu0 %v3831
    %5812 = vmatmul.bf16.gmra.mxu0 %v900
    %v5813 = vpop.f32.mrf.mxu0
    %v5814 = vadd.f32 %v5801, %v5813
    %v5815 = vpop.f32.mrf.mxu0
    %5816 = vdwg.mxu0
    %5817 = vmatpush.bf16.msra.mxu0 %v4041
    %5818 = vmatpush.bf16.msra.mxu0 %v4027
    %5819 = vmatpush.bf16.msra.mxu0 %v4013
    %5820 = vmatpush.bf16.msra.mxu0 %v3999
    %5821 = vmatpush.bf16.msra.mxu0 %v3985
    %5822 = vmatpush.bf16.msra.mxu0 %v3971
    %5823 = vmatpush.bf16.msra.mxu0 %v3957
    %5824 = vmatpush.bf16.msra.mxu0 %v3943
    %5825 = vmatmul.bf16.gmra.mxu0 %v901
    %v5826 = vpop.f32.mrf.mxu0
    %v5827 = vadd.f32 %v5814, %v5826
    %v5828 = vpop.f32.mrf.mxu0
    %5829 = vdwg.mxu0
    %5830 = vmatpush.bf16.msra.mxu0 %v3370
    %5831 = vmatpush.bf16.msra.mxu0 %v3356
    %5832 = vmatpush.bf16.msra.mxu0 %v3342
    %5833 = vmatpush.bf16.msra.mxu0 %v3328
    %5834 = vmatpush.bf16.msra.mxu0 %v3314
    %5835 = vmatpush.bf16.msra.mxu0 %v3300
    %5836 = vmatpush.bf16.msra.mxu0 %v3286
    %5837 = vmatpush.bf16.msra.mxu0 %v3272
    %5838 = vmatmul.bf16.gmra.mxu0 %v895
    %v5839 = vpop.f32.mrf.mxu0
    %v5840 = vadd.f32 0.0, %v5839
    %v5841 = vpop.f32.mrf.mxu0
    %5842 = vdwg.mxu0
    %5843 = vmatpush.bf16.msra.mxu0 %v3482
    %5844 = vmatpush.bf16.msra.mxu0 %v3468
    %5845 = vmatpush.bf16.msra.mxu0 %v3454
    %5846 = vmatpush.bf16.msra.mxu0 %v3440
    %5847 = vmatpush.bf16.msra.mxu0 %v3426
    %5848 = vmatpush.bf16.msra.mxu0 %v3412
    %5849 = vmatpush.bf16.msra.mxu0 %v3398
    %5850 = vmatpush.bf16.msra.mxu0 %v3384
    %5851 = vmatmul.bf16.gmra.mxu0 %v896
    %v5852 = vpop.f32.mrf.mxu0
    %v5853 = vadd.f32 %v5840, %v5852
    %v5854 = vpop.f32.mrf.mxu0
    %5855 = vdwg.mxu0
    %5856 = vmatpush.bf16.msra.mxu0 %v3594
    %5857 = vmatpush.bf16.msra.mxu0 %v3580
    %5858 = vmatpush.bf16.msra.mxu0 %v3566
    %5859 = vmatpush.bf16.msra.mxu0 %v3552
    %5860 = vmatpush.bf16.msra.mxu0 %v3538
    %5861 = vmatpush.bf16.msra.mxu0 %v3524
    %5862 = vmatpush.bf16.msra.mxu0 %v3510
    %5863 = vmatpush.bf16.msra.mxu0 %v3496
    %5864 = vmatmul.bf16.gmra.mxu0 %v897
    %v5865 = vpop.f32.mrf.mxu0
    %v5866 = vadd.f32 %v5853, %v5865
    %v5867 = vpop.f32.mrf.mxu0
    %5868 = vdwg.mxu0
    %5869 = vmatpush.bf16.msra.mxu0 %v3706
    %5870 = vmatpush.bf16.msra.mxu0 %v3692
    %5871 = vmatpush.bf16.msra.mxu0 %v3678
    %5872 = vmatpush.bf16.msra.mxu0 %v3664
    %5873 = vmatpush.bf16.msra.mxu0 %v3650
    %5874 = vmatpush.bf16.msra.mxu0 %v3636
    %5875 = vmatpush.bf16.msra.mxu0 %v3622
    %5876 = vmatpush.bf16.msra.mxu0 %v3608
    %5877 = vmatmul.bf16.gmra.mxu0 %v898
    %v5878 = vpop.f32.mrf.mxu0
    %v5879 = vadd.f32 %v5866, %v5878
    %v5880 = vpop.f32.mrf.mxu0
    %5881 = vdwg.mxu0
    %5882 = vmatpush.bf16.msra.mxu0 %v3818
    %5883 = vmatpush.bf16.msra.mxu0 %v3804
    %5884 = vmatpush.bf16.msra.mxu0 %v3790
    %5885 = vmatpush.bf16.msra.mxu0 %v3776
    %5886 = vmatpush.bf16.msra.mxu0 %v3762
    %5887 = vmatpush.bf16.msra.mxu0 %v3748
    %5888 = vmatpush.bf16.msra.mxu0 %v3734
    %5889 = vmatpush.bf16.msra.mxu0 %v3720
    %5890 = vmatmul.bf16.gmra.mxu0 %v899
    %v5891 = vpop.f32.mrf.mxu0
    %v5892 = vadd.f32 %v5879, %v5891
    %v5893 = vpop.f32.mrf.mxu0
    %5894 = vdwg.mxu0
    %5895 = vmatpush.bf16.msra.mxu0 %v3930
    %5896 = vmatpush.bf16.msra.mxu0 %v3916
    %5897 = vmatpush.bf16.msra.mxu0 %v3902
    %5898 = vmatpush.bf16.msra.mxu0 %v3888
    %5899 = vmatpush.bf16.msra.mxu0 %v3874
    %5900 = vmatpush.bf16.msra.mxu0 %v3860
    %5901 = vmatpush.bf16.msra.mxu0 %v3846
    %5902 = vmatpush.bf16.msra.mxu0 %v3832
    %5903 = vmatmul.bf16.gmra.mxu0 %v900
    %v5904 = vpop.f32.mrf.mxu0
    %v5905 = vadd.f32 %v5892, %v5904
    %v5906 = vpop.f32.mrf.mxu0
    %5907 = vdwg.mxu0
    %5908 = vmatpush.bf16.msra.mxu0 %v4042
    %5909 = vmatpush.bf16.msra.mxu0 %v4028
    %5910 = vmatpush.bf16.msra.mxu0 %v4014
    %5911 = vmatpush.bf16.msra.mxu0 %v4000
    %5912 = vmatpush.bf16.msra.mxu0 %v3986
    %5913 = vmatpush.bf16.msra.mxu0 %v3972
    %5914 = vmatpush.bf16.msra.mxu0 %v3958
    %5915 = vmatpush.bf16.msra.mxu0 %v3944
    %5916 = vmatmul.bf16.gmra.mxu0 %v901
    %v5917 = vpop.f32.mrf.mxu0
    %v5918 = vadd.f32 %v5905, %v5917
    %v5919 = vpop.f32.mrf.mxu0
    %5920 = vdwg.mxu0
    %5921 = vmatpush.bf16.msra.mxu0 %v3371
    %5922 = vmatpush.bf16.msra.mxu0 %v3357
    %5923 = vmatpush.bf16.msra.mxu0 %v3343
    %5924 = vmatpush.bf16.msra.mxu0 %v3329
    %5925 = vmatpush.bf16.msra.mxu0 %v3315
    %5926 = vmatpush.bf16.msra.mxu0 %v3301
    %5927 = vmatpush.bf16.msra.mxu0 %v3287
    %5928 = vmatpush.bf16.msra.mxu0 %v3273
    %5929 = vmatmul.bf16.gmra.mxu0 %v895
    %v5930 = vpop.f32.mrf.mxu0
    %v5931 = vadd.f32 0.0, %v5930
    %v5932 = vpop.f32.mrf.mxu0
    %5933 = vdwg.mxu0
    %5934 = vmatpush.bf16.msra.mxu0 %v3483
    %5935 = vmatpush.bf16.msra.mxu0 %v3469
    %5936 = vmatpush.bf16.msra.mxu0 %v3455
    %5937 = vmatpush.bf16.msra.mxu0 %v3441
    %5938 = vmatpush.bf16.msra.mxu0 %v3427
    %5939 = vmatpush.bf16.msra.mxu0 %v3413
    %5940 = vmatpush.bf16.msra.mxu0 %v3399
    %5941 = vmatpush.bf16.msra.mxu0 %v3385
    %5942 = vmatmul.bf16.gmra.mxu0 %v896
    %v5943 = vpop.f32.mrf.mxu0
    %v5944 = vadd.f32 %v5931, %v5943
    %v5945 = vpop.f32.mrf.mxu0
    %5946 = vdwg.mxu0
    %5947 = vmatpush.bf16.msra.mxu0 %v3595
    %5948 = vmatpush.bf16.msra.mxu0 %v3581
    %5949 = vmatpush.bf16.msra.mxu0 %v3567
    %5950 = vmatpush.bf16.msra.mxu0 %v3553
    %5951 = vmatpush.bf16.msra.mxu0 %v3539
    %5952 = vmatpush.bf16.msra.mxu0 %v3525
    %5953 = vmatpush.bf16.msra.mxu0 %v3511
    %5954 = vmatpush.bf16.msra.mxu0 %v3497
    %5955 = vmatmul.bf16.gmra.mxu0 %v897
    %v5956 = vpop.f32.mrf.mxu0
    %v5957 = vadd.f32 %v5944, %v5956
    %v5958 = vpop.f32.mrf.mxu0
    %5959 = vdwg.mxu0
    %5960 = vmatpush.bf16.msra.mxu0 %v3707
    %5961 = vmatpush.bf16.msra.mxu0 %v3693
    %5962 = vmatpush.bf16.msra.mxu0 %v3679
    %5963 = vmatpush.bf16.msra.mxu0 %v3665
    %5964 = vmatpush.bf16.msra.mxu0 %v3651
    %5965 = vmatpush.bf16.msra.mxu0 %v3637
    %5966 = vmatpush.bf16.msra.mxu0 %v3623
    %5967 = vmatpush.bf16.msra.mxu0 %v3609
    %5968 = vmatmul.bf16.gmra.mxu0 %v898
    %v5969 = vpop.f32.mrf.mxu0
    %v5970 = vadd.f32 %v5957, %v5969
    %v5971 = vpop.f32.mrf.mxu0
    %5972 = vdwg.mxu0
    %5973 = vmatpush.bf16.msra.mxu0 %v3819
    %5974 = vmatpush.bf16.msra.mxu0 %v3805
    %5975 = vmatpush.bf16.msra.mxu0 %v3791
    %5976 = vmatpush.bf16.msra.mxu0 %v3777
    %5977 = vmatpush.bf16.msra.mxu0 %v3763
    %5978 = vmatpush.bf16.msra.mxu0 %v3749
    %5979 = vmatpush.bf16.msra.mxu0 %v3735
    %5980 = vmatpush.bf16.msra.mxu0 %v3721
    %5981 = vmatmul.bf16.gmra.mxu0 %v899
    %v5982 = vpop.f32.mrf.mxu0
    %v5983 = vadd.f32 %v5970, %v5982
    %v5984 = vpop.f32.mrf.mxu0
    %5985 = vdwg.mxu0
    %5986 = vmatpush.bf16.msra.mxu0 %v3931
    %5987 = vmatpush.bf16.msra.mxu0 %v3917
    %5988 = vmatpush.bf16.msra.mxu0 %v3903
    %5989 = vmatpush.bf16.msra.mxu0 %v3889
    %5990 = vmatpush.bf16.msra.mxu0 %v3875
    %5991 = vmatpush.bf16.msra.mxu0 %v3861
    %5992 = vmatpush.bf16.msra.mxu0 %v3847
    %5993 = vmatpush.bf16.msra.mxu0 %v3833
    %5994 = vmatmul.bf16.gmra.mxu0 %v900
    %v5995 = vpop.f32.mrf.mxu0
    %v5996 = vadd.f32 %v5983, %v5995
    %v5997 = vpop.f32.mrf.mxu0
    %5998 = vdwg.mxu0
    %5999 = vmatpush.bf16.msra.mxu0 %v4043
    %6000 = vmatpush.bf16.msra.mxu0 %v4029
    %6001 = vmatpush.bf16.msra.mxu0 %v4015
    %6002 = vmatpush.bf16.msra.mxu0 %v4001
    %6003 = vmatpush.bf16.msra.mxu0 %v3987
    %6004 = vmatpush.bf16.msra.mxu0 %v3973
    %6005 = vmatpush.bf16.msra.mxu0 %v3959
    %6006 = vmatpush.bf16.msra.mxu0 %v3945
    %6007 = vmatmul.bf16.gmra.mxu0 %v901
    %v6008 = vpop.f32.mrf.mxu0
    %v6009 = vadd.f32 %v5996, %v6008
    %v6010 = vpop.f32.mrf.mxu0
    %6011 = vdwg.mxu0
    %6012 = vmatpush.bf16.msra.mxu0 %v3372
    %6013 = vmatpush.bf16.msra.mxu0 %v3358
    %6014 = vmatpush.bf16.msra.mxu0 %v3344
    %6015 = vmatpush.bf16.msra.mxu0 %v3330
    %6016 = vmatpush.bf16.msra.mxu0 %v3316
    %6017 = vmatpush.bf16.msra.mxu0 %v3302
    %6018 = vmatpush.bf16.msra.mxu0 %v3288
    %6019 = vmatpush.bf16.msra.mxu0 %v3274
    %6020 = vmatmul.bf16.gmra.mxu0 %v895
    %v6021 = vpop.f32.mrf.mxu0
    %v6022 = vadd.f32 0.0, %v6021
    %v6023 = vpop.f32.mrf.mxu0
    %6024 = vdwg.mxu0
    %6025 = vmatpush.bf16.msra.mxu0 %v3484
    %6026 = vmatpush.bf16.msra.mxu0 %v3470
    %6027 = vmatpush.bf16.msra.mxu0 %v3456
    %6028 = vmatpush.bf16.msra.mxu0 %v3442
    %6029 = vmatpush.bf16.msra.mxu0 %v3428
    %6030 = vmatpush.bf16.msra.mxu0 %v3414
    %6031 = vmatpush.bf16.msra.mxu0 %v3400
    %6032 = vmatpush.bf16.msra.mxu0 %v3386
    %6033 = vmatmul.bf16.gmra.mxu0 %v896
    %v6034 = vpop.f32.mrf.mxu0
    %v6035 = vadd.f32 %v6022, %v6034
    %v6036 = vpop.f32.mrf.mxu0
    %6037 = vdwg.mxu0
    %6038 = vmatpush.bf16.msra.mxu0 %v3596
    %6039 = vmatpush.bf16.msra.mxu0 %v3582
    %6040 = vmatpush.bf16.msra.mxu0 %v3568
    %6041 = vmatpush.bf16.msra.mxu0 %v3554
    %6042 = vmatpush.bf16.msra.mxu0 %v3540
    %6043 = vmatpush.bf16.msra.mxu0 %v3526
    %6044 = vmatpush.bf16.msra.mxu0 %v3512
    %6045 = vmatpush.bf16.msra.mxu0 %v3498
    %6046 = vmatmul.bf16.gmra.mxu0 %v897
    %v6047 = vpop.f32.mrf.mxu0
    %v6048 = vadd.f32 %v6035, %v6047
    %v6049 = vpop.f32.mrf.mxu0
    %6050 = vdwg.mxu0
    %6051 = vmatpush.bf16.msra.mxu0 %v3708
    %6052 = vmatpush.bf16.msra.mxu0 %v3694
    %6053 = vmatpush.bf16.msra.mxu0 %v3680
    %6054 = vmatpush.bf16.msra.mxu0 %v3666
    %6055 = vmatpush.bf16.msra.mxu0 %v3652
    %6056 = vmatpush.bf16.msra.mxu0 %v3638
    %6057 = vmatpush.bf16.msra.mxu0 %v3624
    %6058 = vmatpush.bf16.msra.mxu0 %v3610
    %6059 = vmatmul.bf16.gmra.mxu0 %v898
    %v6060 = vpop.f32.mrf.mxu0
    %v6061 = vadd.f32 %v6048, %v6060
    %v6062 = vpop.f32.mrf.mxu0
    %6063 = vdwg.mxu0
    %6064 = vmatpush.bf16.msra.mxu0 %v3820
    %6065 = vmatpush.bf16.msra.mxu0 %v3806
    %6066 = vmatpush.bf16.msra.mxu0 %v3792
    %6067 = vmatpush.bf16.msra.mxu0 %v3778
    %6068 = vmatpush.bf16.msra.mxu0 %v3764
    %6069 = vmatpush.bf16.msra.mxu0 %v3750
    %6070 = vmatpush.bf16.msra.mxu0 %v3736
    %6071 = vmatpush.bf16.msra.mxu0 %v3722
    %6072 = vmatmul.bf16.gmra.mxu0 %v899
    %v6073 = vpop.f32.mrf.mxu0
    %v6074 = vadd.f32 %v6061, %v6073
    %v6075 = vpop.f32.mrf.mxu0
    %6076 = vdwg.mxu0
    %6077 = vmatpush.bf16.msra.mxu0 %v3932
    %6078 = vmatpush.bf16.msra.mxu0 %v3918
    %6079 = vmatpush.bf16.msra.mxu0 %v3904
    %6080 = vmatpush.bf16.msra.mxu0 %v3890
    %6081 = vmatpush.bf16.msra.mxu0 %v3876
    %6082 = vmatpush.bf16.msra.mxu0 %v3862
    %6083 = vmatpush.bf16.msra.mxu0 %v3848
    %6084 = vmatpush.bf16.msra.mxu0 %v3834
    %6085 = vmatmul.bf16.gmra.mxu0 %v900
    %v6086 = vpop.f32.mrf.mxu0
    %v6087 = vadd.f32 %v6074, %v6086
    %v6088 = vpop.f32.mrf.mxu0
    %6089 = vdwg.mxu0
    %6090 = vmatpush.bf16.msra.mxu0 %v4044
    %6091 = vmatpush.bf16.msra.mxu0 %v4030
    %6092 = vmatpush.bf16.msra.mxu0 %v4016
    %6093 = vmatpush.bf16.msra.mxu0 %v4002
    %6094 = vmatpush.bf16.msra.mxu0 %v3988
    %6095 = vmatpush.bf16.msra.mxu0 %v3974
    %6096 = vmatpush.bf16.msra.mxu0 %v3960
    %6097 = vmatpush.bf16.msra.mxu0 %v3946
    %6098 = vmatmul.bf16.gmra.mxu0 %v901
    %v6099 = vpop.f32.mrf.mxu0
    %v6100 = vadd.f32 %v6087, %v6099
    %v6101 = vpop.f32.mrf.mxu0
    %6102 = vdwg.mxu0
    %v6103 = vrot.slane %v4917, 4
    %v6104 = vadd.f32 %v4917, %v6103
    %v6105 = vrot.slane %v6104, 2
    %v6106 = vadd.f32 %v6104, %v6105
    %v6107 = vrot.slane %v6106, 1
    %v6108 = vadd.f32 %v6106, %v6107
    %v6109 = vrot.slane %v5008, 4
    %v6110 = vadd.f32 %v5008, %v6109
    %v6111 = vrot.slane %v6110, 2
    %v6112 = vadd.f32 %v6110, %v6111
    %v6113 = vrot.slane %v6112, 1
    %v6114 = vadd.f32 %v6112, %v6113
    %v6115 = vrot.slane %v5099, 4
    %v6116 = vadd.f32 %v5099, %v6115
    %v6117 = vrot.slane %v6116, 2
    %v6118 = vadd.f32 %v6116, %v6117
    %v6119 = vrot.slane %v6118, 1
    %v6120 = vadd.f32 %v6118, %v6119
    %v6121 = vrot.slane %v5190, 4
    %v6122 = vadd.f32 %v5190, %v6121
    %v6123 = vrot.slane %v6122, 2
    %v6124 = vadd.f32 %v6122, %v6123
    %v6125 = vrot.slane %v6124, 1
    %v6126 = vadd.f32 %v6124, %v6125
    %v6127 = vrot.slane %v5281, 4
    %v6128 = vadd.f32 %v5281, %v6127
    %v6129 = vrot.slane %v6128, 2
    %v6130 = vadd.f32 %v6128, %v6129
    %v6131 = vrot.slane %v6130, 1
    %v6132 = vadd.f32 %v6130, %v6131
    %v6133 = vrot.slane %v5372, 4
    %v6134 = vadd.f32 %v5372, %v6133
    %v6135 = vrot.slane %v6134, 2
    %v6136 = vadd.f32 %v6134, %v6135
    %v6137 = vrot.slane %v6136, 1
    %v6138 = vadd.f32 %v6136, %v6137
    %v6139 = vrot.slane %v5463, 4
    %v6140 = vadd.f32 %v5463, %v6139
    %v6141 = vrot.slane %v6140, 2
    %v6142 = vadd.f32 %v6140, %v6141
    %v6143 = vrot.slane %v6142, 1
    %v6144 = vadd.f32 %v6142, %v6143
    %v6145 = vrot.slane %v5554, 4
    %v6146 = vadd.f32 %v5554, %v6145
    %v6147 = vrot.slane %v6146, 2
    %v6148 = vadd.f32 %v6146, %v6147
    %v6149 = vrot.slane %v6148, 1
    %v6150 = vadd.f32 %v6148, %v6149
    %v6151 = vrot.slane %v5645, 4
    %v6152 = vadd.f32 %v5645, %v6151
    %v6153 = vrot.slane %v6152, 2
    %v6154 = vadd.f32 %v6152, %v6153
    %v6155 = vrot.slane %v6154, 1
    %v6156 = vadd.f32 %v6154, %v6155
    %v6157 = vrot.slane %v5736, 4
    %v6158 = vadd.f32 %v5736, %v6157
    %v6159 = vrot.slane %v6158, 2
    %v6160 = vadd.f32 %v6158, %v6159
    %v6161 = vrot.slane %v6160, 1
    %v6162 = vadd.f32 %v6160, %v6161
    %v6163 = vrot.slane %v5827, 4
    %v6164 = vadd.f32 %v5827, %v6163
    %v6165 = vrot.slane %v6164, 2
    %v6166 = vadd.f32 %v6164, %v6165
    %v6167 = vrot.slane %v6166, 1
    %v6168 = vadd.f32 %v6166, %v6167
    %v6169 = vrot.slane %v5918, 4
    %v6170 = vadd.f32 %v5918, %v6169
    %v6171 = vrot.slane %v6170, 2
    %v6172 = vadd.f32 %v6170, %v6171
    %v6173 = vrot.slane %v6172, 1
    %v6174 = vadd.f32 %v6172, %v6173
    %v6175 = vrot.slane %v6009, 4
    %v6176 = vadd.f32 %v6009, %v6175
    %v6177 = vrot.slane %v6176, 2
    %v6178 = vadd.f32 %v6176, %v6177
    %v6179 = vrot.slane %v6178, 1
    %v6180 = vadd.f32 %v6178, %v6179
    %v6181 = vrot.slane %v6100, 4
    %v6182 = vadd.f32 %v6100, %v6181
    %v6183 = vrot.slane %v6182, 2
    %v6184 = vadd.f32 %v6182, %v6183
    %v6185 = vrot.slane %v6184, 1
    %v6186 = vadd.f32 %v6184, %v6185
    %v6187 = vmul.f32 %v4917, %v4917
    %v6188 = vmul.f32 %v5008, %v5008
    %v6189 = vmul.f32 %v5099, %v5099
    %v6190 = vmul.f32 %v5190, %v5190
    %v6191 = vmul.f32 %v5281, %v5281
    %v6192 = vmul.f32 %v5372, %v5372
    %v6193 = vmul.f32 %v5463, %v5463
    %v6194 = vmul.f32 %v5554, %v5554
    %v6195 = vmul.f32 %v5645, %v5645
    %v6196 = vmul.f32 %v5736, %v5736
    %v6197 = vmul.f32 %v5827, %v5827
    %v6198 = vmul.f32 %v5918, %v5918
    %v6199 = vmul.f32 %v6009, %v6009
    %v6200 = vmul.f32 %v6100, %v6100
    %v6201 = vrot.slane %v6187, 4
    %v6202 = vadd.f32 %v6187, %v6201
    %v6203 = vrot.slane %v6202, 2
    %v6204 = vadd.f32 %v6202, %v6203
    %v6205 = vrot.slane %v6204, 1
    %v6206 = vadd.f32 %v6204, %v6205
    %v6207 = vrot.slane %v6188, 4
    %v6208 = vadd.f32 %v6188, %v6207
    %v6209 = vrot.slane %v6208, 2
    %v6210 = vadd.f32 %v6208, %v6209
    %v6211 = vrot.slane %v6210, 1
    %v6212 = vadd.f32 %v6210, %v6211
    %v6213 = vrot.slane %v6189, 4
    %v6214 = vadd.f32 %v6189, %v6213
    %v6215 = vrot.slane %v6214, 2
    %v6216 = vadd.f32 %v6214, %v6215
    %v6217 = vrot.slane %v6216, 1
    %v6218 = vadd.f32 %v6216, %v6217
    %v6219 = vrot.slane %v6190, 4
    %v6220 = vadd.f32 %v6190, %v6219
    %v6221 = vrot.slane %v6220, 2
    %v6222 = vadd.f32 %v6220, %v6221
    %v6223 = vrot.slane %v6222, 1
    %v6224 = vadd.f32 %v6222, %v6223
    %v6225 = vrot.slane %v6191, 4
    %v6226 = vadd.f32 %v6191, %v6225
    %v6227 = vrot.slane %v6226, 2
    %v6228 = vadd.f32 %v6226, %v6227
    %v6229 = vrot.slane %v6228, 1
    %v6230 = vadd.f32 %v6228, %v6229
    %v6231 = vrot.slane %v6192, 4
    %v6232 = vadd.f32 %v6192, %v6231
    %v6233 = vrot.slane %v6232, 2
    %v6234 = vadd.f32 %v6232, %v6233
    %v6235 = vrot.slane %v6234, 1
    %v6236 = vadd.f32 %v6234, %v6235
    %v6237 = vrot.slane %v6193, 4
    %v6238 = vadd.f32 %v6193, %v6237
    %v6239 = vrot.slane %v6238, 2
    %v6240 = vadd.f32 %v6238, %v6239
    %v6241 = vrot.slane %v6240, 1
    %v6242 = vadd.f32 %v6240, %v6241
    %v6243 = vrot.slane %v6194, 4
    %v6244 = vadd.f32 %v6194, %v6243
    %v6245 = vrot.slane %v6244, 2
    %v6246 = vadd.f32 %v6244, %v6245
    %v6247 = vrot.slane %v6246, 1
    %v6248 = vadd.f32 %v6246, %v6247
    %v6249 = vrot.slane %v6195, 4
    %v6250 = vadd.f32 %v6195, %v6249
    %v6251 = vrot.slane %v6250, 2
    %v6252 = vadd.f32 %v6250, %v6251
    %v6253 = vrot.slane %v6252, 1
    %v6254 = vadd.f32 %v6252, %v6253
    %v6255 = vrot.slane %v6196, 4
    %v6256 = vadd.f32 %v6196, %v6255
    %v6257 = vrot.slane %v6256, 2
    %v6258 = vadd.f32 %v6256, %v6257
    %v6259 = vrot.slane %v6258, 1
    %v6260 = vadd.f32 %v6258, %v6259
    %v6261 = vrot.slane %v6197, 4
    %v6262 = vadd.f32 %v6197, %v6261
    %v6263 = vrot.slane %v6262, 2
    %v6264 = vadd.f32 %v6262, %v6263
    %v6265 = vrot.slane %v6264, 1
    %v6266 = vadd.f32 %v6264, %v6265
    %v6267 = vrot.slane %v6198, 4
    %v6268 = vadd.f32 %v6198, %v6267
    %v6269 = vrot.slane %v6268, 2
    %v6270 = vadd.f32 %v6268, %v6269
    %v6271 = vrot.slane %v6270, 1
    %v6272 = vadd.f32 %v6270, %v6271
    %v6273 = vrot.slane %v6199, 4
    %v6274 = vadd.f32 %v6199, %v6273
    %v6275 = vrot.slane %v6274, 2
    %v6276 = vadd.f32 %v6274, %v6275
    %v6277 = vrot.slane %v6276, 1
    %v6278 = vadd.f32 %v6276, %v6277
    %v6279 = vrot.slane %v6200, 4
    %v6280 = vadd.f32 %v6200, %v6279
    %v6281 = vrot.slane %v6280, 2
    %v6282 = vadd.f32 %v6280, %v6281
    %v6283 = vrot.slane %v6282, 1
    %v6284 = vadd.f32 %v6282, %v6283
    %v6285 = vmul.f32 %v6108, 0.125
    %v6286 = vmul.f32 %v6114, 0.125
    %v6287 = vmul.f32 %v6120, 0.125
    %v6288 = vmul.f32 %v6126, 0.125
    %v6289 = vmul.f32 %v6132, 0.125
    %v6290 = vmul.f32 %v6138, 0.125
    %v6291 = vmul.f32 %v6144, 0.125
    %v6292 = vmul.f32 %v6150, 0.125
    %v6293 = vmul.f32 %v6156, 0.125
    %v6294 = vmul.f32 %v6162, 0.125
    %v6295 = vmul.f32 %v6168, 0.125
    %v6296 = vmul.f32 %v6174, 0.125
    %v6297 = vmul.f32 %v6180, 0.125
    %v6298 = vmul.f32 %v6186, 0.125
    %v6299 = vmul.f32 %v6206, 0.125
    %v6300 = vmul.f32 %v6212, 0.125
    %v6301 = vmul.f32 %v6218, 0.125
    %v6302 = vmul.f32 %v6224, 0.125
    %v6303 = vmul.f32 %v6230, 0.125
    %v6304 = vmul.f32 %v6236, 0.125
    %v6305 = vmul.f32 %v6242, 0.125
    %v6306 = vmul.f32 %v6248, 0.125
    %v6307 = vmul.f32 %v6254, 0.125
    %v6308 = vmul.f32 %v6260, 0.125
    %v6309 = vmul.f32 %v6266, 0.125
    %v6310 = vmul.f32 %v6272, 0.125
    %v6311 = vmul.f32 %v6278, 0.125
    %v6312 = vmul.f32 %v6284, 0.125
    %v6313 = vmul.f32 %v6285, %v6285
    %v6314 = vmul.f32 %v6286, %v6286
    %v6315 = vmul.f32 %v6287, %v6287
    %v6316 = vmul.f32 %v6288, %v6288
    %v6317 = vmul.f32 %v6289, %v6289
    %v6318 = vmul.f32 %v6290, %v6290
    %v6319 = vmul.f32 %v6291, %v6291
    %v6320 = vmul.f32 %v6292, %v6292
    %v6321 = vmul.f32 %v6293, %v6293
    %v6322 = vmul.f32 %v6294, %v6294
    %v6323 = vmul.f32 %v6295, %v6295
    %v6324 = vmul.f32 %v6296, %v6296
    %v6325 = vmul.f32 %v6297, %v6297
    %v6326 = vmul.f32 %v6298, %v6298
    %v6327 = vsub.f32 %v6299, %v6313
    %v6328 = vsub.f32 %v6300, %v6314
    %v6329 = vsub.f32 %v6301, %v6315
    %v6330 = vsub.f32 %v6302, %v6316
    %v6331 = vsub.f32 %v6303, %v6317
    %v6332 = vsub.f32 %v6304, %v6318
    %v6333 = vsub.f32 %v6305, %v6319
    %v6334 = vsub.f32 %v6306, %v6320
    %v6335 = vsub.f32 %v6307, %v6321
    %v6336 = vsub.f32 %v6308, %v6322
    %v6337 = vsub.f32 %v6309, %v6323
    %v6338 = vsub.f32 %v6310, %v6324
    %v6339 = vsub.f32 %v6311, %v6325
    %v6340 = vsub.f32 %v6312, %v6326
    %v6341 = vmax.f32 %v6327, 0.0
    %v6342 = vmax.f32 %v6328, 0.0
    %v6343 = vmax.f32 %v6329, 0.0
    %v6344 = vmax.f32 %v6330, 0.0
    %v6345 = vmax.f32 %v6331, 0.0
    %v6346 = vmax.f32 %v6332, 0.0
    %v6347 = vmax.f32 %v6333, 0.0
    %v6348 = vmax.f32 %v6334, 0.0
    %v6349 = vmax.f32 %v6335, 0.0
    %v6350 = vmax.f32 %v6336, 0.0
    %v6351 = vmax.f32 %v6337, 0.0
    %v6352 = vmax.f32 %v6338, 0.0
    %v6353 = vmax.f32 %v6339, 0.0
    %v6354 = vmax.f32 %v6340, 0.0
    %v6355 = vld [vmem:[#allocation5] sm:$0xff]
    %v6356 = vld [vmem:[#allocation5 + $0x8] sm:$0x3f]
    %v6357 = vadd.f32 %v6341, 1e-05
    %v6358 = vadd.f32 %v6342, 1e-05
    %v6359 = vadd.f32 %v6343, 1e-05
    %v6360 = vadd.f32 %v6344, 1e-05
    %v6361 = vadd.f32 %v6345, 1e-05
    %v6362 = vadd.f32 %v6346, 1e-05
    %v6363 = vadd.f32 %v6347, 1e-05
    %v6364 = vadd.f32 %v6348, 1e-05
    %v6365 = vadd.f32 %v6349, 1e-05
    %v6366 = vadd.f32 %v6350, 1e-05
    %v6367 = vadd.f32 %v6351, 1e-05
    %v6368 = vadd.f32 %v6352, 1e-05
    %v6369 = vadd.f32 %v6353, 1e-05
    %v6370 = vadd.f32 %v6354, 1e-05
    %v6371 = vrsqrt.pop %v6357
    %v6372 = vmul.f32 %v6371, %v6357
    %v6373 = vmul.f32 %v6372, %v6371
    %v6374 = vmul.f32 0.5, %v6373
    %v6375 = vsub.f32 1.5, %v6374
    %v6376 = vmul.f32 %v6371, %v6375
    %vm6377 = vweird.f32 %v6357
    %vm6378 = vweird.f32 %v6371
    %vm6379 = vmor %vm6377, %vm6378
    %v6380 = vsel %vm6379, %v6371, %v6376
    %v6381 = vrsqrt.pop %v6358
    %v6382 = vmul.f32 %v6381, %v6358
    %v6383 = vmul.f32 %v6382, %v6381
    %v6384 = vmul.f32 0.5, %v6383
    %v6385 = vsub.f32 1.5, %v6384
    %v6386 = vmul.f32 %v6381, %v6385
    %vm6387 = vweird.f32 %v6358
    %vm6388 = vweird.f32 %v6381
    %vm6389 = vmor %vm6387, %vm6388
    %v6390 = vsel %vm6389, %v6381, %v6386
    %v6391 = vrsqrt.pop %v6359
    %v6392 = vmul.f32 %v6391, %v6359
    %v6393 = vmul.f32 %v6392, %v6391
    %v6394 = vmul.f32 0.5, %v6393
    %v6395 = vsub.f32 1.5, %v6394
    %v6396 = vmul.f32 %v6391, %v6395
    %vm6397 = vweird.f32 %v6359
    %vm6398 = vweird.f32 %v6391
    %vm6399 = vmor %vm6397, %vm6398
    %v6400 = vsel %vm6399, %v6391, %v6396
    %v6401 = vrsqrt.pop %v6360
    %v6402 = vmul.f32 %v6401, %v6360
    %v6403 = vmul.f32 %v6402, %v6401
    %v6404 = vmul.f32 0.5, %v6403
    %v6405 = vsub.f32 1.5, %v6404
    %v6406 = vmul.f32 %v6401, %v6405
    %vm6407 = vweird.f32 %v6360
    %vm6408 = vweird.f32 %v6401
    %vm6409 = vmor %vm6407, %vm6408
    %v6410 = vsel %vm6409, %v6401, %v6406
    %v6411 = vrsqrt.pop %v6361
    %v6412 = vmul.f32 %v6411, %v6361
    %v6413 = vmul.f32 %v6412, %v6411
    %v6414 = vmul.f32 0.5, %v6413
    %v6415 = vsub.f32 1.5, %v6414
    %v6416 = vmul.f32 %v6411, %v6415
    %vm6417 = vweird.f32 %v6361
    %vm6418 = vweird.f32 %v6411
    %vm6419 = vmor %vm6417, %vm6418
    %v6420 = vsel %vm6419, %v6411, %v6416
    %v6421 = vrsqrt.pop %v6362
    %v6422 = vmul.f32 %v6421, %v6362
    %v6423 = vmul.f32 %v6422, %v6421
    %v6424 = vmul.f32 0.5, %v6423
    %v6425 = vsub.f32 1.5, %v6424
    %v6426 = vmul.f32 %v6421, %v6425
    %vm6427 = vweird.f32 %v6362
    %vm6428 = vweird.f32 %v6421
    %vm6429 = vmor %vm6427, %vm6428
    %v6430 = vsel %vm6429, %v6421, %v6426
    %v6431 = vrsqrt.pop %v6363
    %v6432 = vmul.f32 %v6431, %v6363
    %v6433 = vmul.f32 %v6432, %v6431
    %v6434 = vmul.f32 0.5, %v6433
    %v6435 = vsub.f32 1.5, %v6434
    %v6436 = vmul.f32 %v6431, %v6435
    %vm6437 = vweird.f32 %v6363
    %vm6438 = vweird.f32 %v6431
    %vm6439 = vmor %vm6437, %vm6438
    %v6440 = vsel %vm6439, %v6431, %v6436
    %v6441 = vrsqrt.pop %v6364
    %v6442 = vmul.f32 %v6441, %v6364
    %v6443 = vmul.f32 %v6442, %v6441
    %v6444 = vmul.f32 0.5, %v6443
    %v6445 = vsub.f32 1.5, %v6444
    %v6446 = vmul.f32 %v6441, %v6445
    %vm6447 = vweird.f32 %v6364
    %vm6448 = vweird.f32 %v6441
    %vm6449 = vmor %vm6447, %vm6448
    %v6450 = vsel %vm6449, %v6441, %v6446
    %v6451 = vrsqrt.pop %v6365
    %v6452 = vmul.f32 %v6451, %v6365
    %v6453 = vmul.f32 %v6452, %v6451
    %v6454 = vmul.f32 0.5, %v6453
    %v6455 = vsub.f32 1.5, %v6454
    %v6456 = vmul.f32 %v6451, %v6455
    %vm6457 = vweird.f32 %v6365
    %vm6458 = vweird.f32 %v6451
    %vm6459 = vmor %vm6457, %vm6458
    %v6460 = vsel %vm6459, %v6451, %v6456
    %v6461 = vrsqrt.pop %v6366
    %v6462 = vmul.f32 %v6461, %v6366
    %v6463 = vmul.f32 %v6462, %v6461
    %v6464 = vmul.f32 0.5, %v6463
    %v6465 = vsub.f32 1.5, %v6464
    %v6466 = vmul.f32 %v6461, %v6465
    %vm6467 = vweird.f32 %v6366
    %vm6468 = vweird.f32 %v6461
    %vm6469 = vmor %vm6467, %vm6468
    %v6470 = vsel %vm6469, %v6461, %v6466
    %v6471 = vrsqrt.pop %v6367
    %v6472 = vmul.f32 %v6471, %v6367
    %v6473 = vmul.f32 %v6472, %v6471
    %v6474 = vmul.f32 0.5, %v6473
    %v6475 = vsub.f32 1.5, %v6474
    %v6476 = vmul.f32 %v6471, %v6475
    %vm6477 = vweird.f32 %v6367
    %vm6478 = vweird.f32 %v6471
    %vm6479 = vmor %vm6477, %vm6478
    %v6480 = vsel %vm6479, %v6471, %v6476
    %v6481 = vrsqrt.pop %v6368
    %v6482 = vmul.f32 %v6481, %v6368
    %v6483 = vmul.f32 %v6482, %v6481
    %v6484 = vmul.f32 0.5, %v6483
    %v6485 = vsub.f32 1.5, %v6484
    %v6486 = vmul.f32 %v6481, %v6485
    %vm6487 = vweird.f32 %v6368
    %vm6488 = vweird.f32 %v6481
    %vm6489 = vmor %vm6487, %vm6488
    %v6490 = vsel %vm6489, %v6481, %v6486
    %v6491 = vrsqrt.pop %v6369
    %v6492 = vmul.f32 %v6491, %v6369
    %v6493 = vmul.f32 %v6492, %v6491
    %v6494 = vmul.f32 0.5, %v6493
    %v6495 = vsub.f32 1.5, %v6494
    %v6496 = vmul.f32 %v6491, %v6495
    %vm6497 = vweird.f32 %v6369
    %vm6498 = vweird.f32 %v6491
    %vm6499 = vmor %vm6497, %vm6498
    %v6500 = vsel %vm6499, %v6491, %v6496
    %v6501 = vrsqrt.pop %v6370
    %v6502 = vmul.f32 %v6501, %v6370
    %v6503 = vmul.f32 %v6502, %v6501
    %v6504 = vmul.f32 0.5, %v6503
    %v6505 = vsub.f32 1.5, %v6504
    %v6506 = vmul.f32 %v6501, %v6505
    %vm6507 = vweird.f32 %v6370
    %vm6508 = vweird.f32 %v6501
    %vm6509 = vmor %vm6507, %vm6508
    %v6510 = vsel %vm6509, %v6501, %v6506
    %v6525 = vrot.slane %v6390, 7
    %v6526 = vrot.slane %v6400, 6
    %v6527 = vrot.slane %v6410, 5
    %v6528 = vrot.slane %v6420, 4
    %v6529 = vrot.slane %v6430, 3
    %v6530 = vrot.slane %v6440, 2
    %v6531 = vrot.slane %v6450, 1
    %v6532 = vrot.slane %v6470, 7
    %v6533 = vrot.slane %v6480, 6
    %v6534 = vrot.slane %v6490, 5
    %v6535 = vrot.slane %v6500, 4
    %v6536 = vrot.slane %v6510, 3
    %vm6537 = vcmask 1040384
    %v6538 = vsel %vm6537, %v6380, %v6525
    %vm6539 = vcmask 1042434
    %v6540 = vsel %vm6539, %v6526, %v6527
    %vm6541 = vcmask 1041408
    %v6542 = vsel %vm6541, %v6538, %v6540
    %vm6543 = vcmask 1044484
    %v6544 = vsel %vm6543, %v6528, %v6529
    %vm6545 = vcmask 1046534
    %v6546 = vsel %vm6545, %v6530, %v6531
    %vm6547 = vcmask 1045508
    %v6548 = vsel %vm6547, %v6544, %v6546
    %vm6549 = vcmask 1043456
    %v6550 = vsel %vm6549, %v6542, %v6548
    %v6551 = vsel %vm6537, %v6460, %v6532
    %v6552 = vsel %vm6541, %v6551, %v6533
    %vm6553 = vcmask 1043459
    %v6554 = vsel %vm6553, %v6534, %v6535
    %vm6555 = vcmask 1044483
    %v6556 = vsel %vm6555, %v6554, %v6536
    %vm6557 = vcmask 1042432
    %v6558 = vsel %vm6557, %v6552, %v6556
    %v6561 = vmul.f32 %v6355, %v6550
    %v6562 = vmul.f32 %v6356, %v6558
    %v6563 = vld [vmem:[#allocation7] sm:$0xff]
    %v6564 = vld [vmem:[#allocation7 + $0x8] sm:$0x3f]
    %v6567 = vperm.slane %v6561, 0
    %v6568 = vperm.slane %v6561, 1
    %v6569 = vperm.slane %v6561, 2
    %v6570 = vperm.slane %v6561, 3
    %v6571 = vperm.slane %v6561, 4
    %v6572 = vperm.slane %v6561, 5
    %v6573 = vperm.slane %v6561, 6
    %v6574 = vperm.slane %v6561, 7
    %v6575 = vperm.slane %v6562, 0
    %v6576 = vperm.slane %v6562, 1
    %v6577 = vperm.slane %v6562, 2
    %v6578 = vperm.slane %v6562, 3
    %v6579 = vperm.slane %v6562, 4
    %v6580 = vperm.slane %v6562, 5
    %v6595 = vmul.f32 %v6285, %v6567
    %v6596 = vmul.f32 %v6286, %v6568
    %v6597 = vmul.f32 %v6287, %v6569
    %v6598 = vmul.f32 %v6288, %v6570
    %v6599 = vmul.f32 %v6289, %v6571
    %v6600 = vmul.f32 %v6290, %v6572
    %v6601 = vmul.f32 %v6291, %v6573
    %v6602 = vmul.f32 %v6292, %v6574
    %v6603 = vmul.f32 %v6293, %v6575
    %v6604 = vmul.f32 %v6294, %v6576
    %v6605 = vmul.f32 %v6295, %v6577
    %v6606 = vmul.f32 %v6296, %v6578
    %v6607 = vmul.f32 %v6297, %v6579
    %v6608 = vmul.f32 %v6298, %v6580
    %v6623 = vrot.slane %v6596, 7
    %v6624 = vrot.slane %v6597, 6
    %v6625 = vrot.slane %v6598, 5
    %v6626 = vrot.slane %v6599, 4
    %v6627 = vrot.slane %v6600, 3
    %v6628 = vrot.slane %v6601, 2
    %v6629 = vrot.slane %v6602, 1
    %v6630 = vrot.slane %v6604, 7
    %v6631 = vrot.slane %v6605, 6
    %v6632 = vrot.slane %v6606, 5
    %v6633 = vrot.slane %v6607, 4
    %v6634 = vrot.slane %v6608, 3
    %v6635 = vsel %vm6537, %v6595, %v6623
    %v6636 = vsel %vm6539, %v6624, %v6625
    %v6637 = vsel %vm6541, %v6635, %v6636
    %v6638 = vsel %vm6543, %v6626, %v6627
    %v6639 = vsel %vm6545, %v6628, %v6629
    %v6640 = vsel %vm6547, %v6638, %v6639
    %v6641 = vsel %vm6549, %v6637, %v6640
    %v6642 = vsel %vm6537, %v6603, %v6630
    %v6643 = vsel %vm6541, %v6642, %v6631
    %v6644 = vsel %vm6553, %v6632, %v6633
    %v6645 = vsel %vm6555, %v6644, %v6634
    %v6646 = vsel %vm6557, %v6643, %v6645
    %v6649 = vsub.f32 %v6563, %v6641
    %v6650 = vsub.f32 %v6564, %v6646
    %v6651 = vmul.f32 %v4917, %v6567
    %v6652 = vmul.f32 %v5008, %v6568
    %v6653 = vmul.f32 %v5099, %v6569
    %v6654 = vmul.f32 %v5190, %v6570
    %v6655 = vmul.f32 %v5281, %v6571
    %v6656 = vmul.f32 %v5372, %v6572
    %v6657 = vmul.f32 %v5463, %v6573
    %v6658 = vmul.f32 %v5554, %v6574
    %v6659 = vmul.f32 %v5645, %v6575
    %v6660 = vmul.f32 %v5736, %v6576
    %v6661 = vmul.f32 %v5827, %v6577
    %v6662 = vmul.f32 %v5918, %v6578
    %v6663 = vmul.f32 %v6009, %v6579
    %v6664 = vmul.f32 %v6100, %v6580
    %v6667 = vperm.slane %v6649, 0
    %v6668 = vperm.slane %v6649, 1
    %v6669 = vperm.slane %v6649, 2
    %v6670 = vperm.slane %v6649, 3
    %v6671 = vperm.slane %v6649, 4
    %v6672 = vperm.slane %v6649, 5
    %v6673 = vperm.slane %v6649, 6
    %v6674 = vperm.slane %v6649, 7
    %v6675 = vperm.slane %v6650, 0
    %v6676 = vperm.slane %v6650, 1
    %v6677 = vperm.slane %v6650, 2
    %v6678 = vperm.slane %v6650, 3
    %v6679 = vperm.slane %v6650, 4
    %v6680 = vperm.slane %v6650, 5
    %v6695 = vadd.f32 %v6651, %v6667
    %v6696 = vadd.f32 %v6652, %v6668
    %v6697 = vadd.f32 %v6653, %v6669
    %v6698 = vadd.f32 %v6654, %v6670
    %v6699 = vadd.f32 %v6655, %v6671
    %v6700 = vadd.f32 %v6656, %v6672
    %v6701 = vadd.f32 %v6657, %v6673
    %v6702 = vadd.f32 %v6658, %v6674
    %v6703 = vadd.f32 %v6659, %v6675
    %v6704 = vadd.f32 %v6660, %v6676
    %v6705 = vadd.f32 %v6661, %v6677
    %v6706 = vadd.f32 %v6662, %v6678
    %v6707 = vadd.f32 %v6663, %v6679
    %v6708 = vadd.f32 %v6664, %v6680
    %v6709 = vmax.f32 %v6695, 0.0
    %v6710 = vmax.f32 %v6696, 0.0
    %v6711 = vmax.f32 %v6697, 0.0
    %v6712 = vmax.f32 %v6698, 0.0
    %v6713 = vmax.f32 %v6699, 0.0
    %v6714 = vmax.f32 %v6700, 0.0
    %v6715 = vmax.f32 %v6701, 0.0
    %v6716 = vmax.f32 %v6702, 0.0
    %v6717 = vmax.f32 %v6703, 0.0
    %v6718 = vmax.f32 %v6704, 0.0
    %v6719 = vmax.f32 %v6705, 0.0
    %v6720 = vmax.f32 %v6706, 0.0
    %v6721 = vmax.f32 %v6707, 0.0
    %v6722 = vmax.f32 %v6708, 0.0
    %v6723 = vpack.c.bf16 %v6709, %v6709
    %v6724 = vpack.c.bf16 %v6710, %v6710
    %v6725 = vpack.c.bf16 %v6711, %v6711
    %v6726 = vpack.c.bf16 %v6712, %v6712
    %v6727 = vpack.c.bf16 %v6713, %v6713
    %v6728 = vpack.c.bf16 %v6714, %v6714
    %v6729 = vpack.c.bf16 %v6715, %v6715
    %v6730 = vpack.c.bf16 %v6716, %v6716
    %v6731 = vpack.c.bf16 %v6717, %v6717
    %v6732 = vpack.c.bf16 %v6718, %v6718
    %v6733 = vpack.c.bf16 %v6719, %v6719
    %v6734 = vpack.c.bf16 %v6720, %v6720
    %v6735 = vpack.c.bf16 %v6721, %v6721
    %v6736 = vpack.c.bf16 %v6722, %v6722
    %v6737 = vld [vmem:[#allocation8] sm:$0xf]
    %v6738 = vld [vmem:[#allocation8 + $0x4] sm:$0xf]
    %v6739 = vld [vmem:[#allocation8 + $0x8] sm:$0xf]
    %v6740 = vld [vmem:[#allocation8 + $0xc] sm:$0xf]
    %v6741 = vld [vmem:[#allocation8 + $0x10] sm:$0xf]
    %v6742 = vld [vmem:[#allocation8 + $0x14] sm:$0xf]
    %v6743 = vld [vmem:[#allocation8 + $0x18] sm:$0xf]
    %v6744 = vld [vmem:[#allocation8 + $0x1c] sm:$0xf]
    %v6745 = vld [vmem:[#allocation8 + $0x20] sm:$0xf]
    %v6746 = vld [vmem:[#allocation8 + $0x24] sm:$0xf]
    %v6747 = vld [vmem:[#allocation8 + $0x28] sm:$0xf]
    %v6748 = vld [vmem:[#allocation8 + $0x2c] sm:$0xf]
    %v6749 = vld [vmem:[#allocation8 + $0x30] sm:$0xf]
    %v6750 = vld [vmem:[#allocation8 + $0x34] sm:$0xf]
    %v6751 = vld [vmem:[#allocation8 + $0x38] sm:$0xf]
    %v6752 = vld [vmem:[#allocation8 + $0x3c] sm:$0xf]
    %v6753 = vld [vmem:[#allocation8 + $0x40] sm:$0xf]
    %v6754 = vld [vmem:[#allocation8 + $0x44] sm:$0xf]
    %v6755 = vld [vmem:[#allocation8 + $0x48] sm:$0xf]
    %v6756 = vld [vmem:[#allocation8 + $0x4c] sm:$0xf]
    %v6757 = vld [vmem:[#allocation8 + $0x50] sm:$0xf]
    %v6758 = vld [vmem:[#allocation8 + $0x54] sm:$0xf]
    %v6759 = vld [vmem:[#allocation8 + $0x58] sm:$0xf]
    %v6760 = vld [vmem:[#allocation8 + $0x5c] sm:$0xf]
    %v6761 = vld [vmem:[#allocation8 + $0x60] sm:$0xf]
    %v6762 = vld [vmem:[#allocation8 + $0x64] sm:$0xf]
    %v6763 = vld [vmem:[#allocation8 + $0x68] sm:$0xf]
    %v6764 = vld [vmem:[#allocation8 + $0x6c] sm:$0xf]
    %v6765 = vld [vmem:[#allocation8 + $0x70] sm:$0xf]
    %v6766 = vld [vmem:[#allocation8 + $0x74] sm:$0xf]
    %v6767 = vld [vmem:[#allocation8 + $0x78] sm:$0xf]
    %v6768 = vld [vmem:[#allocation8 + $0x7c] sm:$0xf]
    %v6769 = vld [vmem:[#allocation8 + $0x80] sm:$0xf]
    %v6770 = vld [vmem:[#allocation8 + $0x84] sm:$0xf]
    %v6771 = vld [vmem:[#allocation8 + $0x88] sm:$0xf]
    %v6772 = vld [vmem:[#allocation8 + $0x8c] sm:$0xf]
    %v6773 = vld [vmem:[#allocation8 + $0x90] sm:$0xf]
    %v6774 = vld [vmem:[#allocation8 + $0x94] sm:$0xf]
    %v6775 = vld [vmem:[#allocation8 + $0x98] sm:$0xf]
    %v6776 = vld [vmem:[#allocation8 + $0x9c] sm:$0xf]
    %v6777 = vld [vmem:[#allocation8 + $0xa0] sm:$0xf]
    %v6778 = vld [vmem:[#allocation8 + $0xa4] sm:$0xf]
    %v6779 = vld [vmem:[#allocation8 + $0xa8] sm:$0xf]
    %v6780 = vld [vmem:[#allocation8 + $0xac] sm:$0xf]
    %v6781 = vld [vmem:[#allocation8 + $0xb0] sm:$0xf]
    %v6782 = vld [vmem:[#allocation8 + $0xb4] sm:$0xf]
    %v6783 = vld [vmem:[#allocation8 + $0xb8] sm:$0xf]
    %v6784 = vld [vmem:[#allocation8 + $0xbc] sm:$0xf]
    %v6785 = vld [vmem:[#allocation8 + $0xc0] sm:$0xf]
    %v6786 = vld [vmem:[#allocation8 + $0xc4] sm:$0xf]
    %v6787 = vld [vmem:[#allocation8 + $0xc8] sm:$0xf]
    %v6788 = vld [vmem:[#allocation8 + $0xcc] sm:$0xf]
    %v6789 = vld [vmem:[#allocation8 + $0xd0] sm:$0xf]
    %v6790 = vld [vmem:[#allocation8 + $0xd4] sm:$0xf]
    %v6791 = vld [vmem:[#allocation8 + $0xd8] sm:$0xf]
    %v6792 = vld [vmem:[#allocation8 + $0xdc] sm:$0xf]
    %v6793 = vld [vmem:[#allocation8 + $0xe0] sm:$0xf]
    %v6794 = vld [vmem:[#allocation8 + $0xe4] sm:$0xf]
    %v6795 = vld [vmem:[#allocation8 + $0xe8] sm:$0xf]
    %v6796 = vld [vmem:[#allocation8 + $0xec] sm:$0xf]
    %v6797 = vld [vmem:[#allocation8 + $0xf0] sm:$0xf]
    %v6798 = vld [vmem:[#allocation8 + $0xf4] sm:$0xf]
    %v6799 = vld [vmem:[#allocation8 + $0xf8] sm:$0xf]
    %v6800 = vld [vmem:[#allocation8 + $0xfc] sm:$0xf]
    %v6801 = vld [vmem:[#allocation8 + $0x100] sm:$0xf]
    %v6802 = vld [vmem:[#allocation8 + $0x104] sm:$0xf]
    %v6803 = vld [vmem:[#allocation8 + $0x108] sm:$0xf]
    %v6804 = vld [vmem:[#allocation8 + $0x10c] sm:$0xf]
    %v6805 = vld [vmem:[#allocation8 + $0x110] sm:$0xf]
    %v6806 = vld [vmem:[#allocation8 + $0x114] sm:$0xf]
    %v6807 = vld [vmem:[#allocation8 + $0x118] sm:$0xf]
    %v6808 = vld [vmem:[#allocation8 + $0x11c] sm:$0xf]
    %v6809 = vld [vmem:[#allocation8 + $0x120] sm:$0xf]
    %v6810 = vld [vmem:[#allocation8 + $0x124] sm:$0xf]
    %v6811 = vld [vmem:[#allocation8 + $0x128] sm:$0xf]
    %v6812 = vld [vmem:[#allocation8 + $0x12c] sm:$0xf]
    %v6813 = vld [vmem:[#allocation8 + $0x130] sm:$0xf]
    %v6814 = vld [vmem:[#allocation8 + $0x134] sm:$0xf]
    %v6815 = vld [vmem:[#allocation8 + $0x138] sm:$0xf]
    %v6816 = vld [vmem:[#allocation8 + $0x13c] sm:$0xf]
    %v6817 = vld [vmem:[#allocation8 + $0x140] sm:$0xf]
    %v6818 = vld [vmem:[#allocation8 + $0x144] sm:$0xf]
    %v6819 = vld [vmem:[#allocation8 + $0x148] sm:$0xf]
    %v6820 = vld [vmem:[#allocation8 + $0x14c] sm:$0xf]
    %v6821 = vld [vmem:[#allocation8 + $0x150] sm:$0xf]
    %v6822 = vld [vmem:[#allocation8 + $0x154] sm:$0xf]
    %v6823 = vld [vmem:[#allocation8 + $0x158] sm:$0xf]
    %v6824 = vld [vmem:[#allocation8 + $0x15c] sm:$0xf]
    %v6825 = vld [vmem:[#allocation8 + $0x160] sm:$0xf]
    %v6826 = vld [vmem:[#allocation8 + $0x164] sm:$0xf]
    %v6827 = vld [vmem:[#allocation8 + $0x168] sm:$0xf]
    %v6828 = vld [vmem:[#allocation8 + $0x16c] sm:$0xf]
    %v6829 = vld [vmem:[#allocation8 + $0x170] sm:$0xf]
    %v6830 = vld [vmem:[#allocation8 + $0x174] sm:$0xf]
    %v6831 = vld [vmem:[#allocation8 + $0x178] sm:$0xf]
    %v6832 = vld [vmem:[#allocation8 + $0x17c] sm:$0xf]
    %v6833 = vld [vmem:[#allocation8 + $0x180] sm:$0xf]
    %v6834 = vld [vmem:[#allocation8 + $0x184] sm:$0xf]
    %v6835 = vld [vmem:[#allocation8 + $0x188] sm:$0xf]
    %v6836 = vld [vmem:[#allocation8 + $0x18c] sm:$0xf]
    %v6837 = vld [vmem:[#allocation8 + $0x190] sm:$0xf]
    %v6838 = vld [vmem:[#allocation8 + $0x194] sm:$0xf]
    %v6839 = vld [vmem:[#allocation8 + $0x198] sm:$0xf]
    %v6840 = vld [vmem:[#allocation8 + $0x19c] sm:$0xf]
    %v6841 = vld [vmem:[#allocation8 + $0x1a0] sm:$0xf]
    %v6842 = vld [vmem:[#allocation8 + $0x1a4] sm:$0xf]
    %v6843 = vld [vmem:[#allocation8 + $0x1a8] sm:$0xf]
    %v6844 = vld [vmem:[#allocation8 + $0x1ac] sm:$0xf]
    %v6845 = vld [vmem:[#allocation8 + $0x1b0] sm:$0xf]
    %v6846 = vld [vmem:[#allocation8 + $0x1b4] sm:$0xf]
    %v6847 = vld [vmem:[#allocation8 + $0x1b8] sm:$0xf]
    %v6848 = vld [vmem:[#allocation8 + $0x1bc] sm:$0xf]
    %v6849 = vld [vmem:[#allocation8 + $0x1c0] sm:$0xf]
    %v6850 = vld [vmem:[#allocation8 + $0x1c4] sm:$0xf]
    %v6851 = vld [vmem:[#allocation8 + $0x1c8] sm:$0xf]
    %v6852 = vld [vmem:[#allocation8 + $0x1cc] sm:$0xf]
    %v6853 = vld [vmem:[#allocation8 + $0x1d0] sm:$0xf]
    %v6854 = vld [vmem:[#allocation8 + $0x1d4] sm:$0xf]
    %v6855 = vld [vmem:[#allocation8 + $0x1d8] sm:$0xf]
    %v6856 = vld [vmem:[#allocation8 + $0x1dc] sm:$0xf]
    %v6857 = vld [vmem:[#allocation8 + $0x1e0] sm:$0xf]
    %v6858 = vld [vmem:[#allocation8 + $0x1e4] sm:$0xf]
    %v6859 = vld [vmem:[#allocation8 + $0x1e8] sm:$0xf]
    %v6860 = vld [vmem:[#allocation8 + $0x1ec] sm:$0xf]
    %v6861 = vld [vmem:[#allocation8 + $0x1f0] sm:$0xf]
    %v6862 = vld [vmem:[#allocation8 + $0x1f4] sm:$0xf]
    %v6863 = vld [vmem:[#allocation8 + $0x1f8] sm:$0xf]
    %v6864 = vld [vmem:[#allocation8 + $0x1fc] sm:$0xf]
    %v6865 = vld [vmem:[#allocation8 + $0x200] sm:$0xf]
    %v6866 = vld [vmem:[#allocation8 + $0x204] sm:$0xf]
    %v6867 = vld [vmem:[#allocation8 + $0x208] sm:$0xf]
    %v6868 = vld [vmem:[#allocation8 + $0x20c] sm:$0xf]
    %v6869 = vld [vmem:[#allocation8 + $0x210] sm:$0xf]
    %v6870 = vld [vmem:[#allocation8 + $0x214] sm:$0xf]
    %v6871 = vld [vmem:[#allocation8 + $0x218] sm:$0xf]
    %v6872 = vld [vmem:[#allocation8 + $0x21c] sm:$0xf]
    %v6873 = vld [vmem:[#allocation8 + $0x220] sm:$0xf]
    %v6874 = vld [vmem:[#allocation8 + $0x224] sm:$0xf]
    %v6875 = vld [vmem:[#allocation8 + $0x228] sm:$0xf]
    %v6876 = vld [vmem:[#allocation8 + $0x22c] sm:$0xf]
    %v6877 = vld [vmem:[#allocation8 + $0x230] sm:$0xf]
    %v6878 = vld [vmem:[#allocation8 + $0x234] sm:$0xf]
    %v6879 = vld [vmem:[#allocation8 + $0x238] sm:$0xf]
    %v6880 = vld [vmem:[#allocation8 + $0x23c] sm:$0xf]
    %v6881 = vld [vmem:[#allocation8 + $0x240] sm:$0xf]
    %v6882 = vld [vmem:[#allocation8 + $0x244] sm:$0xf]
    %v6883 = vld [vmem:[#allocation8 + $0x248] sm:$0xf]
    %v6884 = vld [vmem:[#allocation8 + $0x24c] sm:$0xf]
    %v6885 = vld [vmem:[#allocation8 + $0x250] sm:$0xf]
    %v6886 = vld [vmem:[#allocation8 + $0x254] sm:$0xf]
    %v6887 = vld [vmem:[#allocation8 + $0x258] sm:$0xf]
    %v6888 = vld [vmem:[#allocation8 + $0x25c] sm:$0xf]
    %v6889 = vld [vmem:[#allocation8 + $0x260] sm:$0xf]
    %v6890 = vld [vmem:[#allocation8 + $0x264] sm:$0xf]
    %v6891 = vld [vmem:[#allocation8 + $0x268] sm:$0xf]
    %v6892 = vld [vmem:[#allocation8 + $0x26c] sm:$0xf]
    %v6893 = vld [vmem:[#allocation8 + $0x270] sm:$0xf]
    %v6894 = vld [vmem:[#allocation8 + $0x274] sm:$0xf]
    %v6895 = vld [vmem:[#allocation8 + $0x278] sm:$0xf]
    %v6896 = vld [vmem:[#allocation8 + $0x27c] sm:$0xf]
    %v6897 = vld [vmem:[#allocation8 + $0x280] sm:$0xf]
    %v6898 = vld [vmem:[#allocation8 + $0x284] sm:$0xf]
    %v6899 = vld [vmem:[#allocation8 + $0x288] sm:$0xf]
    %v6900 = vld [vmem:[#allocation8 + $0x28c] sm:$0xf]
    %v6901 = vld [vmem:[#allocation8 + $0x290] sm:$0xf]
    %v6902 = vld [vmem:[#allocation8 + $0x294] sm:$0xf]
    %v6903 = vld [vmem:[#allocation8 + $0x298] sm:$0xf]
    %v6904 = vld [vmem:[#allocation8 + $0x29c] sm:$0xf]
    %v6905 = vld [vmem:[#allocation8 + $0x2a0] sm:$0xf]
    %v6906 = vld [vmem:[#allocation8 + $0x2a4] sm:$0xf]
    %v6907 = vld [vmem:[#allocation8 + $0x2a8] sm:$0xf]
    %v6908 = vld [vmem:[#allocation8 + $0x2ac] sm:$0xf]
    %v6909 = vld [vmem:[#allocation8 + $0x2b0] sm:$0xf]
    %v6910 = vld [vmem:[#allocation8 + $0x2b4] sm:$0xf]
    %v6911 = vld [vmem:[#allocation8 + $0x2b8] sm:$0xf]
    %v6912 = vld [vmem:[#allocation8 + $0x2bc] sm:$0xf]
    %v6913 = vld [vmem:[#allocation8 + $0x2c0] sm:$0xf]
    %v6914 = vld [vmem:[#allocation8 + $0x2c4] sm:$0xf]
    %v6915 = vld [vmem:[#allocation8 + $0x2c8] sm:$0xf]
    %v6916 = vld [vmem:[#allocation8 + $0x2cc] sm:$0xf]
    %v6917 = vld [vmem:[#allocation8 + $0x2d0] sm:$0xf]
    %v6918 = vld [vmem:[#allocation8 + $0x2d4] sm:$0xf]
    %v6919 = vld [vmem:[#allocation8 + $0x2d8] sm:$0xf]
    %v6920 = vld [vmem:[#allocation8 + $0x2dc] sm:$0xf]
    %v6921 = vld [vmem:[#allocation8 + $0x2e0] sm:$0xf]
    %v6922 = vld [vmem:[#allocation8 + $0x2e4] sm:$0xf]
    %v6923 = vld [vmem:[#allocation8 + $0x2e8] sm:$0xf]
    %v6924 = vld [vmem:[#allocation8 + $0x2ec] sm:$0xf]
    %v6925 = vld [vmem:[#allocation8 + $0x2f0] sm:$0xf]
    %v6926 = vld [vmem:[#allocation8 + $0x2f4] sm:$0xf]
    %v6927 = vld [vmem:[#allocation8 + $0x2f8] sm:$0xf]
    %v6928 = vld [vmem:[#allocation8 + $0x2fc] sm:$0xf]
    %v6929 = vld [vmem:[#allocation8 + $0x300] sm:$0xf]
    %v6930 = vld [vmem:[#allocation8 + $0x304] sm:$0xf]
    %v6931 = vld [vmem:[#allocation8 + $0x308] sm:$0xf]
    %v6932 = vld [vmem:[#allocation8 + $0x30c] sm:$0xf]
    %v6933 = vld [vmem:[#allocation8 + $0x310] sm:$0xf]
    %v6934 = vld [vmem:[#allocation8 + $0x314] sm:$0xf]
    %v6935 = vld [vmem:[#allocation8 + $0x318] sm:$0xf]
    %v6936 = vld [vmem:[#allocation8 + $0x31c] sm:$0xf]
    %v6937 = vld [vmem:[#allocation8 + $0x320] sm:$0xf]
    %v6938 = vld [vmem:[#allocation8 + $0x324] sm:$0xf]
    %v6939 = vld [vmem:[#allocation8 + $0x328] sm:$0xf]
    %v6940 = vld [vmem:[#allocation8 + $0x32c] sm:$0xf]
    %v6941 = vld [vmem:[#allocation8 + $0x330] sm:$0xf]
    %v6942 = vld [vmem:[#allocation8 + $0x334] sm:$0xf]
    %v6943 = vld [vmem:[#allocation8 + $0x338] sm:$0xf]
    %v6944 = vld [vmem:[#allocation8 + $0x33c] sm:$0xf]
    %v6945 = vld [vmem:[#allocation8 + $0x340] sm:$0xf]
    %v6946 = vld [vmem:[#allocation8 + $0x344] sm:$0xf]
    %v6947 = vld [vmem:[#allocation8 + $0x348] sm:$0xf]
    %v6948 = vld [vmem:[#allocation8 + $0x34c] sm:$0xf]
    %v6949 = vld [vmem:[#allocation8 + $0x350] sm:$0xf]
    %v6950 = vld [vmem:[#allocation8 + $0x354] sm:$0xf]
    %v6951 = vld [vmem:[#allocation8 + $0x358] sm:$0xf]
    %v6952 = vld [vmem:[#allocation8 + $0x35c] sm:$0xf]
    %v6953 = vld [vmem:[#allocation8 + $0x360] sm:$0xf]
    %v6954 = vld [vmem:[#allocation8 + $0x364] sm:$0xf]
    %v6955 = vld [vmem:[#allocation8 + $0x368] sm:$0xf]
    %v6956 = vld [vmem:[#allocation8 + $0x36c] sm:$0xf]
    %v6957 = vld [vmem:[#allocation8 + $0x370] sm:$0xf]
    %v6958 = vld [vmem:[#allocation8 + $0x374] sm:$0xf]
    %v6959 = vld [vmem:[#allocation8 + $0x378] sm:$0xf]
    %v6960 = vld [vmem:[#allocation8 + $0x37c] sm:$0xf]
    %v7185 = vunpack.c.l.b16 %v6737
    %v7186 = vunpack.c.l.b16 %v6738
    %v7187 = vunpack.c.l.b16 %v6739
    %v7188 = vunpack.c.l.b16 %v6740
    %v7189 = vunpack.c.l.b16 %v6741
    %v7190 = vunpack.c.l.b16 %v6742
    %v7191 = vunpack.c.l.b16 %v6743
    %v7192 = vunpack.c.l.b16 %v6744
    %v7193 = vunpack.c.l.b16 %v6745
    %v7194 = vunpack.c.l.b16 %v6746
    %v7195 = vunpack.c.l.b16 %v6747
    %v7196 = vunpack.c.l.b16 %v6748
    %v7197 = vunpack.c.l.b16 %v6749
    %v7198 = vunpack.c.l.b16 %v6750
    %v7199 = vunpack.c.l.b16 %v6751
    %v7200 = vunpack.c.l.b16 %v6752
    %v7201 = vunpack.c.l.b16 %v6753
    %v7202 = vunpack.c.l.b16 %v6754
    %v7203 = vunpack.c.l.b16 %v6755
    %v7204 = vunpack.c.l.b16 %v6756
    %v7205 = vunpack.c.l.b16 %v6757
    %v7206 = vunpack.c.l.b16 %v6758
    %v7207 = vunpack.c.l.b16 %v6759
    %v7208 = vunpack.c.l.b16 %v6760
    %v7209 = vunpack.c.l.b16 %v6761
    %v7210 = vunpack.c.l.b16 %v6762
    %v7211 = vunpack.c.l.b16 %v6763
    %v7212 = vunpack.c.l.b16 %v6764
    %v7213 = vunpack.c.l.b16 %v6765
    %v7214 = vunpack.c.l.b16 %v6766
    %v7215 = vunpack.c.l.b16 %v6767
    %v7216 = vunpack.c.l.b16 %v6768
    %v7217 = vunpack.c.l.b16 %v6769
    %v7218 = vunpack.c.l.b16 %v6770
    %v7219 = vunpack.c.l.b16 %v6771
    %v7220 = vunpack.c.l.b16 %v6772
    %v7221 = vunpack.c.l.b16 %v6773
    %v7222 = vunpack.c.l.b16 %v6774
    %v7223 = vunpack.c.l.b16 %v6775
    %v7224 = vunpack.c.l.b16 %v6776
    %v7225 = vunpack.c.l.b16 %v6777
    %v7226 = vunpack.c.l.b16 %v6778
    %v7227 = vunpack.c.l.b16 %v6779
    %v7228 = vunpack.c.l.b16 %v6780
    %v7229 = vunpack.c.l.b16 %v6781
    %v7230 = vunpack.c.l.b16 %v6782
    %v7231 = vunpack.c.l.b16 %v6783
    %v7232 = vunpack.c.l.b16 %v6784
    %v7233 = vunpack.c.l.b16 %v6785
    %v7234 = vunpack.c.l.b16 %v6786
    %v7235 = vunpack.c.l.b16 %v6787
    %v7236 = vunpack.c.l.b16 %v6788
    %v7237 = vunpack.c.l.b16 %v6789
    %v7238 = vunpack.c.l.b16 %v6790
    %v7239 = vunpack.c.l.b16 %v6791
    %v7240 = vunpack.c.l.b16 %v6792
    %v7241 = vunpack.c.l.b16 %v6793
    %v7242 = vunpack.c.l.b16 %v6794
    %v7243 = vunpack.c.l.b16 %v6795
    %v7244 = vunpack.c.l.b16 %v6796
    %v7245 = vunpack.c.l.b16 %v6797
    %v7246 = vunpack.c.l.b16 %v6798
    %v7247 = vunpack.c.l.b16 %v6799
    %v7248 = vunpack.c.l.b16 %v6800
    %v7249 = vunpack.c.l.b16 %v6801
    %v7250 = vunpack.c.l.b16 %v6802
    %v7251 = vunpack.c.l.b16 %v6803
    %v7252 = vunpack.c.l.b16 %v6804
    %v7253 = vunpack.c.l.b16 %v6805
    %v7254 = vunpack.c.l.b16 %v6806
    %v7255 = vunpack.c.l.b16 %v6807
    %v7256 = vunpack.c.l.b16 %v6808
    %v7257 = vunpack.c.l.b16 %v6809
    %v7258 = vunpack.c.l.b16 %v6810
    %v7259 = vunpack.c.l.b16 %v6811
    %v7260 = vunpack.c.l.b16 %v6812
    %v7261 = vunpack.c.l.b16 %v6813
    %v7262 = vunpack.c.l.b16 %v6814
    %v7263 = vunpack.c.l.b16 %v6815
    %v7264 = vunpack.c.l.b16 %v6816
    %v7265 = vunpack.c.l.b16 %v6817
    %v7266 = vunpack.c.l.b16 %v6818
    %v7267 = vunpack.c.l.b16 %v6819
    %v7268 = vunpack.c.l.b16 %v6820
    %v7269 = vunpack.c.l.b16 %v6821
    %v7270 = vunpack.c.l.b16 %v6822
    %v7271 = vunpack.c.l.b16 %v6823
    %v7272 = vunpack.c.l.b16 %v6824
    %v7273 = vunpack.c.l.b16 %v6825
    %v7274 = vunpack.c.l.b16 %v6826
    %v7275 = vunpack.c.l.b16 %v6827
    %v7276 = vunpack.c.l.b16 %v6828
    %v7277 = vunpack.c.l.b16 %v6829
    %v7278 = vunpack.c.l.b16 %v6830
    %v7279 = vunpack.c.l.b16 %v6831
    %v7280 = vunpack.c.l.b16 %v6832
    %v7281 = vunpack.c.l.b16 %v6833
    %v7282 = vunpack.c.l.b16 %v6834
    %v7283 = vunpack.c.l.b16 %v6835
    %v7284 = vunpack.c.l.b16 %v6836
    %v7285 = vunpack.c.l.b16 %v6837
    %v7286 = vunpack.c.l.b16 %v6838
    %v7287 = vunpack.c.l.b16 %v6839
    %v7288 = vunpack.c.l.b16 %v6840
    %v7289 = vunpack.c.l.b16 %v6841
    %v7290 = vunpack.c.l.b16 %v6842
    %v7291 = vunpack.c.l.b16 %v6843
    %v7292 = vunpack.c.l.b16 %v6844
    %v7293 = vunpack.c.l.b16 %v6845
    %v7294 = vunpack.c.l.b16 %v6846
    %v7295 = vunpack.c.l.b16 %v6847
    %v7296 = vunpack.c.l.b16 %v6848
    %v7297 = vunpack.c.l.b16 %v6849
    %v7298 = vunpack.c.l.b16 %v6850
    %v7299 = vunpack.c.l.b16 %v6851
    %v7300 = vunpack.c.l.b16 %v6852
    %v7301 = vunpack.c.l.b16 %v6853
    %v7302 = vunpack.c.l.b16 %v6854
    %v7303 = vunpack.c.l.b16 %v6855
    %v7304 = vunpack.c.l.b16 %v6856
    %v7305 = vunpack.c.l.b16 %v6857
    %v7306 = vunpack.c.l.b16 %v6858
    %v7307 = vunpack.c.l.b16 %v6859
    %v7308 = vunpack.c.l.b16 %v6860
    %v7309 = vunpack.c.l.b16 %v6861
    %v7310 = vunpack.c.l.b16 %v6862
    %v7311 = vunpack.c.l.b16 %v6863
    %v7312 = vunpack.c.l.b16 %v6864
    %v7313 = vunpack.c.l.b16 %v6865
    %v7314 = vunpack.c.l.b16 %v6866
    %v7315 = vunpack.c.l.b16 %v6867
    %v7316 = vunpack.c.l.b16 %v6868
    %v7317 = vunpack.c.l.b16 %v6869
    %v7318 = vunpack.c.l.b16 %v6870
    %v7319 = vunpack.c.l.b16 %v6871
    %v7320 = vunpack.c.l.b16 %v6872
    %v7321 = vunpack.c.l.b16 %v6873
    %v7322 = vunpack.c.l.b16 %v6874
    %v7323 = vunpack.c.l.b16 %v6875
    %v7324 = vunpack.c.l.b16 %v6876
    %v7325 = vunpack.c.l.b16 %v6877
    %v7326 = vunpack.c.l.b16 %v6878
    %v7327 = vunpack.c.l.b16 %v6879
    %v7328 = vunpack.c.l.b16 %v6880
    %v7329 = vunpack.c.l.b16 %v6881
    %v7330 = vunpack.c.l.b16 %v6882
    %v7331 = vunpack.c.l.b16 %v6883
    %v7332 = vunpack.c.l.b16 %v6884
    %v7333 = vunpack.c.l.b16 %v6885
    %v7334 = vunpack.c.l.b16 %v6886
    %v7335 = vunpack.c.l.b16 %v6887
    %v7336 = vunpack.c.l.b16 %v6888
    %v7337 = vunpack.c.l.b16 %v6889
    %v7338 = vunpack.c.l.b16 %v6890
    %v7339 = vunpack.c.l.b16 %v6891
    %v7340 = vunpack.c.l.b16 %v6892
    %v7341 = vunpack.c.l.b16 %v6893
    %v7342 = vunpack.c.l.b16 %v6894
    %v7343 = vunpack.c.l.b16 %v6895
    %v7344 = vunpack.c.l.b16 %v6896
    %v7345 = vunpack.c.l.b16 %v6897
    %v7346 = vunpack.c.l.b16 %v6898
    %v7347 = vunpack.c.l.b16 %v6899
    %v7348 = vunpack.c.l.b16 %v6900
    %v7349 = vunpack.c.l.b16 %v6901
    %v7350 = vunpack.c.l.b16 %v6902
    %v7351 = vunpack.c.l.b16 %v6903
    %v7352 = vunpack.c.l.b16 %v6904
    %v7353 = vunpack.c.l.b16 %v6905
    %v7354 = vunpack.c.l.b16 %v6906
    %v7355 = vunpack.c.l.b16 %v6907
    %v7356 = vunpack.c.l.b16 %v6908
    %v7357 = vunpack.c.l.b16 %v6909
    %v7358 = vunpack.c.l.b16 %v6910
    %v7359 = vunpack.c.l.b16 %v6911
    %v7360 = vunpack.c.l.b16 %v6912
    %v7361 = vunpack.c.l.b16 %v6913
    %v7362 = vunpack.c.l.b16 %v6914
    %v7363 = vunpack.c.l.b16 %v6915
    %v7364 = vunpack.c.l.b16 %v6916
    %v7365 = vunpack.c.l.b16 %v6917
    %v7366 = vunpack.c.l.b16 %v6918
    %v7367 = vunpack.c.l.b16 %v6919
    %v7368 = vunpack.c.l.b16 %v6920
    %v7369 = vunpack.c.l.b16 %v6921
    %v7370 = vunpack.c.l.b16 %v6922
    %v7371 = vunpack.c.l.b16 %v6923
    %v7372 = vunpack.c.l.b16 %v6924
    %v7373 = vunpack.c.l.b16 %v6925
    %v7374 = vunpack.c.l.b16 %v6926
    %v7375 = vunpack.c.l.b16 %v6927
    %v7376 = vunpack.c.l.b16 %v6928
    %v7377 = vunpack.c.l.b16 %v6929
    %v7378 = vunpack.c.l.b16 %v6930
    %v7379 = vunpack.c.l.b16 %v6931
    %v7380 = vunpack.c.l.b16 %v6932
    %v7381 = vunpack.c.l.b16 %v6933
    %v7382 = vunpack.c.l.b16 %v6934
    %v7383 = vunpack.c.l.b16 %v6935
    %v7384 = vunpack.c.l.b16 %v6936
    %v7385 = vunpack.c.l.b16 %v6937
    %v7386 = vunpack.c.l.b16 %v6938
    %v7387 = vunpack.c.l.b16 %v6939
    %v7388 = vunpack.c.l.b16 %v6940
    %v7389 = vunpack.c.l.b16 %v6941
    %v7390 = vunpack.c.l.b16 %v6942
    %v7391 = vunpack.c.l.b16 %v6943
    %v7392 = vunpack.c.l.b16 %v6944
    %v7393 = vunpack.c.l.b16 %v6945
    %v7394 = vunpack.c.l.b16 %v6946
    %v7395 = vunpack.c.l.b16 %v6947
    %v7396 = vunpack.c.l.b16 %v6948
    %v7397 = vunpack.c.l.b16 %v6949
    %v7398 = vunpack.c.l.b16 %v6950
    %v7399 = vunpack.c.l.b16 %v6951
    %v7400 = vunpack.c.l.b16 %v6952
    %v7401 = vunpack.c.l.b16 %v6953
    %v7402 = vunpack.c.l.b16 %v6954
    %v7403 = vunpack.c.l.b16 %v6955
    %v7404 = vunpack.c.l.b16 %v6956
    %v7405 = vunpack.c.l.b16 %v6957
    %v7406 = vunpack.c.l.b16 %v6958
    %v7407 = vunpack.c.l.b16 %v6959
    %v7408 = vunpack.c.l.b16 %v6960
    %v7409 = vpack.c.b16 %v7186, %v7185
    %v7410 = vpack.c.b16 %v7188, %v7187
    %v7411 = vpack.c.b16 %v7190, %v7189
    %v7412 = vpack.c.b16 %v7192, %v7191
    %v7413 = vpack.c.b16 %v7194, %v7193
    %v7414 = vpack.c.b16 %v7196, %v7195
    %v7415 = vpack.c.b16 %v7198, %v7197
    %v7416 = vpack.c.b16 %v7200, %v7199
    %v7417 = vpack.c.b16 %v7202, %v7201
    %v7418 = vpack.c.b16 %v7204, %v7203
    %v7419 = vpack.c.b16 %v7206, %v7205
    %v7420 = vpack.c.b16 %v7208, %v7207
    %v7421 = vpack.c.b16 %v7210, %v7209
    %v7422 = vpack.c.b16 %v7212, %v7211
    %v7423 = vpack.c.b16 %v7214, %v7213
    %v7424 = vpack.c.b16 %v7216, %v7215
    %v7425 = vpack.c.b16 %v7218, %v7217
    %v7426 = vpack.c.b16 %v7220, %v7219
    %v7427 = vpack.c.b16 %v7222, %v7221
    %v7428 = vpack.c.b16 %v7224, %v7223
    %v7429 = vpack.c.b16 %v7226, %v7225
    %v7430 = vpack.c.b16 %v7228, %v7227
    %v7431 = vpack.c.b16 %v7230, %v7229
    %v7432 = vpack.c.b16 %v7232, %v7231
    %v7433 = vpack.c.b16 %v7234, %v7233
    %v7434 = vpack.c.b16 %v7236, %v7235
    %v7435 = vpack.c.b16 %v7238, %v7237
    %v7436 = vpack.c.b16 %v7240, %v7239
    %v7437 = vpack.c.b16 %v7242, %v7241
    %v7438 = vpack.c.b16 %v7244, %v7243
    %v7439 = vpack.c.b16 %v7246, %v7245
    %v7440 = vpack.c.b16 %v7248, %v7247
    %v7441 = vpack.c.b16 %v7250, %v7249
    %v7442 = vpack.c.b16 %v7252, %v7251
    %v7443 = vpack.c.b16 %v7254, %v7253
    %v7444 = vpack.c.b16 %v7256, %v7255
    %v7445 = vpack.c.b16 %v7258, %v7257
    %v7446 = vpack.c.b16 %v7260, %v7259
    %v7447 = vpack.c.b16 %v7262, %v7261
    %v7448 = vpack.c.b16 %v7264, %v7263
    %v7449 = vpack.c.b16 %v7266, %v7265
    %v7450 = vpack.c.b16 %v7268, %v7267
    %v7451 = vpack.c.b16 %v7270, %v7269
    %v7452 = vpack.c.b16 %v7272, %v7271
    %v7453 = vpack.c.b16 %v7274, %v7273
    %v7454 = vpack.c.b16 %v7276, %v7275
    %v7455 = vpack.c.b16 %v7278, %v7277
    %v7456 = vpack.c.b16 %v7280, %v7279
    %v7457 = vpack.c.b16 %v7282, %v7281
    %v7458 = vpack.c.b16 %v7284, %v7283
    %v7459 = vpack.c.b16 %v7286, %v7285
    %v7460 = vpack.c.b16 %v7288, %v7287
    %v7461 = vpack.c.b16 %v7290, %v7289
    %v7462 = vpack.c.b16 %v7292, %v7291
    %v7463 = vpack.c.b16 %v7294, %v7293
    %v7464 = vpack.c.b16 %v7296, %v7295
    %v7465 = vpack.c.b16 %v7298, %v7297
    %v7466 = vpack.c.b16 %v7300, %v7299
    %v7467 = vpack.c.b16 %v7302, %v7301
    %v7468 = vpack.c.b16 %v7304, %v7303
    %v7469 = vpack.c.b16 %v7306, %v7305
    %v7470 = vpack.c.b16 %v7308, %v7307
    %v7471 = vpack.c.b16 %v7310, %v7309
    %v7472 = vpack.c.b16 %v7312, %v7311
    %v7473 = vpack.c.b16 %v7314, %v7313
    %v7474 = vpack.c.b16 %v7316, %v7315
    %v7475 = vpack.c.b16 %v7318, %v7317
    %v7476 = vpack.c.b16 %v7320, %v7319
    %v7477 = vpack.c.b16 %v7322, %v7321
    %v7478 = vpack.c.b16 %v7324, %v7323
    %v7479 = vpack.c.b16 %v7326, %v7325
    %v7480 = vpack.c.b16 %v7328, %v7327
    %v7481 = vpack.c.b16 %v7330, %v7329
    %v7482 = vpack.c.b16 %v7332, %v7331
    %v7483 = vpack.c.b16 %v7334, %v7333
    %v7484 = vpack.c.b16 %v7336, %v7335
    %v7485 = vpack.c.b16 %v7338, %v7337
    %v7486 = vpack.c.b16 %v7340, %v7339
    %v7487 = vpack.c.b16 %v7342, %v7341
    %v7488 = vpack.c.b16 %v7344, %v7343
    %v7489 = vpack.c.b16 %v7346, %v7345
    %v7490 = vpack.c.b16 %v7348, %v7347
    %v7491 = vpack.c.b16 %v7350, %v7349
    %v7492 = vpack.c.b16 %v7352, %v7351
    %v7493 = vpack.c.b16 %v7354, %v7353
    %v7494 = vpack.c.b16 %v7356, %v7355
    %v7495 = vpack.c.b16 %v7358, %v7357
    %v7496 = vpack.c.b16 %v7360, %v7359
    %v7497 = vpack.c.b16 %v7362, %v7361
    %v7498 = vpack.c.b16 %v7364, %v7363
    %v7499 = vpack.c.b16 %v7366, %v7365
    %v7500 = vpack.c.b16 %v7368, %v7367
    %v7501 = vpack.c.b16 %v7370, %v7369
    %v7502 = vpack.c.b16 %v7372, %v7371
    %v7503 = vpack.c.b16 %v7374, %v7373
    %v7504 = vpack.c.b16 %v7376, %v7375
    %v7505 = vpack.c.b16 %v7378, %v7377
    %v7506 = vpack.c.b16 %v7380, %v7379
    %v7507 = vpack.c.b16 %v7382, %v7381
    %v7508 = vpack.c.b16 %v7384, %v7383
    %v7509 = vpack.c.b16 %v7386, %v7385
    %v7510 = vpack.c.b16 %v7388, %v7387
    %v7511 = vpack.c.b16 %v7390, %v7389
    %v7512 = vpack.c.b16 %v7392, %v7391
    %v7513 = vpack.c.b16 %v7394, %v7393
    %v7514 = vpack.c.b16 %v7396, %v7395
    %v7515 = vpack.c.b16 %v7398, %v7397
    %v7516 = vpack.c.b16 %v7400, %v7399
    %v7517 = vpack.c.b16 %v7402, %v7401
    %v7518 = vpack.c.b16 %v7404, %v7403
    %v7519 = vpack.c.b16 %v7406, %v7405
    %v7520 = vpack.c.b16 %v7408, %v7407
    %7633 = vmatpush.bf16.msra.mxu0 %v7416
    %7634 = vmatpush.bf16.msra.mxu0 %v7415
    %7635 = vmatpush.bf16.msra.mxu0 %v7414
    %7636 = vmatpush.bf16.msra.mxu0 %v7413
    %7637 = vmatpush.bf16.msra.mxu0 %v7412
    %7638 = vmatpush.bf16.msra.mxu0 %v7411
    %7639 = vmatpush.bf16.msra.mxu0 %v7410
    %7640 = vmatpush.bf16.msra.mxu0 %v7409
    %7641 = vmatmul.bf16.gmra.mxu0 %v6723
    %v7642 = vpop.f32.mrf.mxu0
    %v7643 = vadd.f32 0.0, %v7642
    %v7644 = vpop.f32.mrf.mxu0
    %7645 = vdwg.mxu0
    %7646 = vmatpush.bf16.msra.mxu0 %v7424
    %7647 = vmatpush.bf16.msra.mxu0 %v7423
    %7648 = vmatpush.bf16.msra.mxu0 %v7422
    %7649 = vmatpush.bf16.msra.mxu0 %v7421
    %7650 = vmatpush.bf16.msra.mxu0 %v7420
    %7651 = vmatpush.bf16.msra.mxu0 %v7419
    %7652 = vmatpush.bf16.msra.mxu0 %v7418
    %7653 = vmatpush.bf16.msra.mxu0 %v7417
    %7654 = vmatmul.bf16.gmra.mxu0 %v6724
    %v7655 = vpop.f32.mrf.mxu0
    %v7656 = vadd.f32 %v7643, %v7655
    %v7657 = vpop.f32.mrf.mxu0
    %7658 = vdwg.mxu0
    %7659 = vmatpush.bf16.msra.mxu0 %v7432
    %7660 = vmatpush.bf16.msra.mxu0 %v7431
    %7661 = vmatpush.bf16.msra.mxu0 %v7430
    %7662 = vmatpush.bf16.msra.mxu0 %v7429
    %7663 = vmatpush.bf16.msra.mxu0 %v7428
    %7664 = vmatpush.bf16.msra.mxu0 %v7427
    %7665 = vmatpush.bf16.msra.mxu0 %v7426
    %7666 = vmatpush.bf16.msra.mxu0 %v7425
    %7667 = vmatmul.bf16.gmra.mxu0 %v6725
    %v7668 = vpop.f32.mrf.mxu0
    %v7669 = vadd.f32 %v7656, %v7668
    %v7670 = vpop.f32.mrf.mxu0
    %7671 = vdwg.mxu0
    %7672 = vmatpush.bf16.msra.mxu0 %v7440
    %7673 = vmatpush.bf16.msra.mxu0 %v7439
    %7674 = vmatpush.bf16.msra.mxu0 %v7438
    %7675 = vmatpush.bf16.msra.mxu0 %v7437
    %7676 = vmatpush.bf16.msra.mxu0 %v7436
    %7677 = vmatpush.bf16.msra.mxu0 %v7435
    %7678 = vmatpush.bf16.msra.mxu0 %v7434
    %7679 = vmatpush.bf16.msra.mxu0 %v7433
    %7680 = vmatmul.bf16.gmra.mxu0 %v6726
    %v7681 = vpop.f32.mrf.mxu0
    %v7682 = vadd.f32 %v7669, %v7681
    %v7683 = vpop.f32.mrf.mxu0
    %7684 = vdwg.mxu0
    %7685 = vmatpush.bf16.msra.mxu0 %v7448
    %7686 = vmatpush.bf16.msra.mxu0 %v7447
    %7687 = vmatpush.bf16.msra.mxu0 %v7446
    %7688 = vmatpush.bf16.msra.mxu0 %v7445
    %7689 = vmatpush.bf16.msra.mxu0 %v7444
    %7690 = vmatpush.bf16.msra.mxu0 %v7443
    %7691 = vmatpush.bf16.msra.mxu0 %v7442
    %7692 = vmatpush.bf16.msra.mxu0 %v7441
    %7693 = vmatmul.bf16.gmra.mxu0 %v6727
    %v7694 = vpop.f32.mrf.mxu0
    %v7695 = vadd.f32 %v7682, %v7694
    %v7696 = vpop.f32.mrf.mxu0
    %7697 = vdwg.mxu0
    %7698 = vmatpush.bf16.msra.mxu0 %v7456
    %7699 = vmatpush.bf16.msra.mxu0 %v7455
    %7700 = vmatpush.bf16.msra.mxu0 %v7454
    %7701 = vmatpush.bf16.msra.mxu0 %v7453
    %7702 = vmatpush.bf16.msra.mxu0 %v7452
    %7703 = vmatpush.bf16.msra.mxu0 %v7451
    %7704 = vmatpush.bf16.msra.mxu0 %v7450
    %7705 = vmatpush.bf16.msra.mxu0 %v7449
    %7706 = vmatmul.bf16.gmra.mxu0 %v6728
    %v7707 = vpop.f32.mrf.mxu0
    %v7708 = vadd.f32 %v7695, %v7707
    %v7709 = vpop.f32.mrf.mxu0
    %7710 = vdwg.mxu0
    %7711 = vmatpush.bf16.msra.mxu0 %v7464
    %7712 = vmatpush.bf16.msra.mxu0 %v7463
    %7713 = vmatpush.bf16.msra.mxu0 %v7462
    %7714 = vmatpush.bf16.msra.mxu0 %v7461
    %7715 = vmatpush.bf16.msra.mxu0 %v7460
    %7716 = vmatpush.bf16.msra.mxu0 %v7459
    %7717 = vmatpush.bf16.msra.mxu0 %v7458
    %7718 = vmatpush.bf16.msra.mxu0 %v7457
    %7719 = vmatmul.bf16.gmra.mxu0 %v6729
    %v7720 = vpop.f32.mrf.mxu0
    %v7721 = vadd.f32 %v7708, %v7720
    %v7722 = vpop.f32.mrf.mxu0
    %7723 = vdwg.mxu0
    %7724 = vmatpush.bf16.msra.mxu0 %v7472
    %7725 = vmatpush.bf16.msra.mxu0 %v7471
    %7726 = vmatpush.bf16.msra.mxu0 %v7470
    %7727 = vmatpush.bf16.msra.mxu0 %v7469
    %7728 = vmatpush.bf16.msra.mxu0 %v7468
    %7729 = vmatpush.bf16.msra.mxu0 %v7467
    %7730 = vmatpush.bf16.msra.mxu0 %v7466
    %7731 = vmatpush.bf16.msra.mxu0 %v7465
    %7732 = vmatmul.bf16.gmra.mxu0 %v6730
    %v7733 = vpop.f32.mrf.mxu0
    %v7734 = vadd.f32 %v7721, %v7733
    %v7735 = vpop.f32.mrf.mxu0
    %7736 = vdwg.mxu0
    %7737 = vmatpush.bf16.msra.mxu0 %v7480
    %7738 = vmatpush.bf16.msra.mxu0 %v7479
    %7739 = vmatpush.bf16.msra.mxu0 %v7478
    %7740 = vmatpush.bf16.msra.mxu0 %v7477
    %7741 = vmatpush.bf16.msra.mxu0 %v7476
    %7742 = vmatpush.bf16.msra.mxu0 %v7475
    %7743 = vmatpush.bf16.msra.mxu0 %v7474
    %7744 = vmatpush.bf16.msra.mxu0 %v7473
    %7745 = vmatmul.bf16.gmra.mxu0 %v6731
    %v7746 = vpop.f32.mrf.mxu0
    %v7747 = vadd.f32 %v7734, %v7746
    %v7748 = vpop.f32.mrf.mxu0
    %7749 = vdwg.mxu0
    %7750 = vmatpush.bf16.msra.mxu0 %v7488
    %7751 = vmatpush.bf16.msra.mxu0 %v7487
    %7752 = vmatpush.bf16.msra.mxu0 %v7486
    %7753 = vmatpush.bf16.msra.mxu0 %v7485
    %7754 = vmatpush.bf16.msra.mxu0 %v7484
    %7755 = vmatpush.bf16.msra.mxu0 %v7483
    %7756 = vmatpush.bf16.msra.mxu0 %v7482
    %7757 = vmatpush.bf16.msra.mxu0 %v7481
    %7758 = vmatmul.bf16.gmra.mxu0 %v6732
    %v7759 = vpop.f32.mrf.mxu0
    %v7760 = vadd.f32 %v7747, %v7759
    %v7761 = vpop.f32.mrf.mxu0
    %7762 = vdwg.mxu0
    %7763 = vmatpush.bf16.msra.mxu0 %v7496
    %7764 = vmatpush.bf16.msra.mxu0 %v7495
    %7765 = vmatpush.bf16.msra.mxu0 %v7494
    %7766 = vmatpush.bf16.msra.mxu0 %v7493
    %7767 = vmatpush.bf16.msra.mxu0 %v7492
    %7768 = vmatpush.bf16.msra.mxu0 %v7491
    %7769 = vmatpush.bf16.msra.mxu0 %v7490
    %7770 = vmatpush.bf16.msra.mxu0 %v7489
    %7771 = vmatmul.bf16.gmra.mxu0 %v6733
    %v7772 = vpop.f32.mrf.mxu0
    %v7773 = vadd.f32 %v7760, %v7772
    %v7774 = vpop.f32.mrf.mxu0
    %7775 = vdwg.mxu0
    %7776 = vmatpush.bf16.msra.mxu0 %v7504
    %7777 = vmatpush.bf16.msra.mxu0 %v7503
    %7778 = vmatpush.bf16.msra.mxu0 %v7502
    %7779 = vmatpush.bf16.msra.mxu0 %v7501
    %7780 = vmatpush.bf16.msra.mxu0 %v7500
    %7781 = vmatpush.bf16.msra.mxu0 %v7499
    %7782 = vmatpush.bf16.msra.mxu0 %v7498
    %7783 = vmatpush.bf16.msra.mxu0 %v7497
    %7784 = vmatmul.bf16.gmra.mxu0 %v6734
    %v7785 = vpop.f32.mrf.mxu0
    %v7786 = vadd.f32 %v7773, %v7785
    %v7787 = vpop.f32.mrf.mxu0
    %7788 = vdwg.mxu0
    %7789 = vmatpush.bf16.msra.mxu0 %v7512
    %7790 = vmatpush.bf16.msra.mxu0 %v7511
    %7791 = vmatpush.bf16.msra.mxu0 %v7510
    %7792 = vmatpush.bf16.msra.mxu0 %v7509
    %7793 = vmatpush.bf16.msra.mxu0 %v7508
    %7794 = vmatpush.bf16.msra.mxu0 %v7507
    %7795 = vmatpush.bf16.msra.mxu0 %v7506
    %7796 = vmatpush.bf16.msra.mxu0 %v7505
    %7797 = vmatmul.bf16.gmra.mxu0 %v6735
    %v7798 = vpop.f32.mrf.mxu0
    %v7799 = vadd.f32 %v7786, %v7798
    %v7800 = vpop.f32.mrf.mxu0
    %7801 = vdwg.mxu0
    %7802 = vmatpush.bf16.msra.mxu0 %v7520
    %7803 = vmatpush.bf16.msra.mxu0 %v7519
    %7804 = vmatpush.bf16.msra.mxu0 %v7518
    %7805 = vmatpush.bf16.msra.mxu0 %v7517
    %7806 = vmatpush.bf16.msra.mxu0 %v7516
    %7807 = vmatpush.bf16.msra.mxu0 %v7515
    %7808 = vmatpush.bf16.msra.mxu0 %v7514
    %7809 = vmatpush.bf16.msra.mxu0 %v7513
    %7810 = vmatmul.bf16.gmra.mxu0 %v6736
    %v7811 = vpop.f32.mrf.mxu0
    %v7812 = vadd.f32 %v7799, %v7811
    %v7813 = vpop.f32.mrf.mxu0
    %7814 = vdwg.mxu0
    %p7815 = scmp.eq.s32.totalorder 0, 0
    // Predicated region
    $region46: #{mlp_forward.1} parent=1 // pred_check
      %p7816 = pneg %p7815
    $region47: #{mlp_forward.1} parent=1 // pred_check_branch
      %7818 = sbr.rel (%p7816) target = $region49
    $region48: #{mlp_forward.1} parent=1 // pred_region
      %v7819 = vld [vmem:[#allocation10] sm:$0x1]
      %v7821 = vperm.slane %v7819, 0
      %v7823 = vadd.f32 %v7812, %v7821
      %7824 = vst [vmem:[#allocation11] sm:$0xff] %v7823
    $region49: #{mlp_forward.1} parent=1 // pred_fallthru
      _
    %p7825 = scmp.gt.s32.totalorder 0, 0
    // Predicated region
    $region50: #{mlp_forward.1} parent=1 // pred_check
      %p7826 = pneg %p7825
    $region51: #{mlp_forward.1} parent=1 // pred_check_branch
      %7828 = sbr.rel (%p7826) target = $region53
    $region52: #{mlp_forward.1} parent=1 // pred_region
      %7829 = vst [vmem:[#allocation11] sm:$0xff] %v7812
    $region53: #{mlp_forward.1} parent=1 // pred_fallthru
      _
    // Predicated region
    $region54: #{mlp_forward.1} parent=1 // pred_check
      _
    $region55: #{mlp_forward.1} parent=1 // pred_check_branch
      %7831 = sbr.rel (0) target = $region57
    $region56: #{mlp_forward.1} parent=1 // pred_region
      %7833 = vsyncadd [#allocation4], 0
      %s7835 = sshll.u32 [#allocation11], 4
      %s7836 = int_to_ptr.vmem [resolvable:$true] %s7835
      %s7837 = sshll.u32 %s6, 4
      %s7838 = int_to_ptr.hbm [resolvable:$true] %s7837
      %7840 = dma.vmem_to_hbm [thread:$0]  %s7836, 128, %s7838, [#allocation4]
    $region57: #{mlp_forward.1} parent=1 // pred_fallthru
      _
    // Predicated region
    $region58: #{mlp_forward.1} parent=1 // pred_check
      _
    $region59: #{mlp_forward.1} parent=1 // pred_check_branch
      %7842 = sbr.rel (0) target = $region61
    $region60: #{mlp_forward.1} parent=1 // pred_region
      %7844 = dma.done [#allocation4], 128
    $region61: #{mlp_forward.1} parent=1 // pred_fallthru
      _
    %7845 = vsyncpa [#allocation3], 1
    %7846 = vsyncpa [#allocation6], 1
    %7847 = vsyncpa [#allocation9], 1
    %7848 = vsyncpa [#allocation4], 1

</llo_original>
